<compile_context>
chip_gen: v6e
topology: v6e:2x2x1
jax: 0.10.0
libtpu: 0.0.40
codegen_flags: <defaults>
</compile_context>

<pallas_src>
import functools

import jax
import jax.numpy as jnp
from jax import lax
from jax.experimental import pallas as pl
from jax.experimental.pallas import tpu as pltpu

KS = 3          # depthwise kernel size (ks=3, stride=1, padding=1)
PAD = (KS - 1) // 2
BN_EPS = 1e-5   # nn.BatchNorm2d default eps
LANES = 128
SUBLANES = 8


def _rup(x, m):
    return ((x + m - 1) // m) * m


def _conv_tile(x_ref, dw_ref, pw_ref, ht, th, w):
    """Depthwise 3x3 (VPU shift-mul-add) + pointwise 1x1 (single MXU matmul).

    x_ref : (Hp, Wp, C)    full zero-padded image, resident in VMEM
    dw_ref: (9, 1, 1, C)   depthwise taps
    pw_ref: (C, Cp)        pointwise weight, output channels lane-padded
    Returns y (th*w, Cp) f32: pre-BN activations for output rows
    [ht*th, ht*th + th) of this image.
    """
    c = x_ref.shape[-1]
    # halo window: th + 2*PAD rows of the padded image (always in bounds)
    xw = x_ref[pl.ds(ht * th, th + 2 * PAD)]              # (th+2, Wp, C)
    d = None
    for dy in range(KS):
        for dx in range(KS):
            term = xw[dy:dy + th, dx:dx + w, :] * dw_ref[KS * dy + dx]
            d = term if d is None else d + term           # (th, w, C)
    y = jnp.dot(d.reshape(th * w, c), pw_ref[...],
                preferred_element_type=jnp.float32)       # (th*w, Cp)
    return y


def _stats_kernel(x_ref, dw_ref, pw_ref, stats_ref, *, th, w):
    """Pass 1: per-tile BatchNorm partials (mean, M2); y never hits HBM."""
    ht = pl.program_id(1)
    y = _conv_tile(x_ref, dw_ref, pw_ref, ht, th, w)
    inv_r = 1.0 / (th * w)
    mean = jnp.sum(y, axis=0, keepdims=True) * inv_r                  # (1, Cp)
    m2 = jnp.sum(jnp.square(y - mean), axis=0, keepdims=True)         # (1, Cp)
    stats_ref[0:1, :] = mean
    stats_ref[1:2, :] = m2


def _conv_bn_kernel(x_ref, dw_ref, pw_ref, scale_ref, offset_ref, o_ref, *, th, w):
    """Pass 2: recompute conv, apply folded BN, store only the O real channels."""
    ht = pl.program_id(1)
    o = o_ref.shape[-1]
    y = _conv_tile(x_ref, dw_ref, pw_ref, ht, th, w)                  # (th*w, Cp)
    ybn = y * scale_ref[...] + offset_ref[...]
    o_ref[...] = ybn.reshape(th, w, -1)[:, :, :o]


def _vmem_limit_bytes():
    try:
        cap = int(pltpu.get_tpu_info().vmem_capacity_bytes)
    except Exception:
        cap = 64 * 1024 * 1024            # conservative (v7x-sized) fallback
    return max(32 * 1024 * 1024, min(cap * 3 // 4, 96 * 1024 * 1024))


def _choose_tile_h(n, h, w, c, o, budget):
    """Largest h-tile dividing H whose VMEM footprint fits the budget."""
    hp, wp = h + 2 * PAD, w + 2 * PAD
    cl = _rup(c, LANES) * 4               # lane-padded f32 bytes per input pixel
    op = _rup(o, LANES) * 4
    fixed = 2 * hp * _rup(wp, SUBLANES) * cl          # double-buffered image block

    def tile_bytes(th):
        rows = th * w
        out_blk = 2 * th * _rup(w, SUBLANES) * op     # double-buffered output block
        interm = ((th + 2 * PAD) * _rup(wp, SUBLANES) * cl    # halo window value
                  + 2 * th * _rup(w, SUBLANES) * cl           # depthwise acc + term
                  + 2 * _rup(rows, SUBLANES) * op)            # y and y*scale+offset
        return fixed + out_blk + interm

    divisors = [d for d in range(1, h + 1) if h % d == 0]
    th = divisors[0]
    for cand in divisors:                 # ascending, monotone cost -> keep largest fit
        if tile_bytes(cand) <= budget:
            th = cand
    # keep >= 2 grid steps so both v7x TensorCores get work when batch == 1
    if n == 1 and th == h:
        smaller = [d for d in divisors if d < h and tile_bytes(d) <= budget]
        if smaller:
            th = smaller[-1]
    return th


def conv_bn_forward(x_nchw, dw_weight, pw_weight, pw_bias, gamma, beta):
    """x_nchw: (N, C_in, H, W); dw_weight: (C_in,1,3,3); pw_weight: (C_out,C_in,1,1).

    pw_bias is accepted for interface parity but unused: a constant per-channel
    bias is exactly cancelled by the training-mode BN mean subtraction.
    """
    del pw_bias
    n, c, h, w = x_nchw.shape
    o = pw_weight.shape[0]
    cp = _rup(o, LANES)
    hp, wp = h + 2 * PAD, w + 2 * PAD

    vmem_limit = _vmem_limit_bytes()
    th = _choose_tile_h(n, h, w, c, o, budget=(vmem_limit * 7) // 10)
    nt = h // th
    rows = th * w
    total_rows = n * h * w

    # ---- layout prep (single XLA pass over x): NCHW -> NHWC + spatial zero pad ----
    # TODO(synk): for images too large to keep one padded image resident in VMEM,
    # switch the input to memory_space=pl.ANY and DMA (th+2)-row halo windows manually.
    x_nhwc = jnp.transpose(x_nchw, (0, 2, 3, 1)).astype(jnp.float32)
    xp = jnp.pad(x_nhwc, ((0, 0), (PAD, PAD), (PAD, PAD), (0, 0)))     # (N, Hp, Wp, C)

    # ---- weights: depthwise taps (9,1,1,C); pointwise (C, Cp) lane-padded ----
    dw = jnp.transpose(dw_weight[:, 0, :, :], (1, 2, 0)).astype(jnp.float32)  # (3,3,C)
    dw = dw.reshape(KS * KS, 1, 1, c)
    pw = jnp.transpose(pw_weight[:, :, 0, 0], (1, 0)).astype(jnp.float32)     # (C,O)
    pw = jnp.pad(pw, ((0, 0), (0, cp - o)))                                   # (C,Cp)

    cparams = pltpu.CompilerParams(
        dimension_semantics=("parallel", "parallel"),
        vmem_limit_bytes=vmem_limit)

    # full padded image per block; block index ignores the h-tile axis, so the
    # image is DMA'd once per image per pass and revisited across h-tiles.
    x_spec = pl.BlockSpec((None, hp, wp, c), lambda i, j: (i, 0, 0, 0))
    dw_spec = pl.BlockSpec((KS * KS, 1, 1, c), lambda i, j: (0, 0, 0, 0))
    pw_spec = pl.BlockSpec((c, cp), lambda i, j: (0, 0))

    conv_flops = 18 * rows * c + 2 * rows * c * cp

    # ---- pass 1: per-tile (mean, M2) of the conv output ----
    stats = pl.pallas_call(
        functools.partial(_stats_kernel, th=th, w=w),
        out_shape=jax.ShapeDtypeStruct((n, nt, 2, cp), jnp.float32),
        grid=(n, nt),
        in_specs=[x_spec, dw_spec, pw_spec],
        out_specs=pl.BlockSpec((None, None, 2, cp), lambda i, j: (i, j, 0, 0)),
        compiler_params=cparams,
        cost_estimate=pl.CostEstimate(
            flops=n * nt * (conv_flops + 4 * rows * cp),
            transcendentals=0,
            bytes_accessed=xp.size * 4 + n * nt * 2 * cp * 4),
    )(xp, dw, pw)

    # ---- BN batch statistics (Chan merge of equal-count tiles) + folded affine ----
    means = stats[:, :, 0, :].reshape(n * nt, cp)
    m2s = stats[:, :, 1, :].reshape(n * nt, cp)
    grand_mean = jnp.mean(means, axis=0)                                       # (Cp,)
    var = (jnp.sum(m2s, axis=0)
           + rows * jnp.sum(jnp.square(means - grand_mean), axis=0)) / total_rows
    gamma_p = jnp.pad(gamma.astype(jnp.float32), (0, cp - o))
    beta_p = jnp.pad(beta.astype(jnp.float32), (0, cp - o))
    scale = (gamma_p * lax.rsqrt(var + BN_EPS)).reshape(1, cp)
    offset = (beta_p - grand_mean * scale[0]).reshape(1, cp)

    # ---- pass 2: recompute conv (cheaper than an HBM round trip of padded y),
    #      apply folded BN, store only the O real channels ----
    out_nhwc = pl.pallas_call(
        functools.partial(_conv_bn_kernel, th=th, w=w),
        out_shape=jax.ShapeDtypeStruct((n, h, w, o), jnp.float32),
        grid=(n, nt),
        in_specs=[x_spec, dw_spec, pw_spec,
                  pl.BlockSpec((1, cp), lambda i, j: (0, 0)),
                  pl.BlockSpec((1, cp), lambda i, j: (0, 0))],
        out_specs=pl.BlockSpec((None, th, w, o), lambda i, j: (i, j, 0, 0)),
        compiler_params=cparams,
        cost_estimate=pl.CostEstimate(
            flops=n * nt * (conv_flops + 2 * rows * cp),
            transcendentals=0,
            bytes_accessed=xp.size * 4 + n * h * w * o * 4),
    )(xp, dw, pw, scale, offset)

    # TODO(synk): the NHWC->NCHW layout change could be fused into pass 2 by storing
    # channel-major (O, rows) tiles; kept outside the kernel for lowering simplicity
    # (it touches only O real channels, not the 128-lane-padded tensor).
    return jnp.transpose(out_nhwc, (0, 3, 1, 2))


if __name__ == "__main__":
    key = jax.random.PRNGKey(0)
    k_x, k_dw, k_pw = jax.random.split(key, 3)

    N, C_in, H, W = 2, 4, 16, 16
    C_out = 8

    x = jax.random.normal(k_x, (N, C_in, H, W), jnp.float32)

    # kaiming_normal_(a=1): std = sqrt(2 / ((1 + a^2) * fan_in)) = sqrt(1 / fan_in)
    dw_w = jax.random.normal(k_dw, (C_in, 1, KS, KS), jnp.float32) * (1.0 / (KS * KS)) ** 0.5
    pw_w = jax.random.normal(k_pw, (C_out, C_in, 1, 1), jnp.float32) * (1.0 / C_in) ** 0.5
    pw_b = jnp.zeros((C_out,), jnp.float32)       # nn.init.constant_(bias, 0)
    gamma = jnp.ones((C_out,), jnp.float32)       # BatchNorm2d default affine init
    beta = jnp.zeros((C_out,), jnp.float32)

    out = jax.jit(conv_bn_forward)(x, dw_w, pw_w, pw_b, gamma, beta)
    jax.block_until_ready(out)
    assert out.shape == (N, C_out, H, W) and out.dtype == jnp.float32

    # plain-JAX reference for forward parity (training-mode BN, biased variance)
    xr = jnp.pad(jnp.transpose(x, (0, 2, 3, 1)), ((0, 0), (1, 1), (1, 1), (0, 0)))
    dwr = jnp.transpose(dw_w[:, 0], (1, 2, 0))                      # (3,3,C)
    d = sum(xr[:, dy:dy + H, dx:dx + W, :] * dwr[dy, dx]
            for dy in range(KS) for dx in range(KS))
    yref = jnp.einsum('nhwc,oc->nhwo', d, pw_w[:, :, 0, 0]) + pw_b
    mu = yref.mean(axis=(0, 1, 2))
    va = yref.var(axis=(0, 1, 2))
    ref = (yref - mu) * lax.rsqrt(va + BN_EPS) * gamma + beta
    ref = jnp.transpose(ref, (0, 3, 1, 2))
    assert jnp.allclose(out, ref, atol=1e-3, rtol=1e-3), \
        float(jnp.max(jnp.abs(out - ref)))

    print("KERNEL_OK")
</pallas_src>

<mosaic_0001>
module attributes {stable_mosaic.version = 11 : i64} {
  func.func @_conv_bn_kernel(%arg0: i32, %arg1: i32, %arg2: memref<1x18x18x4xf32, #tpu.memory_space<vmem>>, %arg3: memref<9x1x1x4xf32, #tpu.memory_space<vmem>>, %arg4: memref<4x128xf32, #tpu.memory_space<vmem>>, %arg5: memref<1x128xf32, #tpu.memory_space<vmem>>, %arg6: memref<1x128xf32, #tpu.memory_space<vmem>>, %arg7: memref<1x16x16x8xf32, #tpu.memory_space<vmem>>) attributes {dimension_semantics = [#tpu.dimension_semantics<parallel>, #tpu.dimension_semantics<parallel>], iteration_bounds = array<i64: 2, 1>, scalar_prefetch = 0 : i64, scratch_operands = 0 : i64, tpu.core_type = #tpu.core_type<tc>, window_params = [{transform_indices = @transform_0, window_bounds = array<i64: 1, 18, 18, 4>}, {pipeline_mode = #tpu.pipeline_mode<synchronous>, transform_indices = @transform_1, window_bounds = array<i64: 9, 1, 1, 4>}, {pipeline_mode = #tpu.pipeline_mode<synchronous>, transform_indices = @transform_2, window_bounds = array<i64: 4, 128>}, {pipeline_mode = #tpu.pipeline_mode<synchronous>, transform_indices = @transform_3, window_bounds = array<i64: 1, 128>}, {pipeline_mode = #tpu.pipeline_mode<synchronous>, transform_indices = @transform_4, window_bounds = array<i64: 1, 128>}, {transform_indices = @transform_5, window_bounds = array<i64: 1, 16, 16, 8>}]} {
    %c16_i32 = arith.constant 16 : i32
    %0 = arith.muli %arg1, %c16_i32 : i32
    %c0 = arith.constant 0 : index
    %1 = arith.index_cast %0 : i32 to index
    %c0_0 = arith.constant 0 : index
    %c0_1 = arith.constant 0 : index
    %2 = vector.load %arg2[%c0, %1, %c0_0, %c0_1] : memref<1x18x18x4xf32, #tpu.memory_space<vmem>>, vector<1x18x18x4xf32>
    %3 = vector.shape_cast %2 : vector<1x18x18x4xf32> to vector<18x18x4xf32>
    %4 = vector.extract_strided_slice %3 {offsets = [0, 0, 0], sizes = [16, 16, 4], strides = [1, 1, 1]} : vector<18x18x4xf32> to vector<16x16x4xf32>
    %c0_2 = arith.constant 0 : index
    %c0_3 = arith.constant 0 : index
    %c0_4 = arith.constant 0 : index
    %c0_5 = arith.constant 0 : index
    %5 = vector.load %arg3[%c0_2, %c0_3, %c0_4, %c0_5] : memref<9x1x1x4xf32, #tpu.memory_space<vmem>>, vector<1x1x1x4xf32>
    %6 = vector.shape_cast %5 : vector<1x1x1x4xf32> to vector<1x1x4xf32>
    %7 = vector.broadcast %6 : vector<1x1x4xf32> to vector<16x16x4xf32>
    %8 = arith.mulf %4, %7 : vector<16x16x4xf32>
    %9 = vector.extract_strided_slice %3 {offsets = [0, 1, 0], sizes = [16, 16, 4], strides = [1, 1, 1]} : vector<18x18x4xf32> to vector<16x16x4xf32>
    %c1 = arith.constant 1 : index
    %c0_6 = arith.constant 0 : index
    %c0_7 = arith.constant 0 : index
    %c0_8 = arith.constant 0 : index
    %10 = vector.load %arg3[%c1, %c0_6, %c0_7, %c0_8] : memref<9x1x1x4xf32, #tpu.memory_space<vmem>>, vector<1x1x1x4xf32>
    %11 = vector.shape_cast %10 : vector<1x1x1x4xf32> to vector<1x1x4xf32>
    %12 = vector.broadcast %11 : vector<1x1x4xf32> to vector<16x16x4xf32>
    %13 = arith.mulf %9, %12 : vector<16x16x4xf32>
    %14 = arith.addf %8, %13 : vector<16x16x4xf32>
    %15 = vector.extract_strided_slice %3 {offsets = [0, 2, 0], sizes = [16, 16, 4], strides = [1, 1, 1]} : vector<18x18x4xf32> to vector<16x16x4xf32>
    %c2 = arith.constant 2 : index
    %c0_9 = arith.constant 0 : index
    %c0_10 = arith.constant 0 : index
    %c0_11 = arith.constant 0 : index
    %16 = vector.load %arg3[%c2, %c0_9, %c0_10, %c0_11] : memref<9x1x1x4xf32, #tpu.memory_space<vmem>>, vector<1x1x1x4xf32>
    %17 = vector.shape_cast %16 : vector<1x1x1x4xf32> to vector<1x1x4xf32>
    %18 = vector.broadcast %17 : vector<1x1x4xf32> to vector<16x16x4xf32>
    %19 = arith.mulf %15, %18 : vector<16x16x4xf32>
    %20 = arith.addf %14, %19 : vector<16x16x4xf32>
    %21 = vector.extract_strided_slice %3 {offsets = [1, 0, 0], sizes = [16, 16, 4], strides = [1, 1, 1]} : vector<18x18x4xf32> to vector<16x16x4xf32>
    %c3 = arith.constant 3 : index
    %c0_12 = arith.constant 0 : index
    %c0_13 = arith.constant 0 : index
    %c0_14 = arith.constant 0 : index
    %22 = vector.load %arg3[%c3, %c0_12, %c0_13, %c0_14] : memref<9x1x1x4xf32, #tpu.memory_space<vmem>>, vector<1x1x1x4xf32>
    %23 = vector.shape_cast %22 : vector<1x1x1x4xf32> to vector<1x1x4xf32>
    %24 = vector.broadcast %23 : vector<1x1x4xf32> to vector<16x16x4xf32>
    %25 = arith.mulf %21, %24 : vector<16x16x4xf32>
    %26 = arith.addf %20, %25 : vector<16x16x4xf32>
    %27 = vector.extract_strided_slice %3 {offsets = [1, 1, 0], sizes = [16, 16, 4], strides = [1, 1, 1]} : vector<18x18x4xf32> to vector<16x16x4xf32>
    %c4 = arith.constant 4 : index
    %c0_15 = arith.constant 0 : index
    %c0_16 = arith.constant 0 : index
    %c0_17 = arith.constant 0 : index
    %28 = vector.load %arg3[%c4, %c0_15, %c0_16, %c0_17] : memref<9x1x1x4xf32, #tpu.memory_space<vmem>>, vector<1x1x1x4xf32>
    %29 = vector.shape_cast %28 : vector<1x1x1x4xf32> to vector<1x1x4xf32>
    %30 = vector.broadcast %29 : vector<1x1x4xf32> to vector<16x16x4xf32>
    %31 = arith.mulf %27, %30 : vector<16x16x4xf32>
    %32 = arith.addf %26, %31 : vector<16x16x4xf32>
    %33 = vector.extract_strided_slice %3 {offsets = [1, 2, 0], sizes = [16, 16, 4], strides = [1, 1, 1]} : vector<18x18x4xf32> to vector<16x16x4xf32>
    %c5 = arith.constant 5 : index
    %c0_18 = arith.constant 0 : index
    %c0_19 = arith.constant 0 : index
    %c0_20 = arith.constant 0 : index
    %34 = vector.load %arg3[%c5, %c0_18, %c0_19, %c0_20] : memref<9x1x1x4xf32, #tpu.memory_space<vmem>>, vector<1x1x1x4xf32>
    %35 = vector.shape_cast %34 : vector<1x1x1x4xf32> to vector<1x1x4xf32>
    %36 = vector.broadcast %35 : vector<1x1x4xf32> to vector<16x16x4xf32>
    %37 = arith.mulf %33, %36 : vector<16x16x4xf32>
    %38 = arith.addf %32, %37 : vector<16x16x4xf32>
    %39 = vector.extract_strided_slice %3 {offsets = [2, 0, 0], sizes = [16, 16, 4], strides = [1, 1, 1]} : vector<18x18x4xf32> to vector<16x16x4xf32>
    %c6 = arith.constant 6 : index
    %c0_21 = arith.constant 0 : index
    %c0_22 = arith.constant 0 : index
    %c0_23 = arith.constant 0 : index
    %40 = vector.load %arg3[%c6, %c0_21, %c0_22, %c0_23] : memref<9x1x1x4xf32, #tpu.memory_space<vmem>>, vector<1x1x1x4xf32>
    %41 = vector.shape_cast %40 : vector<1x1x1x4xf32> to vector<1x1x4xf32>
    %42 = vector.broadcast %41 : vector<1x1x4xf32> to vector<16x16x4xf32>
    %43 = arith.mulf %39, %42 : vector<16x16x4xf32>
    %44 = arith.addf %38, %43 : vector<16x16x4xf32>
    %45 = vector.extract_strided_slice %3 {offsets = [2, 1, 0], sizes = [16, 16, 4], strides = [1, 1, 1]} : vector<18x18x4xf32> to vector<16x16x4xf32>
    %c7 = arith.constant 7 : index
    %c0_24 = arith.constant 0 : index
    %c0_25 = arith.constant 0 : index
    %c0_26 = arith.constant 0 : index
    %46 = vector.load %arg3[%c7, %c0_24, %c0_25, %c0_26] : memref<9x1x1x4xf32, #tpu.memory_space<vmem>>, vector<1x1x1x4xf32>
    %47 = vector.shape_cast %46 : vector<1x1x1x4xf32> to vector<1x1x4xf32>
    %48 = vector.broadcast %47 : vector<1x1x4xf32> to vector<16x16x4xf32>
    %49 = arith.mulf %45, %48 : vector<16x16x4xf32>
    %50 = arith.addf %44, %49 : vector<16x16x4xf32>
    %51 = vector.extract_strided_slice %3 {offsets = [2, 2, 0], sizes = [16, 16, 4], strides = [1, 1, 1]} : vector<18x18x4xf32> to vector<16x16x4xf32>
    %c8 = arith.constant 8 : index
    %c0_27 = arith.constant 0 : index
    %c0_28 = arith.constant 0 : index
    %c0_29 = arith.constant 0 : index
    %52 = vector.load %arg3[%c8, %c0_27, %c0_28, %c0_29] : memref<9x1x1x4xf32, #tpu.memory_space<vmem>>, vector<1x1x1x4xf32>
    %53 = vector.shape_cast %52 : vector<1x1x1x4xf32> to vector<1x1x4xf32>
    %54 = vector.broadcast %53 : vector<1x1x4xf32> to vector<16x16x4xf32>
    %55 = arith.mulf %51, %54 : vector<16x16x4xf32>
    %56 = arith.addf %50, %55 : vector<16x16x4xf32>
    %57 = vector.shape_cast %56 : vector<16x16x4xf32> to vector<256x4xf32>
    %c0_30 = arith.constant 0 : index
    %c0_31 = arith.constant 0 : index
    %58 = vector.load %arg4[%c0_30, %c0_31] : memref<4x128xf32, #tpu.memory_space<vmem>>, vector<4x128xf32>
    %cst = arith.constant dense<0.000000e+00> : vector<256x128xf32>
    %59 = tpu.matmul %57, %58, %cst {dimension_numbers = #tpu.dot_dimension_numbers<[1], [0], [0], [1], [0, 0, 1, 1], [], []>} : vector<256x4xf32>, vector<4x128xf32>, vector<256x128xf32> -> vector<256x128xf32>
    %c0_32 = arith.constant 0 : index
    %c0_33 = arith.constant 0 : index
    %60 = vector.load %arg5[%c0_32, %c0_33] : memref<1x128xf32, #tpu.memory_space<vmem>>, vector<1x128xf32>
    %61 = vector.broadcast %60 : vector<1x128xf32> to vector<256x128xf32>
    %62 = arith.mulf %59, %61 : vector<256x128xf32>
    %c0_34 = arith.constant 0 : index
    %c0_35 = arith.constant 0 : index
    %63 = vector.load %arg6[%c0_34, %c0_35] : memref<1x128xf32, #tpu.memory_space<vmem>>, vector<1x128xf32>
    %64 = vector.broadcast %63 : vector<1x128xf32> to vector<256x128xf32>
    %65 = arith.addf %62, %64 : vector<256x128xf32>
    %66 = vector.shape_cast %65 : vector<256x128xf32> to vector<16x16x128xf32>
    %67 = vector.extract_strided_slice %66 {offsets = [0, 0, 0], sizes = [16, 16, 8], strides = [1, 1, 1]} : vector<16x16x128xf32> to vector<16x16x8xf32>
    %c0_36 = arith.constant 0 : index
    %c0_37 = arith.constant 0 : index
    %c0_38 = arith.constant 0 : index
    %c0_39 = arith.constant 0 : index
    %68 = vector.load %arg7[%c0_36, %c0_37, %c0_38, %c0_39] : memref<1x16x16x8xf32, #tpu.memory_space<vmem>>, vector<1x16x16x8xf32>
    %69 = vector.shape_cast %68 : vector<1x16x16x8xf32> to vector<16x16x8xf32>
    %70 = vector.shape_cast %67 : vector<16x16x8xf32> to vector<1x16x16x8xf32>
    tpu.vector_store %arg7[%c0_36, %c0_37, %c0_38, %c0_39], %70 {strides = array<i32>} : memref<1x16x16x8xf32, #tpu.memory_space<vmem>>, vector<1x16x16x8xf32>,
    return
  }
  func.func @transform_0(%arg0: i32, %arg1: i32) -> (i32, i32, i32, i32) {
    %c0_i32 = arith.constant 0 : i32
    %c0_i32_0 = arith.constant 0 : i32
    %c0_i32_1 = arith.constant 0 : i32
    %c0_i32_2 = arith.constant 0 : i32
    return %arg0, %c0_i32, %c0_i32_0, %c0_i32_1 : i32, i32, i32, i32
  }
  func.func @transform_1(%arg0: i32, %arg1: i32) -> (i32, i32, i32, i32) {
    %c0_i32 = arith.constant 0 : i32
    %c0_i32_0 = arith.constant 0 : i32
    %c0_i32_1 = arith.constant 0 : i32
    %c0_i32_2 = arith.constant 0 : i32
    %c0_i32_3 = arith.constant 0 : i32
    return %c0_i32, %c0_i32_0, %c0_i32_1, %c0_i32_2 : i32, i32, i32, i32
  }
  func.func @transform_2(%arg0: i32, %arg1: i32) -> (i32, i32) {
    %c0_i32 = arith.constant 0 : i32
    %c0_i32_0 = arith.constant 0 : i32
    %c0_i32_1 = arith.constant 0 : i32
    return %c0_i32, %c0_i32_0 : i32, i32
  }
  func.func @transform_3(%arg0: i32, %arg1: i32) -> (i32, i32) {
    %c0_i32 = arith.constant 0 : i32
    %c0_i32_0 = arith.constant 0 : i32
    %c0_i32_1 = arith.constant 0 : i32
    return %c0_i32, %c0_i32_0 : i32, i32
  }
  func.func @transform_4(%arg0: i32, %arg1: i32) -> (i32, i32) {
    %c0_i32 = arith.constant 0 : i32
    %c0_i32_0 = arith.constant 0 : i32
    %c0_i32_1 = arith.constant 0 : i32
    return %c0_i32, %c0_i32_0 : i32, i32
  }
  func.func @transform_5(%arg0: i32, %arg1: i32) -> (i32, i32, i32, i32) {
    %c0_i32 = arith.constant 0 : i32
    %c0_i32_0 = arith.constant 0 : i32
    %c0_i32_1 = arith.constant 0 : i32
    return %arg0, %arg1, %c0_i32, %c0_i32_0 : i32, i32, i32, i32
  }
}

module attributes {stable_mosaic.version = 11 : i64} {
  func.func @_stats_kernel(%arg0: i32, %arg1: i32, %arg2: memref<1x18x18x4xf32, #tpu.memory_space<vmem>>, %arg3: memref<9x1x1x4xf32, #tpu.memory_space<vmem>>, %arg4: memref<4x128xf32, #tpu.memory_space<vmem>>, %arg5: memref<1x1x2x128xf32, #tpu.memory_space<vmem>>) attributes {dimension_semantics = [#tpu.dimension_semantics<parallel>, #tpu.dimension_semantics<parallel>], iteration_bounds = array<i64: 2, 1>, scalar_prefetch = 0 : i64, scratch_operands = 0 : i64, tpu.core_type = #tpu.core_type<tc>, window_params = [{transform_indices = @transform_0, window_bounds = array<i64: 1, 18, 18, 4>}, {pipeline_mode = #tpu.pipeline_mode<synchronous>, transform_indices = @transform_1, window_bounds = array<i64: 9, 1, 1, 4>}, {pipeline_mode = #tpu.pipeline_mode<synchronous>, transform_indices = @transform_2, window_bounds = array<i64: 4, 128>}, {transform_indices = @transform_3, window_bounds = array<i64: 1, 1, 2, 128>}]} {
    %c16_i32 = arith.constant 16 : i32
    %0 = arith.muli %arg1, %c16_i32 : i32
    %c0 = arith.constant 0 : index
    %1 = arith.index_cast %0 : i32 to index
    %c0_0 = arith.constant 0 : index
    %c0_1 = arith.constant 0 : index
    %2 = vector.load %arg2[%c0, %1, %c0_0, %c0_1] : memref<1x18x18x4xf32, #tpu.memory_space<vmem>>, vector<1x18x18x4xf32>
    %3 = vector.shape_cast %2 : vector<1x18x18x4xf32> to vector<18x18x4xf32>
    %4 = vector.extract_strided_slice %3 {offsets = [0, 0, 0], sizes = [16, 16, 4], strides = [1, 1, 1]} : vector<18x18x4xf32> to vector<16x16x4xf32>
    %c0_2 = arith.constant 0 : index
    %c0_3 = arith.constant 0 : index
    %c0_4 = arith.constant 0 : index
    %c0_5 = arith.constant 0 : index
    %5 = vector.load %arg3[%c0_2, %c0_3, %c0_4, %c0_5] : memref<9x1x1x4xf32, #tpu.memory_space<vmem>>, vector<1x1x1x4xf32>
    %6 = vector.shape_cast %5 : vector<1x1x1x4xf32> to vector<1x1x4xf32>
    %7 = vector.broadcast %6 : vector<1x1x4xf32> to vector<16x16x4xf32>
    %8 = arith.mulf %4, %7 : vector<16x16x4xf32>
    %9 = vector.extract_strided_slice %3 {offsets = [0, 1, 0], sizes = [16, 16, 4], strides = [1, 1, 1]} : vector<18x18x4xf32> to vector<16x16x4xf32>
    %c1 = arith.constant 1 : index
    %c0_6 = arith.constant 0 : index
    %c0_7 = arith.constant 0 : index
    %c0_8 = arith.constant 0 : index
    %10 = vector.load %arg3[%c1, %c0_6, %c0_7, %c0_8] : memref<9x1x1x4xf32, #tpu.memory_space<vmem>>, vector<1x1x1x4xf32>
    %11 = vector.shape_cast %10 : vector<1x1x1x4xf32> to vector<1x1x4xf32>
    %12 = vector.broadcast %11 : vector<1x1x4xf32> to vector<16x16x4xf32>
    %13 = arith.mulf %9, %12 : vector<16x16x4xf32>
    %14 = arith.addf %8, %13 : vector<16x16x4xf32>
    %15 = vector.extract_strided_slice %3 {offsets = [0, 2, 0], sizes = [16, 16, 4], strides = [1, 1, 1]} : vector<18x18x4xf32> to vector<16x16x4xf32>
    %c2 = arith.constant 2 : index
    %c0_9 = arith.constant 0 : index
    %c0_10 = arith.constant 0 : index
    %c0_11 = arith.constant 0 : index
    %16 = vector.load %arg3[%c2, %c0_9, %c0_10, %c0_11] : memref<9x1x1x4xf32, #tpu.memory_space<vmem>>, vector<1x1x1x4xf32>
    %17 = vector.shape_cast %16 : vector<1x1x1x4xf32> to vector<1x1x4xf32>
    %18 = vector.broadcast %17 : vector<1x1x4xf32> to vector<16x16x4xf32>
    %19 = arith.mulf %15, %18 : vector<16x16x4xf32>
    %20 = arith.addf %14, %19 : vector<16x16x4xf32>
    %21 = vector.extract_strided_slice %3 {offsets = [1, 0, 0], sizes = [16, 16, 4], strides = [1, 1, 1]} : vector<18x18x4xf32> to vector<16x16x4xf32>
    %c3 = arith.constant 3 : index
    %c0_12 = arith.constant 0 : index
    %c0_13 = arith.constant 0 : index
    %c0_14 = arith.constant 0 : index
    %22 = vector.load %arg3[%c3, %c0_12, %c0_13, %c0_14] : memref<9x1x1x4xf32, #tpu.memory_space<vmem>>, vector<1x1x1x4xf32>
    %23 = vector.shape_cast %22 : vector<1x1x1x4xf32> to vector<1x1x4xf32>
    %24 = vector.broadcast %23 : vector<1x1x4xf32> to vector<16x16x4xf32>
    %25 = arith.mulf %21, %24 : vector<16x16x4xf32>
    %26 = arith.addf %20, %25 : vector<16x16x4xf32>
    %27 = vector.extract_strided_slice %3 {offsets = [1, 1, 0], sizes = [16, 16, 4], strides = [1, 1, 1]} : vector<18x18x4xf32> to vector<16x16x4xf32>
    %c4 = arith.constant 4 : index
    %c0_15 = arith.constant 0 : index
    %c0_16 = arith.constant 0 : index
    %c0_17 = arith.constant 0 : index
    %28 = vector.load %arg3[%c4, %c0_15, %c0_16, %c0_17] : memref<9x1x1x4xf32, #tpu.memory_space<vmem>>, vector<1x1x1x4xf32>
    %29 = vector.shape_cast %28 : vector<1x1x1x4xf32> to vector<1x1x4xf32>
    %30 = vector.broadcast %29 : vector<1x1x4xf32> to vector<16x16x4xf32>
    %31 = arith.mulf %27, %30 : vector<16x16x4xf32>
    %32 = arith.addf %26, %31 : vector<16x16x4xf32>
    %33 = vector.extract_strided_slice %3 {offsets = [1, 2, 0], sizes = [16, 16, 4], strides = [1, 1, 1]} : vector<18x18x4xf32> to vector<16x16x4xf32>
    %c5 = arith.constant 5 : index
    %c0_18 = arith.constant 0 : index
    %c0_19 = arith.constant 0 : index
    %c0_20 = arith.constant 0 : index
    %34 = vector.load %arg3[%c5, %c0_18, %c0_19, %c0_20] : memref<9x1x1x4xf32, #tpu.memory_space<vmem>>, vector<1x1x1x4xf32>
    %35 = vector.shape_cast %34 : vector<1x1x1x4xf32> to vector<1x1x4xf32>
    %36 = vector.broadcast %35 : vector<1x1x4xf32> to vector<16x16x4xf32>
    %37 = arith.mulf %33, %36 : vector<16x16x4xf32>
    %38 = arith.addf %32, %37 : vector<16x16x4xf32>
    %39 = vector.extract_strided_slice %3 {offsets = [2, 0, 0], sizes = [16, 16, 4], strides = [1, 1, 1]} : vector<18x18x4xf32> to vector<16x16x4xf32>
    %c6 = arith.constant 6 : index
    %c0_21 = arith.constant 0 : index
    %c0_22 = arith.constant 0 : index
    %c0_23 = arith.constant 0 : index
    %40 = vector.load %arg3[%c6, %c0_21, %c0_22, %c0_23] : memref<9x1x1x4xf32, #tpu.memory_space<vmem>>, vector<1x1x1x4xf32>
    %41 = vector.shape_cast %40 : vector<1x1x1x4xf32> to vector<1x1x4xf32>
    %42 = vector.broadcast %41 : vector<1x1x4xf32> to vector<16x16x4xf32>
    %43 = arith.mulf %39, %42 : vector<16x16x4xf32>
    %44 = arith.addf %38, %43 : vector<16x16x4xf32>
    %45 = vector.extract_strided_slice %3 {offsets = [2, 1, 0], sizes = [16, 16, 4], strides = [1, 1, 1]} : vector<18x18x4xf32> to vector<16x16x4xf32>
    %c7 = arith.constant 7 : index
    %c0_24 = arith.constant 0 : index
    %c0_25 = arith.constant 0 : index
    %c0_26 = arith.constant 0 : index
    %46 = vector.load %arg3[%c7, %c0_24, %c0_25, %c0_26] : memref<9x1x1x4xf32, #tpu.memory_space<vmem>>, vector<1x1x1x4xf32>
    %47 = vector.shape_cast %46 : vector<1x1x1x4xf32> to vector<1x1x4xf32>
    %48 = vector.broadcast %47 : vector<1x1x4xf32> to vector<16x16x4xf32>
    %49 = arith.mulf %45, %48 : vector<16x16x4xf32>
    %50 = arith.addf %44, %49 : vector<16x16x4xf32>
    %51 = vector.extract_strided_slice %3 {offsets = [2, 2, 0], sizes = [16, 16, 4], strides = [1, 1, 1]} : vector<18x18x4xf32> to vector<16x16x4xf32>
    %c8 = arith.constant 8 : index
    %c0_27 = arith.constant 0 : index
    %c0_28 = arith.constant 0 : index
    %c0_29 = arith.constant 0 : index
    %52 = vector.load %arg3[%c8, %c0_27, %c0_28, %c0_29] : memref<9x1x1x4xf32, #tpu.memory_space<vmem>>, vector<1x1x1x4xf32>
    %53 = vector.shape_cast %52 : vector<1x1x1x4xf32> to vector<1x1x4xf32>
    %54 = vector.broadcast %53 : vector<1x1x4xf32> to vector<16x16x4xf32>
    %55 = arith.mulf %51, %54 : vector<16x16x4xf32>
    %56 = arith.addf %50, %55 : vector<16x16x4xf32>
    %57 = vector.shape_cast %56 : vector<16x16x4xf32> to vector<256x4xf32>
    %c0_30 = arith.constant 0 : index
    %c0_31 = arith.constant 0 : index
    %58 = vector.load %arg4[%c0_30, %c0_31] : memref<4x128xf32, #tpu.memory_space<vmem>>, vector<4x128xf32>
    %cst = arith.constant dense<0.000000e+00> : vector<256x128xf32>
    %59 = tpu.matmul %57, %58, %cst {dimension_numbers = #tpu.dot_dimension_numbers<[1], [0], [0], [1], [0, 0, 1, 1], [], []>} : vector<256x4xf32>, vector<4x128xf32>, vector<256x128xf32> -> vector<256x128xf32>
    %cst_32 = arith.constant dense<0.000000e+00> : vector<128xf32>
    %60 = vector.multi_reduction <add>, %59, %cst_32 [0] : vector<256x128xf32> to vector<128xf32>
    %61 = vector.shape_cast %60 : vector<128xf32> to vector<1x128xf32>
    %cst_33 = arith.constant 3.906250e-03 : f32
    %62 = vector.broadcast %cst_33 : f32 to vector<1x128xf32>
    %63 = arith.mulf %61, %62 : vector<1x128xf32>
    %64 = vector.broadcast %63 : vector<1x128xf32> to vector<256x128xf32>
    %65 = arith.subf %59, %64 : vector<256x128xf32>
    %66 = arith.mulf %65, %65 : vector<256x128xf32>
    %cst_34 = arith.constant dense<0.000000e+00> : vector<128xf32>
    %67 = vector.multi_reduction <add>, %66, %cst_34 [0] : vector<256x128xf32> to vector<128xf32>
    %68 = vector.shape_cast %67 : vector<128xf32> to vector<1x128xf32>
    %c0_35 = arith.constant 0 : index
    %c0_36 = arith.constant 0 : index
    %c0_37 = arith.constant 0 : index
    %c0_38 = arith.constant 0 : index
    %69 = vector.load %arg5[%c0_35, %c0_36, %c0_37, %c0_38] : memref<1x1x2x128xf32, #tpu.memory_space<vmem>>, vector<1x1x1x128xf32>
    %70 = vector.shape_cast %69 : vector<1x1x1x128xf32> to vector<1x128xf32>
    %71 = vector.shape_cast %63 : vector<1x128xf32> to vector<1x1x1x128xf32>
    tpu.vector_store %arg5[%c0_35, %c0_36, %c0_37, %c0_38], %71 {strides = array<i32>} : memref<1x1x2x128xf32, #tpu.memory_space<vmem>>, vector<1x1x1x128xf32>,
    %c0_39 = arith.constant 0 : index
    %c0_40 = arith.constant 0 : index
    %c1_41 = arith.constant 1 : index
    %c0_42 = arith.constant 0 : index
    %72 = vector.load %arg5[%c0_39, %c0_40, %c1_41, %c0_42] : memref<1x1x2x128xf32, #tpu.memory_space<vmem>>, vector<1x1x1x128xf32>
    %73 = vector.shape_cast %72 : vector<1x1x1x128xf32> to vector<1x128xf32>
    %74 = vector.shape_cast %68 : vector<1x128xf32> to vector<1x1x1x128xf32>
    tpu.vector_store %arg5[%c0_39, %c0_40, %c1_41, %c0_42], %74 {strides = array<i32>} : memref<1x1x2x128xf32, #tpu.memory_space<vmem>>, vector<1x1x1x128xf32>,
    return
  }
  func.func @transform_0(%arg0: i32, %arg1: i32) -> (i32, i32, i32, i32) {
    %c0_i32 = arith.constant 0 : i32
    %c0_i32_0 = arith.constant 0 : i32
    %c0_i32_1 = arith.constant 0 : i32
    %c0_i32_2 = arith.constant 0 : i32
    return %arg0, %c0_i32, %c0_i32_0, %c0_i32_1 : i32, i32, i32, i32
  }
  func.func @transform_1(%arg0: i32, %arg1: i32) -> (i32, i32, i32, i32) {
    %c0_i32 = arith.constant 0 : i32
    %c0_i32_0 = arith.constant 0 : i32
    %c0_i32_1 = arith.constant 0 : i32
    %c0_i32_2 = arith.constant 0 : i32
    %c0_i32_3 = arith.constant 0 : i32
    return %c0_i32, %c0_i32_0, %c0_i32_1, %c0_i32_2 : i32, i32, i32, i32
  }
  func.func @transform_2(%arg0: i32, %arg1: i32) -> (i32, i32) {
    %c0_i32 = arith.constant 0 : i32
    %c0_i32_0 = arith.constant 0 : i32
    %c0_i32_1 = arith.constant 0 : i32
    return %c0_i32, %c0_i32_0 : i32, i32
  }
  func.func @transform_3(%arg0: i32, %arg1: i32) -> (i32, i32, i32, i32) {
    %c0_i32 = arith.constant 0 : i32
    %c0_i32_0 = arith.constant 0 : i32
    %c0_i32_1 = arith.constant 0 : i32
    return %arg0, %arg1, %c0_i32, %c0_i32_0 : i32, i32, i32, i32
  }
}

</mosaic_0001>

<llo_original>
// kernel: conv_bn_forward.3
$region0: #{conv_bn_forward.3}
  #allocation0 [shape = 'u32[]', space=smem, size = 0x4, offset = 0x4, fixed_abs, tag = 'smem constant byte address 0x4 - core index']
  #allocation1 [shape = 'u32[144,128]{1,0:T(1,128)}', space=vmem, size = 0x12000, scoped, tag = 'internal scratch']
  %s0 = inlined_call_operand.vmem [shape: f32[2,18,18,4], index: 0, kind: input, shape index: {}]
  %s1 = inlined_call_operand.vmem [shape: f32[9,1,1,4], index: 1, kind: input, shape index: {}]
  %s2 = inlined_call_operand.vmem [shape: f32[4,128], index: 2, kind: input, shape index: {}]
  %s3 = inlined_call_operand.vmem [shape: f32[1,128], index: 3, kind: input, shape index: {}]
  %s4 = inlined_call_operand.vmem [shape: f32[1,128], index: 4, kind: input, shape index: {}]
  %s5 = inlined_call_operand.vmem [shape: f32[2,16,16,8], index: 5, kind: output, shape index: {}]
  %s6 = sld [smem:[#allocation0]]
  $region53: #{conv_bn_forward.3} parent=0
    _
  %s8 = ssub.s32 1, %s6
  %s9 = scalar_select 0, %s8, %s6
  loop: start=0, step=1, limit=4
  $region2: #{conv_bn_forward.3} parent=0 // loop_pre_header
    _
  $region3: #{conv_bn_forward.3} parent=0 // loop_header
    %s11 = sphi 0, %s15
    %p12 = scmp.ge.s32.totalorder %s11, 4
    %s18 = sphi 0, %s30
    %s19 = sphi 0, %s26
    %s20 = sphi 0, %s18
    %s21 = sphi 0, %s19
    %s22 = sphi 0, %s20
    %s23 = sphi 0, %s21
    %s33 = sphi 0, %s35
    %s36 = sphi 0, %s33
    %s37 = sphi 0, %s36
    %s53 = sphi 0, %s37
    %s57 = sphi 0, %s57
    %s59 = sphi 0, %s57
    %s60 = sphi 0, %s59
    %s74 = sphi 0, %s60
    %s78 = sphi 0, %s78
    %s80 = sphi 0, %s78
    %s81 = sphi 0, %s80
    %s95 = sphi 0, %s81
    %s99 = sphi 0, %s99
    %s101 = sphi 0, %s99
    %s102 = sphi 0, %s101
    %s116 = sphi 0, %s102
    %s120 = sphi 0, %s120
    %s122 = sphi 0, %s120
    %s123 = sphi 0, %s122
    %s137 = sphi 0, %s123
    %s145 = sphi 0, %s147
    %s148 = sphi 0, %s145
    %s149 = sphi 0, %s148
    %s165 = sphi 0, %s149
  $region4: #{conv_bn_forward.3} parent=0 // loop_header_branch
    %14 = sbr.rel (%p12) target = $region8
  $region5: #{conv_bn_forward.3} parent=0 // loop_body
    %s16 = ssub.s32 %s11, 1
    %s17 = ssub.s32 %s11, 2
    %s24 = sadd.s32 1, %s19
    %p25 = scmp.ge.s32.totalorder %s24, 1
    %s26 = scalar_select %p25, 0, %s24
    %s27 = sadd.s32 1, %s18
    %s28 = scalar_select %p25, %s27, %s18
    %p29 = scmp.ge.s32.totalorder %s28, 2
    %s30 = scalar_select %p29, 0, %s28
    %s31 = ssub.s32 %s18, %s30
    %p32 = scmp.eq.s32.totalorder %s31, 0
    %s34 = sadd.s32 %s33, 1
    %s35 = scalar_select %p32, %s33, %s34
    %p38 = pneg %p32
    %p39 = scmp.eq.s32.totalorder %s11, 1
    %p40 = por %p38, %p39
    %p41 = scmp.ne.s32.totalorder %s33, %s36
    %p42 = scmp.eq.s32.totalorder %s11, 0
    %p43 = por %p41, %p42
    %p44 = scmp.ne.s32.totalorder %s33, %s36
    %p45 = scmp.eq.s32.totalorder %s16, 1
    %p46 = por %p44, %p45
    %p47 = scmp.ne.s32.totalorder %s36, %s37
    %p48 = scmp.eq.s32.totalorder %s16, 0
    %p49 = por %p47, %p48
    %p50 = scmp.ne.s32.totalorder %s36, %s37
    %p51 = scmp.eq.s32.totalorder %s17, 1
    %p52 = por %p50, %p51
    %p54 = scmp.ne.s32.totalorder %s37, %s53
    %p55 = scmp.eq.s32.totalorder %s17, 0
    %p56 = por %p54, %p55
    %s58 = sadd.s32 %s57, 1
    %p61 = scmp.eq.s32.totalorder %s11, 1
    %p62 = scmp.ne.s32.totalorder %s57, %s59
    %p63 = scmp.eq.s32.totalorder %s11, 0
    %p64 = por %p62, %p63
    %p65 = scmp.ne.s32.totalorder %s57, %s59
    %p66 = scmp.eq.s32.totalorder %s16, 1
    %p67 = por %p65, %p66
    %p68 = scmp.ne.s32.totalorder %s59, %s60
    %p69 = scmp.eq.s32.totalorder %s16, 0
    %p70 = por %p68, %p69
    %p71 = scmp.ne.s32.totalorder %s59, %s60
    %p72 = scmp.eq.s32.totalorder %s17, 1
    %p73 = por %p71, %p72
    %p75 = scmp.ne.s32.totalorder %s60, %s74
    %p76 = scmp.eq.s32.totalorder %s17, 0
    %p77 = por %p75, %p76
    %s79 = sadd.s32 %s78, 1
    %p82 = scmp.eq.s32.totalorder %s11, 1
    %p83 = scmp.ne.s32.totalorder %s78, %s80
    %p84 = scmp.eq.s32.totalorder %s11, 0
    %p85 = por %p83, %p84
    %p86 = scmp.ne.s32.totalorder %s78, %s80
    %p87 = scmp.eq.s32.totalorder %s16, 1
    %p88 = por %p86, %p87
    %p89 = scmp.ne.s32.totalorder %s80, %s81
    %p90 = scmp.eq.s32.totalorder %s16, 0
    %p91 = por %p89, %p90
    %p92 = scmp.ne.s32.totalorder %s80, %s81
    %p93 = scmp.eq.s32.totalorder %s17, 1
    %p94 = por %p92, %p93
    %p96 = scmp.ne.s32.totalorder %s81, %s95
    %p97 = scmp.eq.s32.totalorder %s17, 0
    %p98 = por %p96, %p97
    %s100 = sadd.s32 %s99, 1
    %p103 = scmp.eq.s32.totalorder %s11, 1
    %p104 = scmp.ne.s32.totalorder %s99, %s101
    %p105 = scmp.eq.s32.totalorder %s11, 0
    %p106 = por %p104, %p105
    %p107 = scmp.ne.s32.totalorder %s99, %s101
    %p108 = scmp.eq.s32.totalorder %s16, 1
    %p109 = por %p107, %p108
    %p110 = scmp.ne.s32.totalorder %s101, %s102
    %p111 = scmp.eq.s32.totalorder %s16, 0
    %p112 = por %p110, %p111
    %p113 = scmp.ne.s32.totalorder %s101, %s102
    %p114 = scmp.eq.s32.totalorder %s17, 1
    %p115 = por %p113, %p114
    %p117 = scmp.ne.s32.totalorder %s102, %s116
    %p118 = scmp.eq.s32.totalorder %s17, 0
    %p119 = por %p117, %p118
    %s121 = sadd.s32 %s120, 1
    %p124 = scmp.eq.s32.totalorder %s11, 1
    %p125 = scmp.ne.s32.totalorder %s120, %s122
    %p126 = scmp.eq.s32.totalorder %s11, 0
    %p127 = por %p125, %p126
    %p128 = scmp.ne.s32.totalorder %s120, %s122
    %p129 = scmp.eq.s32.totalorder %s16, 1
    %p130 = por %p128, %p129
    %p131 = scmp.ne.s32.totalorder %s122, %s123
    %p132 = scmp.eq.s32.totalorder %s16, 0
    %p133 = por %p131, %p132
    %p134 = scmp.ne.s32.totalorder %s122, %s123
    %p135 = scmp.eq.s32.totalorder %s17, 1
    %p136 = por %p134, %p135
    %p138 = scmp.ne.s32.totalorder %s123, %s137
    %p139 = scmp.eq.s32.totalorder %s17, 0
    %p140 = por %p138, %p139
    %s141 = ssub.s32 %s18, %s30
    %s142 = ssub.s32 %s19, %s26
    %s143 = sor.u32 %s141, %s142
    %p144 = scmp.eq.s32.totalorder %s143, 0
    %s146 = sadd.s32 %s145, 1
    %s147 = scalar_select %p144, %s145, %s146
    %p150 = pneg %p144
    %p151 = scmp.eq.s32.totalorder %s11, 1
    %p152 = por %p150, %p151
    %p153 = scmp.ne.s32.totalorder %s145, %s148
    %p154 = scmp.eq.s32.totalorder %s11, 0
    %p155 = por %p153, %p154
    %p156 = scmp.ne.s32.totalorder %s145, %s148
    %p157 = scmp.eq.s32.totalorder %s16, 1
    %p158 = por %p156, %p157
    %p159 = scmp.ne.s32.totalorder %s148, %s149
    %p160 = scmp.eq.s32.totalorder %s16, 0
    %p161 = por %p159, %p160
    %p162 = scmp.ne.s32.totalorder %s148, %s149
    %p163 = scmp.eq.s32.totalorder %s17, 1
    %p164 = por %p162, %p163
    %p166 = scmp.ne.s32.totalorder %s149, %s165
    %p167 = scmp.eq.s32.totalorder %s17, 0
    %p168 = por %p166, %p167
    %p169 = scmp.le.s32.totalorder 1, %s11
    %p170 = scmp.lt.s32.totalorder %s11, 3
    %p171 = pnand %p169, %p170
    %p172 = pneg %p171
    // Predicated region
    $region9: #{conv_bn_forward.3} parent=5 // pred_check
      _
    $region10: #{conv_bn_forward.3} parent=5 // pred_check_branch
      %174 = sbr.rel (%p171) target = $region12
    $region11: #{conv_bn_forward.3} parent=5 // pred_region
      %s175 = ssub.s32 %s11, 1
      // Predicated region
      $region13: #{conv_bn_forward.3} parent=11 // pred_check
        %p176 = pneg %p70
      $region14: #{conv_bn_forward.3} parent=11 // pred_check_branch
        %178 = sbr.rel (%p176) target = $region16
      $region15: #{conv_bn_forward.3} parent=11 // pred_region
        _
      $region16: #{conv_bn_forward.3} parent=11 // pred_fallthru
        _
      // Predicated region
      $region17: #{conv_bn_forward.3} parent=11 // pred_check
        %p179 = pneg %p91
      $region18: #{conv_bn_forward.3} parent=11 // pred_check_branch
        %181 = sbr.rel (%p179) target = $region20
      $region19: #{conv_bn_forward.3} parent=11 // pred_region
        _
      $region20: #{conv_bn_forward.3} parent=11 // pred_fallthru
        _
      // Predicated region
      $region21: #{conv_bn_forward.3} parent=11 // pred_check
        %p182 = pneg %p112
      $region22: #{conv_bn_forward.3} parent=11 // pred_check_branch
        %184 = sbr.rel (%p182) target = $region24
      $region23: #{conv_bn_forward.3} parent=11 // pred_region
        _
      $region24: #{conv_bn_forward.3} parent=11 // pred_fallthru
        _
      // Predicated region
      $region25: #{conv_bn_forward.3} parent=11 // pred_check
        %p185 = pneg %p133
      $region26: #{conv_bn_forward.3} parent=11 // pred_check_branch
        %187 = sbr.rel (%p185) target = $region28
      $region27: #{conv_bn_forward.3} parent=11 // pred_region
        _
      $region28: #{conv_bn_forward.3} parent=11 // pred_fallthru
        _
    $region12: #{conv_bn_forward.3} parent=5 // pred_fallthru
      _
    %p188 = scmp.lt.s32.totalorder %s11, 2
    // Predicated region
    $region29: #{conv_bn_forward.3} parent=5 // pred_check
      %p189 = pneg %p188
    $region30: #{conv_bn_forward.3} parent=5 // pred_check_branch
      %191 = sbr.rel (%p189) target = $region32
    $region31: #{conv_bn_forward.3} parent=5 // pred_region
      // Predicated region
      $region33: #{conv_bn_forward.3} parent=31 // pred_check
        %p192 = pneg %p43
      $region34: #{conv_bn_forward.3} parent=31 // pred_check_branch
        %194 = sbr.rel (%p192) target = $region36
      $region35: #{conv_bn_forward.3} parent=31 // pred_region
        %p195 = scmp.lt.s32.totalorder %s18, 1
        %s196 = scalar_select %p195, %s18, 1
        %s197 = smul.addr %s196, 54
        %s198 = smul.addr %s197, 8
        %s199 = scalar_lea.vmem %s0, %s198
      $region36: #{conv_bn_forward.3} parent=31 // pred_fallthru
        _
    $region32: #{conv_bn_forward.3} parent=5 // pred_fallthru
      _
    %p200 = scmp.le.s32.totalorder 1, %s11
    %p201 = scmp.lt.s32.totalorder %s11, 3
    %p202 = pnand %p200, %p201
    %p203 = pneg %p202
    // Predicated region
    $region37: #{conv_bn_forward.3} parent=5 // pred_check
      _
    $region38: #{conv_bn_forward.3} parent=5 // pred_check_branch
      %205 = sbr.rel (%p202) target = $region40
    $region39: #{conv_bn_forward.3} parent=5 // pred_region
      %s206 = ssub.s32 %s11, 1
      %p207 = scmp.lt.s32.totalorder %s20, 1
      %s208 = scalar_select %p207, %s20, 1
      %s209 = smul.addr %s208, 54
      %s210 = smul.addr %s209, 8
      %s211 = scalar_lea.vmem %s0, %s210
      %p212 = pneg %p49
      %p213 = pneg %p46
      %p214 = pneg %p70
      %p215 = pneg %p67
      %p216 = pneg %p91
      %p217 = pneg %p88
      %p218 = pneg %p112
      %p219 = pneg %p109
      %p220 = pneg %p133
      %p221 = pneg %p130
      %p222 = pneg %p161
      %p223 = pneg %p158
      %s224 = smul.u32 16, %s21
      %p225 = scmp.lt.s32.totalorder %s20, 1
      %s226 = scalar_select %p225, %s20, 1
      %p227 = scmp.lt.s32.totalorder %s224, 15
      %s228 = scalar_select %p227, %s224, 15
      %s229 = smul.addr %s228, 2
      %s230 = smul.addr %s226, 32
      %s231 = sadd.s32 %s229, %s230
      %s232 = smul.addr %s231, 8
      %s233 = scalar_lea.vmem %s5, %s232
      %p234 = scmp.lt.s32.totalorder %s20, 1
      %s235 = scalar_select %p234, %s20, 1
      %s236 = smul.addr %s235, 54
      %s237 = smul.addr %s236, 8
      %s238 = scalar_lea.vmem %s0, %s237
      %s239 = smul.u32 16, %s21
      %p240 = scmp.lt.s32.totalorder %s20, 1
      %s241 = scalar_select %p240, %s20, 1
      %p242 = scmp.lt.s32.totalorder %s239, 15
      %s243 = scalar_select %p242, %s239, 15
      %s244 = smul.addr %s243, 2
      %s245 = smul.addr %s241, 32
      %s246 = sadd.s32 %s244, %s245
      %s247 = smul.addr %s246, 8
      %s248 = scalar_lea.vmem %s5, %s247
      %s249 = smul.u32 16, %s21
      %s250 = smul.u32 %s21, 16
      %s251 = smul.u32 %s250, 24
      %s252 = scalar_lea.vmem %s238, %s251
      %v253 = vld [vmem:[%s252] sm:$0xff]
      %v254 = vld [vmem:[%s252 + $0x8] sm:$0xff]
      %v255 = vld [vmem:[%s252 + $0x10] sm:$0x3]
      %v256 = vld [vmem:[%s252 + $0x18] sm:$0xff]
      %v257 = vld [vmem:[%s252 + $0x20] sm:$0xff]
      %v258 = vld [vmem:[%s252 + $0x28] sm:$0x3]
      %v259 = vld [vmem:[%s252 + $0x30] sm:$0xff]
      %v260 = vld [vmem:[%s252 + $0x38] sm:$0xff]
      %v261 = vld [vmem:[%s252 + $0x40] sm:$0x3]
      %v262 = vld [vmem:[%s252 + $0x48] sm:$0xff]
      %v263 = vld [vmem:[%s252 + $0x50] sm:$0xff]
      %v264 = vld [vmem:[%s252 + $0x58] sm:$0x3]
      %v265 = vld [vmem:[%s252 + $0x60] sm:$0xff]
      %v266 = vld [vmem:[%s252 + $0x68] sm:$0xff]
      %v267 = vld [vmem:[%s252 + $0x70] sm:$0x3]
      %v268 = vld [vmem:[%s252 + $0x78] sm:$0xff]
      %v269 = vld [vmem:[%s252 + $0x80] sm:$0xff]
      %v270 = vld [vmem:[%s252 + $0x88] sm:$0x3]
      %v271 = vld [vmem:[%s252 + $0x90] sm:$0xff]
      %v272 = vld [vmem:[%s252 + $0x98] sm:$0xff]
      %v273 = vld [vmem:[%s252 + $0xa0] sm:$0x3]
      %v274 = vld [vmem:[%s252 + $0xa8] sm:$0xff]
      %v275 = vld [vmem:[%s252 + $0xb0] sm:$0xff]
      %v276 = vld [vmem:[%s252 + $0xb8] sm:$0x3]
      %v277 = vld [vmem:[%s252 + $0xc0] sm:$0xff]
      %v278 = vld [vmem:[%s252 + $0xc8] sm:$0xff]
      %v279 = vld [vmem:[%s252 + $0xd0] sm:$0x3]
      %v280 = vld [vmem:[%s252 + $0xd8] sm:$0xff]
      %v281 = vld [vmem:[%s252 + $0xe0] sm:$0xff]
      %v282 = vld [vmem:[%s252 + $0xe8] sm:$0x3]
      %v283 = vld [vmem:[%s252 + $0xf0] sm:$0xff]
      %v284 = vld [vmem:[%s252 + $0xf8] sm:$0xff]
      %v285 = vld [vmem:[%s252 + $0x100] sm:$0x3]
      %v286 = vld [vmem:[%s252 + $0x108] sm:$0xff]
      %v287 = vld [vmem:[%s252 + $0x110] sm:$0xff]
      %v288 = vld [vmem:[%s252 + $0x118] sm:$0x3]
      %v289 = vld [vmem:[%s252 + $0x120] sm:$0xff]
      %v290 = vld [vmem:[%s252 + $0x128] sm:$0xff]
      %v291 = vld [vmem:[%s252 + $0x130] sm:$0x3]
      %v292 = vld [vmem:[%s252 + $0x138] sm:$0xff]
      %v293 = vld [vmem:[%s252 + $0x140] sm:$0xff]
      %v294 = vld [vmem:[%s252 + $0x148] sm:$0x3]
      %v295 = vld [vmem:[%s252 + $0x150] sm:$0xff]
      %v296 = vld [vmem:[%s252 + $0x158] sm:$0xff]
      %v297 = vld [vmem:[%s252 + $0x160] sm:$0x3]
      %v298 = vld [vmem:[%s252 + $0x168] sm:$0xff]
      %v299 = vld [vmem:[%s252 + $0x170] sm:$0xff]
      %v300 = vld [vmem:[%s252 + $0x178] sm:$0x3]
      %v301 = vld [vmem:[%s252 + $0x180] sm:$0xff]
      %v302 = vld [vmem:[%s252 + $0x188] sm:$0xff]
      %v303 = vld [vmem:[%s252 + $0x190] sm:$0x3]
      %v304 = vld [vmem:[%s252 + $0x198] sm:$0xff]
      %v305 = vld [vmem:[%s252 + $0x1a0] sm:$0xff]
      %v306 = vld [vmem:[%s252 + $0x1a8] sm:$0x3]
      %v307 = vld [vmem:[%s1] sm:$0x1]
      %v309 = vlaneseq
      %v310 = vshrl.u32 %v309, 7
      %v311 = vsub.s32 0, %v310
      %v312 = vrot.slane %v307, %v311
      %v314 = vmul.f32 %v253, %v312
      %v315 = vmul.f32 %v254, %v312
      %v316 = vmul.f32 %v256, %v312
      %v317 = vmul.f32 %v257, %v312
      %v318 = vmul.f32 %v259, %v312
      %v319 = vmul.f32 %v260, %v312
      %v320 = vmul.f32 %v262, %v312
      %v321 = vmul.f32 %v263, %v312
      %v322 = vmul.f32 %v265, %v312
      %v323 = vmul.f32 %v266, %v312
      %v324 = vmul.f32 %v268, %v312
      %v325 = vmul.f32 %v269, %v312
      %v326 = vmul.f32 %v271, %v312
      %v327 = vmul.f32 %v272, %v312
      %v328 = vmul.f32 %v274, %v312
      %v329 = vmul.f32 %v275, %v312
      %v330 = vmul.f32 %v277, %v312
      %v331 = vmul.f32 %v278, %v312
      %v332 = vmul.f32 %v280, %v312
      %v333 = vmul.f32 %v281, %v312
      %v334 = vmul.f32 %v283, %v312
      %v335 = vmul.f32 %v284, %v312
      %v336 = vmul.f32 %v286, %v312
      %v337 = vmul.f32 %v287, %v312
      %v338 = vmul.f32 %v289, %v312
      %v339 = vmul.f32 %v290, %v312
      %v340 = vmul.f32 %v292, %v312
      %v341 = vmul.f32 %v293, %v312
      %v342 = vmul.f32 %v295, %v312
      %v343 = vmul.f32 %v296, %v312
      %v344 = vmul.f32 %v298, %v312
      %v345 = vmul.f32 %v299, %v312
      %s346 = scalar_lea.vmem %s1, 1
      %v347 = vld [vmem:[%s346] sm:$0x1]
      %v349 = vlaneseq
      %v350 = vshrl.u32 %v349, 7
      %v351 = vsub.s32 0, %v350
      %v352 = vrot.slane %v347, %v351
      %v354 = vmul.f32 %v253, %v352
      %v355 = vmul.f32 %v254, %v352
      %v356 = vmul.f32 %v255, %v352
      %v357 = vmul.f32 %v256, %v352
      %v358 = vmul.f32 %v257, %v352
      %v359 = vmul.f32 %v258, %v352
      %v360 = vmul.f32 %v259, %v352
      %v361 = vmul.f32 %v260, %v352
      %v362 = vmul.f32 %v261, %v352
      %v363 = vmul.f32 %v262, %v352
      %v364 = vmul.f32 %v263, %v352
      %v365 = vmul.f32 %v264, %v352
      %v366 = vmul.f32 %v265, %v352
      %v367 = vmul.f32 %v266, %v352
      %v368 = vmul.f32 %v267, %v352
      %v369 = vmul.f32 %v268, %v352
      %v370 = vmul.f32 %v269, %v352
      %v371 = vmul.f32 %v270, %v352
      %v372 = vmul.f32 %v271, %v352
      %v373 = vmul.f32 %v272, %v352
      %v374 = vmul.f32 %v273, %v352
      %v375 = vmul.f32 %v274, %v352
      %v376 = vmul.f32 %v275, %v352
      %v377 = vmul.f32 %v276, %v352
      %v378 = vmul.f32 %v277, %v352
      %v379 = vmul.f32 %v278, %v352
      %v380 = vmul.f32 %v279, %v352
      %v381 = vmul.f32 %v280, %v352
      %v382 = vmul.f32 %v281, %v352
      %v383 = vmul.f32 %v282, %v352
      %v384 = vmul.f32 %v283, %v352
      %v385 = vmul.f32 %v284, %v352
      %v386 = vmul.f32 %v285, %v352
      %v387 = vmul.f32 %v286, %v352
      %v388 = vmul.f32 %v287, %v352
      %v389 = vmul.f32 %v288, %v352
      %v390 = vmul.f32 %v289, %v352
      %v391 = vmul.f32 %v290, %v352
      %v392 = vmul.f32 %v291, %v352
      %v393 = vmul.f32 %v292, %v352
      %v394 = vmul.f32 %v293, %v352
      %v395 = vmul.f32 %v294, %v352
      %v396 = vmul.f32 %v295, %v352
      %v397 = vmul.f32 %v296, %v352
      %v398 = vmul.f32 %v297, %v352
      %v399 = vmul.f32 %v298, %v352
      %v400 = vmul.f32 %v299, %v352
      %v401 = vmul.f32 %v300, %v352
      %vm450 = vcmask 1046528
      %v451 = vrot.slane %v354, 1
      %v452 = vrot.slane %v355, 1
      %v453 = vsel %vm450, %v451, %v452
      %v454 = vrot.slane %v356, 1
      %v455 = vsel %vm450, %v452, %v454
      %v456 = vrot.slane %v357, 1
      %v457 = vrot.slane %v358, 1
      %v458 = vsel %vm450, %v456, %v457
      %v459 = vrot.slane %v359, 1
      %v460 = vsel %vm450, %v457, %v459
      %v461 = vrot.slane %v360, 1
      %v462 = vrot.slane %v361, 1
      %v463 = vsel %vm450, %v461, %v462
      %v464 = vrot.slane %v362, 1
      %v465 = vsel %vm450, %v462, %v464
      %v466 = vrot.slane %v363, 1
      %v467 = vrot.slane %v364, 1
      %v468 = vsel %vm450, %v466, %v467
      %v469 = vrot.slane %v365, 1
      %v470 = vsel %vm450, %v467, %v469
      %v471 = vrot.slane %v366, 1
      %v472 = vrot.slane %v367, 1
      %v473 = vsel %vm450, %v471, %v472
      %v474 = vrot.slane %v368, 1
      %v475 = vsel %vm450, %v472, %v474
      %v476 = vrot.slane %v369, 1
      %v477 = vrot.slane %v370, 1
      %v478 = vsel %vm450, %v476, %v477
      %v479 = vrot.slane %v371, 1
      %v480 = vsel %vm450, %v477, %v479
      %v481 = vrot.slane %v372, 1
      %v482 = vrot.slane %v373, 1
      %v483 = vsel %vm450, %v481, %v482
      %v484 = vrot.slane %v374, 1
      %v485 = vsel %vm450, %v482, %v484
      %v486 = vrot.slane %v375, 1
      %v487 = vrot.slane %v376, 1
      %v488 = vsel %vm450, %v486, %v487
      %v489 = vrot.slane %v377, 1
      %v490 = vsel %vm450, %v487, %v489
      %v491 = vrot.slane %v378, 1
      %v492 = vrot.slane %v379, 1
      %v493 = vsel %vm450, %v491, %v492
      %v494 = vrot.slane %v380, 1
      %v495 = vsel %vm450, %v492, %v494
      %v496 = vrot.slane %v381, 1
      %v497 = vrot.slane %v382, 1
      %v498 = vsel %vm450, %v496, %v497
      %v499 = vrot.slane %v383, 1
      %v500 = vsel %vm450, %v497, %v499
      %v501 = vrot.slane %v384, 1
      %v502 = vrot.slane %v385, 1
      %v503 = vsel %vm450, %v501, %v502
      %v504 = vrot.slane %v386, 1
      %v505 = vsel %vm450, %v502, %v504
      %v506 = vrot.slane %v387, 1
      %v507 = vrot.slane %v388, 1
      %v508 = vsel %vm450, %v506, %v507
      %v509 = vrot.slane %v389, 1
      %v510 = vsel %vm450, %v507, %v509
      %v511 = vrot.slane %v390, 1
      %v512 = vrot.slane %v391, 1
      %v513 = vsel %vm450, %v511, %v512
      %v514 = vrot.slane %v392, 1
      %v515 = vsel %vm450, %v512, %v514
      %v516 = vrot.slane %v393, 1
      %v517 = vrot.slane %v394, 1
      %v518 = vsel %vm450, %v516, %v517
      %v519 = vrot.slane %v395, 1
      %v520 = vsel %vm450, %v517, %v519
      %v521 = vrot.slane %v396, 1
      %v522 = vrot.slane %v397, 1
      %v523 = vsel %vm450, %v521, %v522
      %v524 = vrot.slane %v398, 1
      %v525 = vsel %vm450, %v522, %v524
      %v526 = vrot.slane %v399, 1
      %v527 = vrot.slane %v400, 1
      %v528 = vsel %vm450, %v526, %v527
      %v529 = vrot.slane %v401, 1
      %v530 = vsel %vm450, %v527, %v529
      %v563 = vadd.f32 %v314, %v453
      %v564 = vadd.f32 %v315, %v455
      %v565 = vadd.f32 %v316, %v458
      %v566 = vadd.f32 %v317, %v460
      %v567 = vadd.f32 %v318, %v463
      %v568 = vadd.f32 %v319, %v465
      %v569 = vadd.f32 %v320, %v468
      %v570 = vadd.f32 %v321, %v470
      %v571 = vadd.f32 %v322, %v473
      %v572 = vadd.f32 %v323, %v475
      %v573 = vadd.f32 %v324, %v478
      %v574 = vadd.f32 %v325, %v480
      %v575 = vadd.f32 %v326, %v483
      %v576 = vadd.f32 %v327, %v485
      %v577 = vadd.f32 %v328, %v488
      %v578 = vadd.f32 %v329, %v490
      %v579 = vadd.f32 %v330, %v493
      %v580 = vadd.f32 %v331, %v495
      %v581 = vadd.f32 %v332, %v498
      %v582 = vadd.f32 %v333, %v500
      %v583 = vadd.f32 %v334, %v503
      %v584 = vadd.f32 %v335, %v505
      %v585 = vadd.f32 %v336, %v508
      %v586 = vadd.f32 %v337, %v510
      %v587 = vadd.f32 %v338, %v513
      %v588 = vadd.f32 %v339, %v515
      %v589 = vadd.f32 %v340, %v518
      %v590 = vadd.f32 %v341, %v520
      %v591 = vadd.f32 %v342, %v523
      %v592 = vadd.f32 %v343, %v525
      %v593 = vadd.f32 %v344, %v528
      %v594 = vadd.f32 %v345, %v530
      %s595 = scalar_lea.vmem %s1, 2
      %v596 = vld [vmem:[%s595] sm:$0x1]
      %v598 = vlaneseq
      %v599 = vshrl.u32 %v598, 7
      %v600 = vsub.s32 0, %v599
      %v601 = vrot.slane %v596, %v600
      %v603 = vmul.f32 %v253, %v601
      %v604 = vmul.f32 %v254, %v601
      %v605 = vmul.f32 %v255, %v601
      %v606 = vmul.f32 %v256, %v601
      %v607 = vmul.f32 %v257, %v601
      %v608 = vmul.f32 %v258, %v601
      %v609 = vmul.f32 %v259, %v601
      %v610 = vmul.f32 %v260, %v601
      %v611 = vmul.f32 %v261, %v601
      %v612 = vmul.f32 %v262, %v601
      %v613 = vmul.f32 %v263, %v601
      %v614 = vmul.f32 %v264, %v601
      %v615 = vmul.f32 %v265, %v601
      %v616 = vmul.f32 %v266, %v601
      %v617 = vmul.f32 %v267, %v601
      %v618 = vmul.f32 %v268, %v601
      %v619 = vmul.f32 %v269, %v601
      %v620 = vmul.f32 %v270, %v601
      %v621 = vmul.f32 %v271, %v601
      %v622 = vmul.f32 %v272, %v601
      %v623 = vmul.f32 %v273, %v601
      %v624 = vmul.f32 %v274, %v601
      %v625 = vmul.f32 %v275, %v601
      %v626 = vmul.f32 %v276, %v601
      %v627 = vmul.f32 %v277, %v601
      %v628 = vmul.f32 %v278, %v601
      %v629 = vmul.f32 %v279, %v601
      %v630 = vmul.f32 %v280, %v601
      %v631 = vmul.f32 %v281, %v601
      %v632 = vmul.f32 %v282, %v601
      %v633 = vmul.f32 %v283, %v601
      %v634 = vmul.f32 %v284, %v601
      %v635 = vmul.f32 %v285, %v601
      %v636 = vmul.f32 %v286, %v601
      %v637 = vmul.f32 %v287, %v601
      %v638 = vmul.f32 %v288, %v601
      %v639 = vmul.f32 %v289, %v601
      %v640 = vmul.f32 %v290, %v601
      %v641 = vmul.f32 %v291, %v601
      %v642 = vmul.f32 %v292, %v601
      %v643 = vmul.f32 %v293, %v601
      %v644 = vmul.f32 %v294, %v601
      %v645 = vmul.f32 %v295, %v601
      %v646 = vmul.f32 %v296, %v601
      %v647 = vmul.f32 %v297, %v601
      %v648 = vmul.f32 %v298, %v601
      %v649 = vmul.f32 %v299, %v601
      %v650 = vmul.f32 %v300, %v601
      %vm699 = vcmask 1045504
      %v700 = vrot.slane %v603, 2
      %v701 = vrot.slane %v604, 2
      %v702 = vsel %vm699, %v700, %v701
      %v703 = vrot.slane %v605, 2
      %v704 = vsel %vm699, %v701, %v703
      %v705 = vrot.slane %v606, 2
      %v706 = vrot.slane %v607, 2
      %v707 = vsel %vm699, %v705, %v706
      %v708 = vrot.slane %v608, 2
      %v709 = vsel %vm699, %v706, %v708
      %v710 = vrot.slane %v609, 2
      %v711 = vrot.slane %v610, 2
      %v712 = vsel %vm699, %v710, %v711
      %v713 = vrot.slane %v611, 2
      %v714 = vsel %vm699, %v711, %v713
      %v715 = vrot.slane %v612, 2
      %v716 = vrot.slane %v613, 2
      %v717 = vsel %vm699, %v715, %v716
      %v718 = vrot.slane %v614, 2
      %v719 = vsel %vm699, %v716, %v718
      %v720 = vrot.slane %v615, 2
      %v721 = vrot.slane %v616, 2
      %v722 = vsel %vm699, %v720, %v721
      %v723 = vrot.slane %v617, 2
      %v724 = vsel %vm699, %v721, %v723
      %v725 = vrot.slane %v618, 2
      %v726 = vrot.slane %v619, 2
      %v727 = vsel %vm699, %v725, %v726
      %v728 = vrot.slane %v620, 2
      %v729 = vsel %vm699, %v726, %v728
      %v730 = vrot.slane %v621, 2
      %v731 = vrot.slane %v622, 2
      %v732 = vsel %vm699, %v730, %v731
      %v733 = vrot.slane %v623, 2
      %v734 = vsel %vm699, %v731, %v733
      %v735 = vrot.slane %v624, 2
      %v736 = vrot.slane %v625, 2
      %v737 = vsel %vm699, %v735, %v736
      %v738 = vrot.slane %v626, 2
      %v739 = vsel %vm699, %v736, %v738
      %v740 = vrot.slane %v627, 2
      %v741 = vrot.slane %v628, 2
      %v742 = vsel %vm699, %v740, %v741
      %v743 = vrot.slane %v629, 2
      %v744 = vsel %vm699, %v741, %v743
      %v745 = vrot.slane %v630, 2
      %v746 = vrot.slane %v631, 2
      %v747 = vsel %vm699, %v745, %v746
      %v748 = vrot.slane %v632, 2
      %v749 = vsel %vm699, %v746, %v748
      %v750 = vrot.slane %v633, 2
      %v751 = vrot.slane %v634, 2
      %v752 = vsel %vm699, %v750, %v751
      %v753 = vrot.slane %v635, 2
      %v754 = vsel %vm699, %v751, %v753
      %v755 = vrot.slane %v636, 2
      %v756 = vrot.slane %v637, 2
      %v757 = vsel %vm699, %v755, %v756
      %v758 = vrot.slane %v638, 2
      %v759 = vsel %vm699, %v756, %v758
      %v760 = vrot.slane %v639, 2
      %v761 = vrot.slane %v640, 2
      %v762 = vsel %vm699, %v760, %v761
      %v763 = vrot.slane %v641, 2
      %v764 = vsel %vm699, %v761, %v763
      %v765 = vrot.slane %v642, 2
      %v766 = vrot.slane %v643, 2
      %v767 = vsel %vm699, %v765, %v766
      %v768 = vrot.slane %v644, 2
      %v769 = vsel %vm699, %v766, %v768
      %v770 = vrot.slane %v645, 2
      %v771 = vrot.slane %v646, 2
      %v772 = vsel %vm699, %v770, %v771
      %v773 = vrot.slane %v647, 2
      %v774 = vsel %vm699, %v771, %v773
      %v775 = vrot.slane %v648, 2
      %v776 = vrot.slane %v649, 2
      %v777 = vsel %vm699, %v775, %v776
      %v778 = vrot.slane %v650, 2
      %v779 = vsel %vm699, %v776, %v778
      %v812 = vadd.f32 %v563, %v702
      %v813 = vadd.f32 %v564, %v704
      %v814 = vadd.f32 %v565, %v707
      %v815 = vadd.f32 %v566, %v709
      %v816 = vadd.f32 %v567, %v712
      %v817 = vadd.f32 %v568, %v714
      %v818 = vadd.f32 %v569, %v717
      %v819 = vadd.f32 %v570, %v719
      %v820 = vadd.f32 %v571, %v722
      %v821 = vadd.f32 %v572, %v724
      %v822 = vadd.f32 %v573, %v727
      %v823 = vadd.f32 %v574, %v729
      %v824 = vadd.f32 %v575, %v732
      %v825 = vadd.f32 %v576, %v734
      %v826 = vadd.f32 %v577, %v737
      %v827 = vadd.f32 %v578, %v739
      %v828 = vadd.f32 %v579, %v742
      %v829 = vadd.f32 %v580, %v744
      %v830 = vadd.f32 %v581, %v747
      %v831 = vadd.f32 %v582, %v749
      %v832 = vadd.f32 %v583, %v752
      %v833 = vadd.f32 %v584, %v754
      %v834 = vadd.f32 %v585, %v757
      %v835 = vadd.f32 %v586, %v759
      %v836 = vadd.f32 %v587, %v762
      %v837 = vadd.f32 %v588, %v764
      %v838 = vadd.f32 %v589, %v767
      %v839 = vadd.f32 %v590, %v769
      %v840 = vadd.f32 %v591, %v772
      %v841 = vadd.f32 %v592, %v774
      %v842 = vadd.f32 %v593, %v777
      %v843 = vadd.f32 %v594, %v779
      %s844 = scalar_lea.vmem %s1, 3
      %v845 = vld [vmem:[%s844] sm:$0x1]
      %v847 = vlaneseq
      %v848 = vshrl.u32 %v847, 7
      %v849 = vsub.s32 0, %v848
      %v850 = vrot.slane %v845, %v849
      %v852 = vmul.f32 %v256, %v850
      %v853 = vmul.f32 %v257, %v850
      %v854 = vmul.f32 %v259, %v850
      %v855 = vmul.f32 %v260, %v850
      %v856 = vmul.f32 %v262, %v850
      %v857 = vmul.f32 %v263, %v850
      %v858 = vmul.f32 %v265, %v850
      %v859 = vmul.f32 %v266, %v850
      %v860 = vmul.f32 %v268, %v850
      %v861 = vmul.f32 %v269, %v850
      %v862 = vmul.f32 %v271, %v850
      %v863 = vmul.f32 %v272, %v850
      %v864 = vmul.f32 %v274, %v850
      %v865 = vmul.f32 %v275, %v850
      %v866 = vmul.f32 %v277, %v850
      %v867 = vmul.f32 %v278, %v850
      %v868 = vmul.f32 %v280, %v850
      %v869 = vmul.f32 %v281, %v850
      %v870 = vmul.f32 %v283, %v850
      %v871 = vmul.f32 %v284, %v850
      %v872 = vmul.f32 %v286, %v850
      %v873 = vmul.f32 %v287, %v850
      %v874 = vmul.f32 %v289, %v850
      %v875 = vmul.f32 %v290, %v850
      %v876 = vmul.f32 %v292, %v850
      %v877 = vmul.f32 %v293, %v850
      %v878 = vmul.f32 %v295, %v850
      %v879 = vmul.f32 %v296, %v850
      %v880 = vmul.f32 %v298, %v850
      %v881 = vmul.f32 %v299, %v850
      %v882 = vmul.f32 %v301, %v850
      %v883 = vmul.f32 %v302, %v850
      %v884 = vadd.f32 %v812, %v852
      %v885 = vadd.f32 %v813, %v853
      %v886 = vadd.f32 %v814, %v854
      %v887 = vadd.f32 %v815, %v855
      %v888 = vadd.f32 %v816, %v856
      %v889 = vadd.f32 %v817, %v857
      %v890 = vadd.f32 %v818, %v858
      %v891 = vadd.f32 %v819, %v859
      %v892 = vadd.f32 %v820, %v860
      %v893 = vadd.f32 %v821, %v861
      %v894 = vadd.f32 %v822, %v862
      %v895 = vadd.f32 %v823, %v863
      %v896 = vadd.f32 %v824, %v864
      %v897 = vadd.f32 %v825, %v865
      %v898 = vadd.f32 %v826, %v866
      %v899 = vadd.f32 %v827, %v867
      %v900 = vadd.f32 %v828, %v868
      %v901 = vadd.f32 %v829, %v869
      %v902 = vadd.f32 %v830, %v870
      %v903 = vadd.f32 %v831, %v871
      %v904 = vadd.f32 %v832, %v872
      %v905 = vadd.f32 %v833, %v873
      %v906 = vadd.f32 %v834, %v874
      %v907 = vadd.f32 %v835, %v875
      %v908 = vadd.f32 %v836, %v876
      %v909 = vadd.f32 %v837, %v877
      %v910 = vadd.f32 %v838, %v878
      %v911 = vadd.f32 %v839, %v879
      %v912 = vadd.f32 %v840, %v880
      %v913 = vadd.f32 %v841, %v881
      %v914 = vadd.f32 %v842, %v882
      %v915 = vadd.f32 %v843, %v883
      %s916 = scalar_lea.vmem %s1, 4
      %v917 = vld [vmem:[%s916] sm:$0x1]
      %v919 = vlaneseq
      %v920 = vshrl.u32 %v919, 7
      %v921 = vsub.s32 0, %v920
      %v922 = vrot.slane %v917, %v921
      %v924 = vmul.f32 %v256, %v922
      %v925 = vmul.f32 %v257, %v922
      %v926 = vmul.f32 %v258, %v922
      %v927 = vmul.f32 %v259, %v922
      %v928 = vmul.f32 %v260, %v922
      %v929 = vmul.f32 %v261, %v922
      %v930 = vmul.f32 %v262, %v922
      %v931 = vmul.f32 %v263, %v922
      %v932 = vmul.f32 %v264, %v922
      %v933 = vmul.f32 %v265, %v922
      %v934 = vmul.f32 %v266, %v922
      %v935 = vmul.f32 %v267, %v922
      %v936 = vmul.f32 %v268, %v922
      %v937 = vmul.f32 %v269, %v922
      %v938 = vmul.f32 %v270, %v922
      %v939 = vmul.f32 %v271, %v922
      %v940 = vmul.f32 %v272, %v922
      %v941 = vmul.f32 %v273, %v922
      %v942 = vmul.f32 %v274, %v922
      %v943 = vmul.f32 %v275, %v922
      %v944 = vmul.f32 %v276, %v922
      %v945 = vmul.f32 %v277, %v922
      %v946 = vmul.f32 %v278, %v922
      %v947 = vmul.f32 %v279, %v922
      %v948 = vmul.f32 %v280, %v922
      %v949 = vmul.f32 %v281, %v922
      %v950 = vmul.f32 %v282, %v922
      %v951 = vmul.f32 %v283, %v922
      %v952 = vmul.f32 %v284, %v922
      %v953 = vmul.f32 %v285, %v922
      %v954 = vmul.f32 %v286, %v922
      %v955 = vmul.f32 %v287, %v922
      %v956 = vmul.f32 %v288, %v922
      %v957 = vmul.f32 %v289, %v922
      %v958 = vmul.f32 %v290, %v922
      %v959 = vmul.f32 %v291, %v922
      %v960 = vmul.f32 %v292, %v922
      %v961 = vmul.f32 %v293, %v922
      %v962 = vmul.f32 %v294, %v922
      %v963 = vmul.f32 %v295, %v922
      %v964 = vmul.f32 %v296, %v922
      %v965 = vmul.f32 %v297, %v922
      %v966 = vmul.f32 %v298, %v922
      %v967 = vmul.f32 %v299, %v922
      %v968 = vmul.f32 %v300, %v922
      %v969 = vmul.f32 %v301, %v922
      %v970 = vmul.f32 %v302, %v922
      %v971 = vmul.f32 %v303, %v922
      %v1020 = vrot.slane %v924, 1
      %v1021 = vrot.slane %v925, 1
      %v1022 = vsel %vm450, %v1020, %v1021
      %v1023 = vrot.slane %v926, 1
      %v1024 = vsel %vm450, %v1021, %v1023
      %v1025 = vrot.slane %v927, 1
      %v1026 = vrot.slane %v928, 1
      %v1027 = vsel %vm450, %v1025, %v1026
      %v1028 = vrot.slane %v929, 1
      %v1029 = vsel %vm450, %v1026, %v1028
      %v1030 = vrot.slane %v930, 1
      %v1031 = vrot.slane %v931, 1
      %v1032 = vsel %vm450, %v1030, %v1031
      %v1033 = vrot.slane %v932, 1
      %v1034 = vsel %vm450, %v1031, %v1033
      %v1035 = vrot.slane %v933, 1
      %v1036 = vrot.slane %v934, 1
      %v1037 = vsel %vm450, %v1035, %v1036
      %v1038 = vrot.slane %v935, 1
      %v1039 = vsel %vm450, %v1036, %v1038
      %v1040 = vrot.slane %v936, 1
      %v1041 = vrot.slane %v937, 1
      %v1042 = vsel %vm450, %v1040, %v1041
      %v1043 = vrot.slane %v938, 1
      %v1044 = vsel %vm450, %v1041, %v1043
      %v1045 = vrot.slane %v939, 1
      %v1046 = vrot.slane %v940, 1
      %v1047 = vsel %vm450, %v1045, %v1046
      %v1048 = vrot.slane %v941, 1
      %v1049 = vsel %vm450, %v1046, %v1048
      %v1050 = vrot.slane %v942, 1
      %v1051 = vrot.slane %v943, 1
      %v1052 = vsel %vm450, %v1050, %v1051
      %v1053 = vrot.slane %v944, 1
      %v1054 = vsel %vm450, %v1051, %v1053
      %v1055 = vrot.slane %v945, 1
      %v1056 = vrot.slane %v946, 1
      %v1057 = vsel %vm450, %v1055, %v1056
      %v1058 = vrot.slane %v947, 1
      %v1059 = vsel %vm450, %v1056, %v1058
      %v1060 = vrot.slane %v948, 1
      %v1061 = vrot.slane %v949, 1
      %v1062 = vsel %vm450, %v1060, %v1061
      %v1063 = vrot.slane %v950, 1
      %v1064 = vsel %vm450, %v1061, %v1063
      %v1065 = vrot.slane %v951, 1
      %v1066 = vrot.slane %v952, 1
      %v1067 = vsel %vm450, %v1065, %v1066
      %v1068 = vrot.slane %v953, 1
      %v1069 = vsel %vm450, %v1066, %v1068
      %v1070 = vrot.slane %v954, 1
      %v1071 = vrot.slane %v955, 1
      %v1072 = vsel %vm450, %v1070, %v1071
      %v1073 = vrot.slane %v956, 1
      %v1074 = vsel %vm450, %v1071, %v1073
      %v1075 = vrot.slane %v957, 1
      %v1076 = vrot.slane %v958, 1
      %v1077 = vsel %vm450, %v1075, %v1076
      %v1078 = vrot.slane %v959, 1
      %v1079 = vsel %vm450, %v1076, %v1078
      %v1080 = vrot.slane %v960, 1
      %v1081 = vrot.slane %v961, 1
      %v1082 = vsel %vm450, %v1080, %v1081
      %v1083 = vrot.slane %v962, 1
      %v1084 = vsel %vm450, %v1081, %v1083
      %v1085 = vrot.slane %v963, 1
      %v1086 = vrot.slane %v964, 1
      %v1087 = vsel %vm450, %v1085, %v1086
      %v1088 = vrot.slane %v965, 1
      %v1089 = vsel %vm450, %v1086, %v1088
      %v1090 = vrot.slane %v966, 1
      %v1091 = vrot.slane %v967, 1
      %v1092 = vsel %vm450, %v1090, %v1091
      %v1093 = vrot.slane %v968, 1
      %v1094 = vsel %vm450, %v1091, %v1093
      %v1095 = vrot.slane %v969, 1
      %v1096 = vrot.slane %v970, 1
      %v1097 = vsel %vm450, %v1095, %v1096
      %v1098 = vrot.slane %v971, 1
      %v1099 = vsel %vm450, %v1096, %v1098
      %v1132 = vadd.f32 %v884, %v1022
      %v1133 = vadd.f32 %v885, %v1024
      %v1134 = vadd.f32 %v886, %v1027
      %v1135 = vadd.f32 %v887, %v1029
      %v1136 = vadd.f32 %v888, %v1032
      %v1137 = vadd.f32 %v889, %v1034
      %v1138 = vadd.f32 %v890, %v1037
      %v1139 = vadd.f32 %v891, %v1039
      %v1140 = vadd.f32 %v892, %v1042
      %v1141 = vadd.f32 %v893, %v1044
      %v1142 = vadd.f32 %v894, %v1047
      %v1143 = vadd.f32 %v895, %v1049
      %v1144 = vadd.f32 %v896, %v1052
      %v1145 = vadd.f32 %v897, %v1054
      %v1146 = vadd.f32 %v898, %v1057
      %v1147 = vadd.f32 %v899, %v1059
      %v1148 = vadd.f32 %v900, %v1062
      %v1149 = vadd.f32 %v901, %v1064
      %v1150 = vadd.f32 %v902, %v1067
      %v1151 = vadd.f32 %v903, %v1069
      %v1152 = vadd.f32 %v904, %v1072
      %v1153 = vadd.f32 %v905, %v1074
      %v1154 = vadd.f32 %v906, %v1077
      %v1155 = vadd.f32 %v907, %v1079
      %v1156 = vadd.f32 %v908, %v1082
      %v1157 = vadd.f32 %v909, %v1084
      %v1158 = vadd.f32 %v910, %v1087
      %v1159 = vadd.f32 %v911, %v1089
      %v1160 = vadd.f32 %v912, %v1092
      %v1161 = vadd.f32 %v913, %v1094
      %v1162 = vadd.f32 %v914, %v1097
      %v1163 = vadd.f32 %v915, %v1099
      %s1164 = scalar_lea.vmem %s1, 5
      %v1165 = vld [vmem:[%s1164] sm:$0x1]
      %v1167 = vlaneseq
      %v1168 = vshrl.u32 %v1167, 7
      %v1169 = vsub.s32 0, %v1168
      %v1170 = vrot.slane %v1165, %v1169
      %v1172 = vmul.f32 %v256, %v1170
      %v1173 = vmul.f32 %v257, %v1170
      %v1174 = vmul.f32 %v258, %v1170
      %v1175 = vmul.f32 %v259, %v1170
      %v1176 = vmul.f32 %v260, %v1170
      %v1177 = vmul.f32 %v261, %v1170
      %v1178 = vmul.f32 %v262, %v1170
      %v1179 = vmul.f32 %v263, %v1170
      %v1180 = vmul.f32 %v264, %v1170
      %v1181 = vmul.f32 %v265, %v1170
      %v1182 = vmul.f32 %v266, %v1170
      %v1183 = vmul.f32 %v267, %v1170
      %v1184 = vmul.f32 %v268, %v1170
      %v1185 = vmul.f32 %v269, %v1170
      %v1186 = vmul.f32 %v270, %v1170
      %v1187 = vmul.f32 %v271, %v1170
      %v1188 = vmul.f32 %v272, %v1170
      %v1189 = vmul.f32 %v273, %v1170
      %v1190 = vmul.f32 %v274, %v1170
      %v1191 = vmul.f32 %v275, %v1170
      %v1192 = vmul.f32 %v276, %v1170
      %v1193 = vmul.f32 %v277, %v1170
      %v1194 = vmul.f32 %v278, %v1170
      %v1195 = vmul.f32 %v279, %v1170
      %v1196 = vmul.f32 %v280, %v1170
      %v1197 = vmul.f32 %v281, %v1170
      %v1198 = vmul.f32 %v282, %v1170
      %v1199 = vmul.f32 %v283, %v1170
      %v1200 = vmul.f32 %v284, %v1170
      %v1201 = vmul.f32 %v285, %v1170
      %v1202 = vmul.f32 %v286, %v1170
      %v1203 = vmul.f32 %v287, %v1170
      %v1204 = vmul.f32 %v288, %v1170
      %v1205 = vmul.f32 %v289, %v1170
      %v1206 = vmul.f32 %v290, %v1170
      %v1207 = vmul.f32 %v291, %v1170
      %v1208 = vmul.f32 %v292, %v1170
      %v1209 = vmul.f32 %v293, %v1170
      %v1210 = vmul.f32 %v294, %v1170
      %v1211 = vmul.f32 %v295, %v1170
      %v1212 = vmul.f32 %v296, %v1170
      %v1213 = vmul.f32 %v297, %v1170
      %v1214 = vmul.f32 %v298, %v1170
      %v1215 = vmul.f32 %v299, %v1170
      %v1216 = vmul.f32 %v300, %v1170
      %v1217 = vmul.f32 %v301, %v1170
      %v1218 = vmul.f32 %v302, %v1170
      %v1219 = vmul.f32 %v303, %v1170
      %v1268 = vrot.slane %v1172, 2
      %v1269 = vrot.slane %v1173, 2
      %v1270 = vsel %vm699, %v1268, %v1269
      %v1271 = vrot.slane %v1174, 2
      %v1272 = vsel %vm699, %v1269, %v1271
      %v1273 = vrot.slane %v1175, 2
      %v1274 = vrot.slane %v1176, 2
      %v1275 = vsel %vm699, %v1273, %v1274
      %v1276 = vrot.slane %v1177, 2
      %v1277 = vsel %vm699, %v1274, %v1276
      %v1278 = vrot.slane %v1178, 2
      %v1279 = vrot.slane %v1179, 2
      %v1280 = vsel %vm699, %v1278, %v1279
      %v1281 = vrot.slane %v1180, 2
      %v1282 = vsel %vm699, %v1279, %v1281
      %v1283 = vrot.slane %v1181, 2
      %v1284 = vrot.slane %v1182, 2
      %v1285 = vsel %vm699, %v1283, %v1284
      %v1286 = vrot.slane %v1183, 2
      %v1287 = vsel %vm699, %v1284, %v1286
      %v1288 = vrot.slane %v1184, 2
      %v1289 = vrot.slane %v1185, 2
      %v1290 = vsel %vm699, %v1288, %v1289
      %v1291 = vrot.slane %v1186, 2
      %v1292 = vsel %vm699, %v1289, %v1291
      %v1293 = vrot.slane %v1187, 2
      %v1294 = vrot.slane %v1188, 2
      %v1295 = vsel %vm699, %v1293, %v1294
      %v1296 = vrot.slane %v1189, 2
      %v1297 = vsel %vm699, %v1294, %v1296
      %v1298 = vrot.slane %v1190, 2
      %v1299 = vrot.slane %v1191, 2
      %v1300 = vsel %vm699, %v1298, %v1299
      %v1301 = vrot.slane %v1192, 2
      %v1302 = vsel %vm699, %v1299, %v1301
      %v1303 = vrot.slane %v1193, 2
      %v1304 = vrot.slane %v1194, 2
      %v1305 = vsel %vm699, %v1303, %v1304
      %v1306 = vrot.slane %v1195, 2
      %v1307 = vsel %vm699, %v1304, %v1306
      %v1308 = vrot.slane %v1196, 2
      %v1309 = vrot.slane %v1197, 2
      %v1310 = vsel %vm699, %v1308, %v1309
      %v1311 = vrot.slane %v1198, 2
      %v1312 = vsel %vm699, %v1309, %v1311
      %v1313 = vrot.slane %v1199, 2
      %v1314 = vrot.slane %v1200, 2
      %v1315 = vsel %vm699, %v1313, %v1314
      %v1316 = vrot.slane %v1201, 2
      %v1317 = vsel %vm699, %v1314, %v1316
      %v1318 = vrot.slane %v1202, 2
      %v1319 = vrot.slane %v1203, 2
      %v1320 = vsel %vm699, %v1318, %v1319
      %v1321 = vrot.slane %v1204, 2
      %v1322 = vsel %vm699, %v1319, %v1321
      %v1323 = vrot.slane %v1205, 2
      %v1324 = vrot.slane %v1206, 2
      %v1325 = vsel %vm699, %v1323, %v1324
      %v1326 = vrot.slane %v1207, 2
      %v1327 = vsel %vm699, %v1324, %v1326
      %v1328 = vrot.slane %v1208, 2
      %v1329 = vrot.slane %v1209, 2
      %v1330 = vsel %vm699, %v1328, %v1329
      %v1331 = vrot.slane %v1210, 2
      %v1332 = vsel %vm699, %v1329, %v1331
      %v1333 = vrot.slane %v1211, 2
      %v1334 = vrot.slane %v1212, 2
      %v1335 = vsel %vm699, %v1333, %v1334
      %v1336 = vrot.slane %v1213, 2
      %v1337 = vsel %vm699, %v1334, %v1336
      %v1338 = vrot.slane %v1214, 2
      %v1339 = vrot.slane %v1215, 2
      %v1340 = vsel %vm699, %v1338, %v1339
      %v1341 = vrot.slane %v1216, 2
      %v1342 = vsel %vm699, %v1339, %v1341
      %v1343 = vrot.slane %v1217, 2
      %v1344 = vrot.slane %v1218, 2
      %v1345 = vsel %vm699, %v1343, %v1344
      %v1346 = vrot.slane %v1219, 2
      %v1347 = vsel %vm699, %v1344, %v1346
      %v1380 = vadd.f32 %v1132, %v1270
      %v1381 = vadd.f32 %v1133, %v1272
      %v1382 = vadd.f32 %v1134, %v1275
      %v1383 = vadd.f32 %v1135, %v1277
      %v1384 = vadd.f32 %v1136, %v1280
      %v1385 = vadd.f32 %v1137, %v1282
      %v1386 = vadd.f32 %v1138, %v1285
      %v1387 = vadd.f32 %v1139, %v1287
      %v1388 = vadd.f32 %v1140, %v1290
      %v1389 = vadd.f32 %v1141, %v1292
      %v1390 = vadd.f32 %v1142, %v1295
      %v1391 = vadd.f32 %v1143, %v1297
      %v1392 = vadd.f32 %v1144, %v1300
      %v1393 = vadd.f32 %v1145, %v1302
      %v1394 = vadd.f32 %v1146, %v1305
      %v1395 = vadd.f32 %v1147, %v1307
      %v1396 = vadd.f32 %v1148, %v1310
      %v1397 = vadd.f32 %v1149, %v1312
      %v1398 = vadd.f32 %v1150, %v1315
      %v1399 = vadd.f32 %v1151, %v1317
      %v1400 = vadd.f32 %v1152, %v1320
      %v1401 = vadd.f32 %v1153, %v1322
      %v1402 = vadd.f32 %v1154, %v1325
      %v1403 = vadd.f32 %v1155, %v1327
      %v1404 = vadd.f32 %v1156, %v1330
      %v1405 = vadd.f32 %v1157, %v1332
      %v1406 = vadd.f32 %v1158, %v1335
      %v1407 = vadd.f32 %v1159, %v1337
      %v1408 = vadd.f32 %v1160, %v1340
      %v1409 = vadd.f32 %v1161, %v1342
      %v1410 = vadd.f32 %v1162, %v1345
      %v1411 = vadd.f32 %v1163, %v1347
      %s1412 = scalar_lea.vmem %s1, 6
      %v1413 = vld [vmem:[%s1412] sm:$0x1]
      %v1415 = vlaneseq
      %v1416 = vshrl.u32 %v1415, 7
      %v1417 = vsub.s32 0, %v1416
      %v1418 = vrot.slane %v1413, %v1417
      %v1420 = vmul.f32 %v259, %v1418
      %v1421 = vmul.f32 %v260, %v1418
      %v1422 = vmul.f32 %v262, %v1418
      %v1423 = vmul.f32 %v263, %v1418
      %v1424 = vmul.f32 %v265, %v1418
      %v1425 = vmul.f32 %v266, %v1418
      %v1426 = vmul.f32 %v268, %v1418
      %v1427 = vmul.f32 %v269, %v1418
      %v1428 = vmul.f32 %v271, %v1418
      %v1429 = vmul.f32 %v272, %v1418
      %v1430 = vmul.f32 %v274, %v1418
      %v1431 = vmul.f32 %v275, %v1418
      %v1432 = vmul.f32 %v277, %v1418
      %v1433 = vmul.f32 %v278, %v1418
      %v1434 = vmul.f32 %v280, %v1418
      %v1435 = vmul.f32 %v281, %v1418
      %v1436 = vmul.f32 %v283, %v1418
      %v1437 = vmul.f32 %v284, %v1418
      %v1438 = vmul.f32 %v286, %v1418
      %v1439 = vmul.f32 %v287, %v1418
      %v1440 = vmul.f32 %v289, %v1418
      %v1441 = vmul.f32 %v290, %v1418
      %v1442 = vmul.f32 %v292, %v1418
      %v1443 = vmul.f32 %v293, %v1418
      %v1444 = vmul.f32 %v295, %v1418
      %v1445 = vmul.f32 %v296, %v1418
      %v1446 = vmul.f32 %v298, %v1418
      %v1447 = vmul.f32 %v299, %v1418
      %v1448 = vmul.f32 %v301, %v1418
      %v1449 = vmul.f32 %v302, %v1418
      %v1450 = vmul.f32 %v304, %v1418
      %v1451 = vmul.f32 %v305, %v1418
      %v1452 = vadd.f32 %v1380, %v1420
      %v1453 = vadd.f32 %v1381, %v1421
      %v1454 = vadd.f32 %v1382, %v1422
      %v1455 = vadd.f32 %v1383, %v1423
      %v1456 = vadd.f32 %v1384, %v1424
      %v1457 = vadd.f32 %v1385, %v1425
      %v1458 = vadd.f32 %v1386, %v1426
      %v1459 = vadd.f32 %v1387, %v1427
      %v1460 = vadd.f32 %v1388, %v1428
      %v1461 = vadd.f32 %v1389, %v1429
      %v1462 = vadd.f32 %v1390, %v1430
      %v1463 = vadd.f32 %v1391, %v1431
      %v1464 = vadd.f32 %v1392, %v1432
      %v1465 = vadd.f32 %v1393, %v1433
      %v1466 = vadd.f32 %v1394, %v1434
      %v1467 = vadd.f32 %v1395, %v1435
      %v1468 = vadd.f32 %v1396, %v1436
      %v1469 = vadd.f32 %v1397, %v1437
      %v1470 = vadd.f32 %v1398, %v1438
      %v1471 = vadd.f32 %v1399, %v1439
      %v1472 = vadd.f32 %v1400, %v1440
      %v1473 = vadd.f32 %v1401, %v1441
      %v1474 = vadd.f32 %v1402, %v1442
      %v1475 = vadd.f32 %v1403, %v1443
      %v1476 = vadd.f32 %v1404, %v1444
      %v1477 = vadd.f32 %v1405, %v1445
      %v1478 = vadd.f32 %v1406, %v1446
      %v1479 = vadd.f32 %v1407, %v1447
      %v1480 = vadd.f32 %v1408, %v1448
      %v1481 = vadd.f32 %v1409, %v1449
      %v1482 = vadd.f32 %v1410, %v1450
      %v1483 = vadd.f32 %v1411, %v1451
      %s1484 = scalar_lea.vmem %s1, 7
      %v1485 = vld [vmem:[%s1484] sm:$0x1]
      %v1487 = vlaneseq
      %v1488 = vshrl.u32 %v1487, 7
      %v1489 = vsub.s32 0, %v1488
      %v1490 = vrot.slane %v1485, %v1489
      %v1492 = vmul.f32 %v259, %v1490
      %v1493 = vmul.f32 %v260, %v1490
      %v1494 = vmul.f32 %v261, %v1490
      %v1495 = vmul.f32 %v262, %v1490
      %v1496 = vmul.f32 %v263, %v1490
      %v1497 = vmul.f32 %v264, %v1490
      %v1498 = vmul.f32 %v265, %v1490
      %v1499 = vmul.f32 %v266, %v1490
      %v1500 = vmul.f32 %v267, %v1490
      %v1501 = vmul.f32 %v268, %v1490
      %v1502 = vmul.f32 %v269, %v1490
      %v1503 = vmul.f32 %v270, %v1490
      %v1504 = vmul.f32 %v271, %v1490
      %v1505 = vmul.f32 %v272, %v1490
      %v1506 = vmul.f32 %v273, %v1490
      %v1507 = vmul.f32 %v274, %v1490
      %v1508 = vmul.f32 %v275, %v1490
      %v1509 = vmul.f32 %v276, %v1490
      %v1510 = vmul.f32 %v277, %v1490
      %v1511 = vmul.f32 %v278, %v1490
      %v1512 = vmul.f32 %v279, %v1490
      %v1513 = vmul.f32 %v280, %v1490
      %v1514 = vmul.f32 %v281, %v1490
      %v1515 = vmul.f32 %v282, %v1490
      %v1516 = vmul.f32 %v283, %v1490
      %v1517 = vmul.f32 %v284, %v1490
      %v1518 = vmul.f32 %v285, %v1490
      %v1519 = vmul.f32 %v286, %v1490
      %v1520 = vmul.f32 %v287, %v1490
      %v1521 = vmul.f32 %v288, %v1490
      %v1522 = vmul.f32 %v289, %v1490
      %v1523 = vmul.f32 %v290, %v1490
      %v1524 = vmul.f32 %v291, %v1490
      %v1525 = vmul.f32 %v292, %v1490
      %v1526 = vmul.f32 %v293, %v1490
      %v1527 = vmul.f32 %v294, %v1490
      %v1528 = vmul.f32 %v295, %v1490
      %v1529 = vmul.f32 %v296, %v1490
      %v1530 = vmul.f32 %v297, %v1490
      %v1531 = vmul.f32 %v298, %v1490
      %v1532 = vmul.f32 %v299, %v1490
      %v1533 = vmul.f32 %v300, %v1490
      %v1534 = vmul.f32 %v301, %v1490
      %v1535 = vmul.f32 %v302, %v1490
      %v1536 = vmul.f32 %v303, %v1490
      %v1537 = vmul.f32 %v304, %v1490
      %v1538 = vmul.f32 %v305, %v1490
      %v1539 = vmul.f32 %v306, %v1490
      %v1588 = vrot.slane %v1492, 1
      %v1589 = vrot.slane %v1493, 1
      %v1590 = vsel %vm450, %v1588, %v1589
      %v1591 = vrot.slane %v1494, 1
      %v1592 = vsel %vm450, %v1589, %v1591
      %v1593 = vrot.slane %v1495, 1
      %v1594 = vrot.slane %v1496, 1
      %v1595 = vsel %vm450, %v1593, %v1594
      %v1596 = vrot.slane %v1497, 1
      %v1597 = vsel %vm450, %v1594, %v1596
      %v1598 = vrot.slane %v1498, 1
      %v1599 = vrot.slane %v1499, 1
      %v1600 = vsel %vm450, %v1598, %v1599
      %v1601 = vrot.slane %v1500, 1
      %v1602 = vsel %vm450, %v1599, %v1601
      %v1603 = vrot.slane %v1501, 1
      %v1604 = vrot.slane %v1502, 1
      %v1605 = vsel %vm450, %v1603, %v1604
      %v1606 = vrot.slane %v1503, 1
      %v1607 = vsel %vm450, %v1604, %v1606
      %v1608 = vrot.slane %v1504, 1
      %v1609 = vrot.slane %v1505, 1
      %v1610 = vsel %vm450, %v1608, %v1609
      %v1611 = vrot.slane %v1506, 1
      %v1612 = vsel %vm450, %v1609, %v1611
      %v1613 = vrot.slane %v1507, 1
      %v1614 = vrot.slane %v1508, 1
      %v1615 = vsel %vm450, %v1613, %v1614
      %v1616 = vrot.slane %v1509, 1
      %v1617 = vsel %vm450, %v1614, %v1616
      %v1618 = vrot.slane %v1510, 1
      %v1619 = vrot.slane %v1511, 1
      %v1620 = vsel %vm450, %v1618, %v1619
      %v1621 = vrot.slane %v1512, 1
      %v1622 = vsel %vm450, %v1619, %v1621
      %v1623 = vrot.slane %v1513, 1
      %v1624 = vrot.slane %v1514, 1
      %v1625 = vsel %vm450, %v1623, %v1624
      %v1626 = vrot.slane %v1515, 1
      %v1627 = vsel %vm450, %v1624, %v1626
      %v1628 = vrot.slane %v1516, 1
      %v1629 = vrot.slane %v1517, 1
      %v1630 = vsel %vm450, %v1628, %v1629
      %v1631 = vrot.slane %v1518, 1
      %v1632 = vsel %vm450, %v1629, %v1631
      %v1633 = vrot.slane %v1519, 1
      %v1634 = vrot.slane %v1520, 1
      %v1635 = vsel %vm450, %v1633, %v1634
      %v1636 = vrot.slane %v1521, 1
      %v1637 = vsel %vm450, %v1634, %v1636
      %v1638 = vrot.slane %v1522, 1
      %v1639 = vrot.slane %v1523, 1
      %v1640 = vsel %vm450, %v1638, %v1639
      %v1641 = vrot.slane %v1524, 1
      %v1642 = vsel %vm450, %v1639, %v1641
      %v1643 = vrot.slane %v1525, 1
      %v1644 = vrot.slane %v1526, 1
      %v1645 = vsel %vm450, %v1643, %v1644
      %v1646 = vrot.slane %v1527, 1
      %v1647 = vsel %vm450, %v1644, %v1646
      %v1648 = vrot.slane %v1528, 1
      %v1649 = vrot.slane %v1529, 1
      %v1650 = vsel %vm450, %v1648, %v1649
      %v1651 = vrot.slane %v1530, 1
      %v1652 = vsel %vm450, %v1649, %v1651
      %v1653 = vrot.slane %v1531, 1
      %v1654 = vrot.slane %v1532, 1
      %v1655 = vsel %vm450, %v1653, %v1654
      %v1656 = vrot.slane %v1533, 1
      %v1657 = vsel %vm450, %v1654, %v1656
      %v1658 = vrot.slane %v1534, 1
      %v1659 = vrot.slane %v1535, 1
      %v1660 = vsel %vm450, %v1658, %v1659
      %v1661 = vrot.slane %v1536, 1
      %v1662 = vsel %vm450, %v1659, %v1661
      %v1663 = vrot.slane %v1537, 1
      %v1664 = vrot.slane %v1538, 1
      %v1665 = vsel %vm450, %v1663, %v1664
      %v1666 = vrot.slane %v1539, 1
      %v1667 = vsel %vm450, %v1664, %v1666
      %v1700 = vadd.f32 %v1452, %v1590
      %v1701 = vadd.f32 %v1453, %v1592
      %v1702 = vadd.f32 %v1454, %v1595
      %v1703 = vadd.f32 %v1455, %v1597
      %v1704 = vadd.f32 %v1456, %v1600
      %v1705 = vadd.f32 %v1457, %v1602
      %v1706 = vadd.f32 %v1458, %v1605
      %v1707 = vadd.f32 %v1459, %v1607
      %v1708 = vadd.f32 %v1460, %v1610
      %v1709 = vadd.f32 %v1461, %v1612
      %v1710 = vadd.f32 %v1462, %v1615
      %v1711 = vadd.f32 %v1463, %v1617
      %v1712 = vadd.f32 %v1464, %v1620
      %v1713 = vadd.f32 %v1465, %v1622
      %v1714 = vadd.f32 %v1466, %v1625
      %v1715 = vadd.f32 %v1467, %v1627
      %v1716 = vadd.f32 %v1468, %v1630
      %v1717 = vadd.f32 %v1469, %v1632
      %v1718 = vadd.f32 %v1470, %v1635
      %v1719 = vadd.f32 %v1471, %v1637
      %v1720 = vadd.f32 %v1472, %v1640
      %v1721 = vadd.f32 %v1473, %v1642
      %v1722 = vadd.f32 %v1474, %v1645
      %v1723 = vadd.f32 %v1475, %v1647
      %v1724 = vadd.f32 %v1476, %v1650
      %v1725 = vadd.f32 %v1477, %v1652
      %v1726 = vadd.f32 %v1478, %v1655
      %v1727 = vadd.f32 %v1479, %v1657
      %v1728 = vadd.f32 %v1480, %v1660
      %v1729 = vadd.f32 %v1481, %v1662
      %v1730 = vadd.f32 %v1482, %v1665
      %v1731 = vadd.f32 %v1483, %v1667
      %s1732 = scalar_lea.vmem %s1, 8
      %v1733 = vld [vmem:[%s1732] sm:$0x1]
      %v1735 = vlaneseq
      %v1736 = vshrl.u32 %v1735, 7
      %v1737 = vsub.s32 0, %v1736
      %v1738 = vrot.slane %v1733, %v1737
      %v1740 = vmul.f32 %v259, %v1738
      %v1741 = vmul.f32 %v260, %v1738
      %v1742 = vmul.f32 %v261, %v1738
      %v1743 = vmul.f32 %v262, %v1738
      %v1744 = vmul.f32 %v263, %v1738
      %v1745 = vmul.f32 %v264, %v1738
      %v1746 = vmul.f32 %v265, %v1738
      %v1747 = vmul.f32 %v266, %v1738
      %v1748 = vmul.f32 %v267, %v1738
      %v1749 = vmul.f32 %v268, %v1738
      %v1750 = vmul.f32 %v269, %v1738
      %v1751 = vmul.f32 %v270, %v1738
      %v1752 = vmul.f32 %v271, %v1738
      %v1753 = vmul.f32 %v272, %v1738
      %v1754 = vmul.f32 %v273, %v1738
      %v1755 = vmul.f32 %v274, %v1738
      %v1756 = vmul.f32 %v275, %v1738
      %v1757 = vmul.f32 %v276, %v1738
      %v1758 = vmul.f32 %v277, %v1738
      %v1759 = vmul.f32 %v278, %v1738
      %v1760 = vmul.f32 %v279, %v1738
      %v1761 = vmul.f32 %v280, %v1738
      %v1762 = vmul.f32 %v281, %v1738
      %v1763 = vmul.f32 %v282, %v1738
      %v1764 = vmul.f32 %v283, %v1738
      %v1765 = vmul.f32 %v284, %v1738
      %v1766 = vmul.f32 %v285, %v1738
      %v1767 = vmul.f32 %v286, %v1738
      %v1768 = vmul.f32 %v287, %v1738
      %v1769 = vmul.f32 %v288, %v1738
      %v1770 = vmul.f32 %v289, %v1738
      %v1771 = vmul.f32 %v290, %v1738
      %v1772 = vmul.f32 %v291, %v1738
      %v1773 = vmul.f32 %v292, %v1738
      %v1774 = vmul.f32 %v293, %v1738
      %v1775 = vmul.f32 %v294, %v1738
      %v1776 = vmul.f32 %v295, %v1738
      %v1777 = vmul.f32 %v296, %v1738
      %v1778 = vmul.f32 %v297, %v1738
      %v1779 = vmul.f32 %v298, %v1738
      %v1780 = vmul.f32 %v299, %v1738
      %v1781 = vmul.f32 %v300, %v1738
      %v1782 = vmul.f32 %v301, %v1738
      %v1783 = vmul.f32 %v302, %v1738
      %v1784 = vmul.f32 %v303, %v1738
      %v1785 = vmul.f32 %v304, %v1738
      %v1786 = vmul.f32 %v305, %v1738
      %v1787 = vmul.f32 %v306, %v1738
      %v1836 = vrot.slane %v1740, 2
      %v1837 = vrot.slane %v1741, 2
      %v1838 = vsel %vm699, %v1836, %v1837
      %v1839 = vrot.slane %v1742, 2
      %v1840 = vsel %vm699, %v1837, %v1839
      %v1841 = vrot.slane %v1743, 2
      %v1842 = vrot.slane %v1744, 2
      %v1843 = vsel %vm699, %v1841, %v1842
      %v1844 = vrot.slane %v1745, 2
      %v1845 = vsel %vm699, %v1842, %v1844
      %v1846 = vrot.slane %v1746, 2
      %v1847 = vrot.slane %v1747, 2
      %v1848 = vsel %vm699, %v1846, %v1847
      %v1849 = vrot.slane %v1748, 2
      %v1850 = vsel %vm699, %v1847, %v1849
      %v1851 = vrot.slane %v1749, 2
      %v1852 = vrot.slane %v1750, 2
      %v1853 = vsel %vm699, %v1851, %v1852
      %v1854 = vrot.slane %v1751, 2
      %v1855 = vsel %vm699, %v1852, %v1854
      %v1856 = vrot.slane %v1752, 2
      %v1857 = vrot.slane %v1753, 2
      %v1858 = vsel %vm699, %v1856, %v1857
      %v1859 = vrot.slane %v1754, 2
      %v1860 = vsel %vm699, %v1857, %v1859
      %v1861 = vrot.slane %v1755, 2
      %v1862 = vrot.slane %v1756, 2
      %v1863 = vsel %vm699, %v1861, %v1862
      %v1864 = vrot.slane %v1757, 2
      %v1865 = vsel %vm699, %v1862, %v1864
      %v1866 = vrot.slane %v1758, 2
      %v1867 = vrot.slane %v1759, 2
      %v1868 = vsel %vm699, %v1866, %v1867
      %v1869 = vrot.slane %v1760, 2
      %v1870 = vsel %vm699, %v1867, %v1869
      %v1871 = vrot.slane %v1761, 2
      %v1872 = vrot.slane %v1762, 2
      %v1873 = vsel %vm699, %v1871, %v1872
      %v1874 = vrot.slane %v1763, 2
      %v1875 = vsel %vm699, %v1872, %v1874
      %v1876 = vrot.slane %v1764, 2
      %v1877 = vrot.slane %v1765, 2
      %v1878 = vsel %vm699, %v1876, %v1877
      %v1879 = vrot.slane %v1766, 2
      %v1880 = vsel %vm699, %v1877, %v1879
      %v1881 = vrot.slane %v1767, 2
      %v1882 = vrot.slane %v1768, 2
      %v1883 = vsel %vm699, %v1881, %v1882
      %v1884 = vrot.slane %v1769, 2
      %v1885 = vsel %vm699, %v1882, %v1884
      %v1886 = vrot.slane %v1770, 2
      %v1887 = vrot.slane %v1771, 2
      %v1888 = vsel %vm699, %v1886, %v1887
      %v1889 = vrot.slane %v1772, 2
      %v1890 = vsel %vm699, %v1887, %v1889
      %v1891 = vrot.slane %v1773, 2
      %v1892 = vrot.slane %v1774, 2
      %v1893 = vsel %vm699, %v1891, %v1892
      %v1894 = vrot.slane %v1775, 2
      %v1895 = vsel %vm699, %v1892, %v1894
      %v1896 = vrot.slane %v1776, 2
      %v1897 = vrot.slane %v1777, 2
      %v1898 = vsel %vm699, %v1896, %v1897
      %v1899 = vrot.slane %v1778, 2
      %v1900 = vsel %vm699, %v1897, %v1899
      %v1901 = vrot.slane %v1779, 2
      %v1902 = vrot.slane %v1780, 2
      %v1903 = vsel %vm699, %v1901, %v1902
      %v1904 = vrot.slane %v1781, 2
      %v1905 = vsel %vm699, %v1902, %v1904
      %v1906 = vrot.slane %v1782, 2
      %v1907 = vrot.slane %v1783, 2
      %v1908 = vsel %vm699, %v1906, %v1907
      %v1909 = vrot.slane %v1784, 2
      %v1910 = vsel %vm699, %v1907, %v1909
      %v1911 = vrot.slane %v1785, 2
      %v1912 = vrot.slane %v1786, 2
      %v1913 = vsel %vm699, %v1911, %v1912
      %v1914 = vrot.slane %v1787, 2
      %v1915 = vsel %vm699, %v1912, %v1914
      %v1948 = vadd.f32 %v1700, %v1838
      %v1949 = vadd.f32 %v1701, %v1840
      %v1950 = vadd.f32 %v1702, %v1843
      %v1951 = vadd.f32 %v1703, %v1845
      %v1952 = vadd.f32 %v1704, %v1848
      %v1953 = vadd.f32 %v1705, %v1850
      %v1954 = vadd.f32 %v1706, %v1853
      %v1955 = vadd.f32 %v1707, %v1855
      %v1956 = vadd.f32 %v1708, %v1858
      %v1957 = vadd.f32 %v1709, %v1860
      %v1958 = vadd.f32 %v1710, %v1863
      %v1959 = vadd.f32 %v1711, %v1865
      %v1960 = vadd.f32 %v1712, %v1868
      %v1961 = vadd.f32 %v1713, %v1870
      %v1962 = vadd.f32 %v1714, %v1873
      %v1963 = vadd.f32 %v1715, %v1875
      %v1964 = vadd.f32 %v1716, %v1878
      %v1965 = vadd.f32 %v1717, %v1880
      %v1966 = vadd.f32 %v1718, %v1883
      %v1967 = vadd.f32 %v1719, %v1885
      %v1968 = vadd.f32 %v1720, %v1888
      %v1969 = vadd.f32 %v1721, %v1890
      %v1970 = vadd.f32 %v1722, %v1893
      %v1971 = vadd.f32 %v1723, %v1895
      %v1972 = vadd.f32 %v1724, %v1898
      %v1973 = vadd.f32 %v1725, %v1900
      %v1974 = vadd.f32 %v1726, %v1903
      %v1975 = vadd.f32 %v1727, %v1905
      %v1976 = vadd.f32 %v1728, %v1908
      %v1977 = vadd.f32 %v1729, %v1910
      %v1978 = vadd.f32 %v1730, %v1913
      %v1979 = vadd.f32 %v1731, %v1915
      %v1980 = vld [vmem:[%s2] sm:$0xf]
      %vm1981 = vcmask 31744
      %v1983 = vsel %vm1981, %v1948, 0
      %v1986 = vsel %vm1981, %v1949, 0
      %v1989 = vsel %vm1981, %v1950, 0
      %v1992 = vsel %vm1981, %v1951, 0
      %v1995 = vsel %vm1981, %v1952, 0
      %v1998 = vsel %vm1981, %v1953, 0
      %v2001 = vsel %vm1981, %v1954, 0
      %v2004 = vsel %vm1981, %v1955, 0
      %v2007 = vsel %vm1981, %v1956, 0
      %v2010 = vsel %vm1981, %v1957, 0
      %v2013 = vsel %vm1981, %v1958, 0
      %v2016 = vsel %vm1981, %v1959, 0
      %v2019 = vsel %vm1981, %v1960, 0
      %v2022 = vsel %vm1981, %v1961, 0
      %v2025 = vsel %vm1981, %v1962, 0
      %v2028 = vsel %vm1981, %v1963, 0
      %v2031 = vsel %vm1981, %v1964, 0
      %v2034 = vsel %vm1981, %v1965, 0
      %v2037 = vsel %vm1981, %v1966, 0
      %v2040 = vsel %vm1981, %v1967, 0
      %v2043 = vsel %vm1981, %v1968, 0
      %v2046 = vsel %vm1981, %v1969, 0
      %v2049 = vsel %vm1981, %v1970, 0
      %v2052 = vsel %vm1981, %v1971, 0
      %v2055 = vsel %vm1981, %v1972, 0
      %v2058 = vsel %vm1981, %v1973, 0
      %v2061 = vsel %vm1981, %v1974, 0
      %v2064 = vsel %vm1981, %v1975, 0
      %v2067 = vsel %vm1981, %v1976, 0
      %v2070 = vsel %vm1981, %v1977, 0
      %v2073 = vsel %vm1981, %v1978, 0
      %v2076 = vsel %vm1981, %v1979, 0
      %vm2078 = vcmask 1043456
      %v2080 = vsel %vm2078, %v1980, 0
      %2082 = vmatprep.subr.mxu0 0.0
      %2083 = vmatpush1.msra.mxu0 0.0
      %2084 = vmatprep.subr.mxu0 0.0
      %2085 = vmatpush1.msra.mxu0 0.0
      %2086 = vmatprep.subr.mxu0 0.0
      %2087 = vmatpush1.msra.mxu0 0.0
      %2088 = vmatprep.subr.mxu0 0.0
      %2089 = vmatpush1.msra.mxu0 0.0
      %2090 = vmatprep.subr.mxu0 0.0
      %2091 = vmatpush1.msra.mxu0 0.0
      %2092 = vmatprep.subr.mxu0 0.0
      %2093 = vmatpush1.msra.mxu0 0.0
      %2094 = vmatprep.subr.mxu0 0.0
      %2095 = vmatpush1.msra.mxu0 0.0
      %2096 = vmatprep.subr.mxu0 0.0
      %2097 = vmatpush1.msra.mxu0 0.0
      %2098 = vmatprep.subr.mxu0 0.0
      %2099 = vmatpush1.msra.mxu0 0.0
      %2100 = vmatprep.subr.mxu0 0.0
      %2101 = vmatpush1.msra.mxu0 0.0
      %2102 = vmatprep.subr.mxu0 0.0
      %2103 = vmatpush1.msra.mxu0 0.0
      %2104 = vmatprep.subr.mxu0 0.0
      %2105 = vmatpush1.msra.mxu0 0.0
      %2106 = vmatprep.subr.mxu0 0.0
      %2107 = vmatpush1.msra.mxu0 0.0
      %2108 = vmatprep.subr.mxu0 0.0
      %2109 = vmatpush1.msra.mxu0 0.0
      %2110 = vmatprep.subr.mxu0 0.0
      %2111 = vmatpush1.msra.mxu0 0.0
      %2112 = vmatprep.subr.mxu0 0.0
      %2113 = vmatpush1.msra.mxu0 %v2080
      %2114 = vmatprep.subr.mxu0 0.0
      %2115 = vmatpush2.msra.mxu0 0.0
      %2116 = vmatprep.subr.mxu0 0.0
      %2117 = vmatpush2.msra.mxu0 0.0
      %2118 = vmatprep.subr.mxu0 0.0
      %2119 = vmatpush2.msra.mxu0 0.0
      %2120 = vmatprep.subr.mxu0 0.0
      %2121 = vmatpush2.msra.mxu0 0.0
      %2122 = vmatprep.subr.mxu0 0.0
      %2123 = vmatpush2.msra.mxu0 0.0
      %2124 = vmatprep.subr.mxu0 0.0
      %2125 = vmatpush2.msra.mxu0 0.0
      %2126 = vmatprep.subr.mxu0 0.0
      %2127 = vmatpush2.msra.mxu0 0.0
      %2128 = vmatprep.subr.mxu0 0.0
      %2129 = vmatpush2.msra.mxu0 0.0
      %2130 = vmatprep.subr.mxu0 0.0
      %2131 = vmatpush2.msra.mxu0 0.0
      %2132 = vmatprep.subr.mxu0 0.0
      %2133 = vmatpush2.msra.mxu0 0.0
      %2134 = vmatprep.subr.mxu0 0.0
      %2135 = vmatpush2.msra.mxu0 0.0
      %2136 = vmatprep.subr.mxu0 0.0
      %2137 = vmatpush2.msra.mxu0 0.0
      %2138 = vmatprep.subr.mxu0 0.0
      %2139 = vmatpush2.msra.mxu0 0.0
      %2140 = vmatprep.subr.mxu0 0.0
      %2141 = vmatpush2.msra.mxu0 0.0
      %2142 = vmatprep.subr.mxu0 0.0
      %2143 = vmatpush2.msra.mxu0 0.0
      %2144 = vmatprep.subr.mxu0 0.0
      %2145 = vmatpush2.msra.mxu0 0.0
      %2146 = vmatprep.mubr.f32.mxu0 0.0
      %2147 = vmatmul.mubr.f32.gmra.mxu0 %v1983
      %v2148 = vpop.f32.mrf.mxu0
      %v2149 = vadd.f32 0.0, %v2148
      %v2150 = vpop.f32.mrf.mxu0
      %2151 = vmatprep.mubr.f32.mxu0 0.0
      %2152 = vmatmul.mubr.f32.gmra.mxu0 %v1986
      %v2153 = vpop.f32.mrf.mxu0
      %v2154 = vadd.f32 0.0, %v2153
      %v2155 = vpop.f32.mrf.mxu0
      %2156 = vmatprep.mubr.f32.mxu0 0.0
      %2157 = vmatmul.mubr.f32.gmra.mxu0 %v1989
      %v2158 = vpop.f32.mrf.mxu0
      %v2159 = vadd.f32 0.0, %v2158
      %v2160 = vpop.f32.mrf.mxu0
      %2161 = vmatprep.mubr.f32.mxu0 0.0
      %2162 = vmatmul.mubr.f32.gmra.mxu0 %v1992
      %v2163 = vpop.f32.mrf.mxu0
      %v2164 = vadd.f32 0.0, %v2163
      %v2165 = vpop.f32.mrf.mxu0
      %2166 = vmatprep.mubr.f32.mxu0 0.0
      %2167 = vmatmul.mubr.f32.gmra.mxu0 %v1995
      %v2168 = vpop.f32.mrf.mxu0
      %v2169 = vadd.f32 0.0, %v2168
      %v2170 = vpop.f32.mrf.mxu0
      %2171 = vmatprep.mubr.f32.mxu0 0.0
      %2172 = vmatmul.mubr.f32.gmra.mxu0 %v1998
      %v2173 = vpop.f32.mrf.mxu0
      %v2174 = vadd.f32 0.0, %v2173
      %v2175 = vpop.f32.mrf.mxu0
      %2176 = vmatprep.mubr.f32.mxu0 0.0
      %2177 = vmatmul.mubr.f32.gmra.mxu0 %v2001
      %v2178 = vpop.f32.mrf.mxu0
      %v2179 = vadd.f32 0.0, %v2178
      %v2180 = vpop.f32.mrf.mxu0
      %2181 = vmatprep.mubr.f32.mxu0 0.0
      %2182 = vmatmul.mubr.f32.gmra.mxu0 %v2004
      %v2183 = vpop.f32.mrf.mxu0
      %v2184 = vadd.f32 0.0, %v2183
      %v2185 = vpop.f32.mrf.mxu0
      %2186 = vmatprep.mubr.f32.mxu0 0.0
      %2187 = vmatmul.mubr.f32.gmra.mxu0 %v2007
      %v2188 = vpop.f32.mrf.mxu0
      %v2189 = vadd.f32 0.0, %v2188
      %v2190 = vpop.f32.mrf.mxu0
      %2191 = vmatprep.mubr.f32.mxu0 0.0
      %2192 = vmatmul.mubr.f32.gmra.mxu0 %v2010
      %v2193 = vpop.f32.mrf.mxu0
      %v2194 = vadd.f32 0.0, %v2193
      %v2195 = vpop.f32.mrf.mxu0
      %2196 = vmatprep.mubr.f32.mxu0 0.0
      %2197 = vmatmul.mubr.f32.gmra.mxu0 %v2013
      %v2198 = vpop.f32.mrf.mxu0
      %v2199 = vadd.f32 0.0, %v2198
      %v2200 = vpop.f32.mrf.mxu0
      %2201 = vmatprep.mubr.f32.mxu0 0.0
      %2202 = vmatmul.mubr.f32.gmra.mxu0 %v2016
      %v2203 = vpop.f32.mrf.mxu0
      %v2204 = vadd.f32 0.0, %v2203
      %v2205 = vpop.f32.mrf.mxu0
      %2206 = vmatprep.mubr.f32.mxu0 0.0
      %2207 = vmatmul.mubr.f32.gmra.mxu0 %v2019
      %v2208 = vpop.f32.mrf.mxu0
      %v2209 = vadd.f32 0.0, %v2208
      %v2210 = vpop.f32.mrf.mxu0
      %2211 = vmatprep.mubr.f32.mxu0 0.0
      %2212 = vmatmul.mubr.f32.gmra.mxu0 %v2022
      %v2213 = vpop.f32.mrf.mxu0
      %v2214 = vadd.f32 0.0, %v2213
      %v2215 = vpop.f32.mrf.mxu0
      %2216 = vmatprep.mubr.f32.mxu0 0.0
      %2217 = vmatmul.mubr.f32.gmra.mxu0 %v2025
      %v2218 = vpop.f32.mrf.mxu0
      %v2219 = vadd.f32 0.0, %v2218
      %v2220 = vpop.f32.mrf.mxu0
      %2221 = vmatprep.mubr.f32.mxu0 0.0
      %2222 = vmatmul.mubr.f32.gmra.mxu0 %v2028
      %v2223 = vpop.f32.mrf.mxu0
      %v2224 = vadd.f32 0.0, %v2223
      %v2225 = vpop.f32.mrf.mxu0
      %2226 = vmatprep.mubr.f32.mxu0 0.0
      %2227 = vmatmul.mubr.f32.gmra.mxu0 %v2031
      %v2228 = vpop.f32.mrf.mxu0
      %v2229 = vadd.f32 0.0, %v2228
      %v2230 = vpop.f32.mrf.mxu0
      %2231 = vmatprep.mubr.f32.mxu0 0.0
      %2232 = vmatmul.mubr.f32.gmra.mxu0 %v2034
      %v2233 = vpop.f32.mrf.mxu0
      %v2234 = vadd.f32 0.0, %v2233
      %v2235 = vpop.f32.mrf.mxu0
      %2236 = vmatprep.mubr.f32.mxu0 0.0
      %2237 = vmatmul.mubr.f32.gmra.mxu0 %v2037
      %v2238 = vpop.f32.mrf.mxu0
      %v2239 = vadd.f32 0.0, %v2238
      %v2240 = vpop.f32.mrf.mxu0
      %2241 = vmatprep.mubr.f32.mxu0 0.0
      %2242 = vmatmul.mubr.f32.gmra.mxu0 %v2040
      %v2243 = vpop.f32.mrf.mxu0
      %v2244 = vadd.f32 0.0, %v2243
      %v2245 = vpop.f32.mrf.mxu0
      %2246 = vmatprep.mubr.f32.mxu0 0.0
      %2247 = vmatmul.mubr.f32.gmra.mxu0 %v2043
      %v2248 = vpop.f32.mrf.mxu0
      %v2249 = vadd.f32 0.0, %v2248
      %v2250 = vpop.f32.mrf.mxu0
      %2251 = vmatprep.mubr.f32.mxu0 0.0
      %2252 = vmatmul.mubr.f32.gmra.mxu0 %v2046
      %v2253 = vpop.f32.mrf.mxu0
      %v2254 = vadd.f32 0.0, %v2253
      %v2255 = vpop.f32.mrf.mxu0
      %2256 = vmatprep.mubr.f32.mxu0 0.0
      %2257 = vmatmul.mubr.f32.gmra.mxu0 %v2049
      %v2258 = vpop.f32.mrf.mxu0
      %v2259 = vadd.f32 0.0, %v2258
      %v2260 = vpop.f32.mrf.mxu0
      %2261 = vmatprep.mubr.f32.mxu0 0.0
      %2262 = vmatmul.mubr.f32.gmra.mxu0 %v2052
      %v2263 = vpop.f32.mrf.mxu0
      %v2264 = vadd.f32 0.0, %v2263
      %v2265 = vpop.f32.mrf.mxu0
      %2266 = vmatprep.mubr.f32.mxu0 0.0
      %2267 = vmatmul.mubr.f32.gmra.mxu0 %v2055
      %v2268 = vpop.f32.mrf.mxu0
      %v2269 = vadd.f32 0.0, %v2268
      %v2270 = vpop.f32.mrf.mxu0
      %2271 = vmatprep.mubr.f32.mxu0 0.0
      %2272 = vmatmul.mubr.f32.gmra.mxu0 %v2058
      %v2273 = vpop.f32.mrf.mxu0
      %v2274 = vadd.f32 0.0, %v2273
      %v2275 = vpop.f32.mrf.mxu0
      %2276 = vmatprep.mubr.f32.mxu0 0.0
      %2277 = vmatmul.mubr.f32.gmra.mxu0 %v2061
      %v2278 = vpop.f32.mrf.mxu0
      %v2279 = vadd.f32 0.0, %v2278
      %v2280 = vpop.f32.mrf.mxu0
      %2281 = vmatprep.mubr.f32.mxu0 0.0
      %2282 = vmatmul.mubr.f32.gmra.mxu0 %v2064
      %v2283 = vpop.f32.mrf.mxu0
      %v2284 = vadd.f32 0.0, %v2283
      %v2285 = vpop.f32.mrf.mxu0
      %2286 = vmatprep.mubr.f32.mxu0 0.0
      %2287 = vmatmul.mubr.f32.gmra.mxu0 %v2067
      %v2288 = vpop.f32.mrf.mxu0
      %v2289 = vadd.f32 0.0, %v2288
      %v2290 = vpop.f32.mrf.mxu0
      %2291 = vmatprep.mubr.f32.mxu0 0.0
      %2292 = vmatmul.mubr.f32.gmra.mxu0 %v2070
      %v2293 = vpop.f32.mrf.mxu0
      %v2294 = vadd.f32 0.0, %v2293
      %v2295 = vpop.f32.mrf.mxu0
      %2296 = vmatprep.mubr.f32.mxu0 0.0
      %2297 = vmatmul.mubr.f32.gmra.mxu0 %v2073
      %v2298 = vpop.f32.mrf.mxu0
      %v2299 = vadd.f32 0.0, %v2298
      %v2300 = vpop.f32.mrf.mxu0
      %2301 = vmatprep.mubr.f32.mxu0 0.0
      %2302 = vmatmul.mubr.f32.gmra.mxu0 %v2076
      %v2303 = vpop.f32.mrf.mxu0
      %v2304 = vadd.f32 0.0, %v2303
      %v2305 = vpop.f32.mrf.mxu0
      %2306 = vdwg.mxu0
      %v2307 = vld [vmem:[%s3] sm:$0x1]
      %v2309 = vlaneseq
      %v2310 = vshrl.u32 %v2309, 7
      %v2311 = vsub.s32 0, %v2310
      %v2312 = vrot.slane %v2307, %v2311
      %v2314 = vmul.f32 %v2149, %v2312
      %v2315 = vmul.f32 %v2154, %v2312
      %v2316 = vmul.f32 %v2159, %v2312
      %v2317 = vmul.f32 %v2164, %v2312
      %v2318 = vmul.f32 %v2169, %v2312
      %v2319 = vmul.f32 %v2174, %v2312
      %v2320 = vmul.f32 %v2179, %v2312
      %v2321 = vmul.f32 %v2184, %v2312
      %v2322 = vmul.f32 %v2189, %v2312
      %v2323 = vmul.f32 %v2194, %v2312
      %v2324 = vmul.f32 %v2199, %v2312
      %v2325 = vmul.f32 %v2204, %v2312
      %v2326 = vmul.f32 %v2209, %v2312
      %v2327 = vmul.f32 %v2214, %v2312
      %v2328 = vmul.f32 %v2219, %v2312
      %v2329 = vmul.f32 %v2224, %v2312
      %v2330 = vmul.f32 %v2229, %v2312
      %v2331 = vmul.f32 %v2234, %v2312
      %v2332 = vmul.f32 %v2239, %v2312
      %v2333 = vmul.f32 %v2244, %v2312
      %v2334 = vmul.f32 %v2249, %v2312
      %v2335 = vmul.f32 %v2254, %v2312
      %v2336 = vmul.f32 %v2259, %v2312
      %v2337 = vmul.f32 %v2264, %v2312
      %v2338 = vmul.f32 %v2269, %v2312
      %v2339 = vmul.f32 %v2274, %v2312
      %v2340 = vmul.f32 %v2279, %v2312
      %v2341 = vmul.f32 %v2284, %v2312
      %v2342 = vmul.f32 %v2289, %v2312
      %v2343 = vmul.f32 %v2294, %v2312
      %v2344 = vmul.f32 %v2299, %v2312
      %v2345 = vmul.f32 %v2304, %v2312
      %v2346 = vld [vmem:[%s4] sm:$0x1]
      %v2348 = vlaneseq
      %v2349 = vshrl.u32 %v2348, 7
      %v2350 = vsub.s32 0, %v2349
      %v2351 = vrot.slane %v2346, %v2350
      %v2353 = vadd.f32 %v2314, %v2351
      %v2354 = vadd.f32 %v2315, %v2351
      %v2355 = vadd.f32 %v2316, %v2351
      %v2356 = vadd.f32 %v2317, %v2351
      %v2357 = vadd.f32 %v2318, %v2351
      %v2358 = vadd.f32 %v2319, %v2351
      %v2359 = vadd.f32 %v2320, %v2351
      %v2360 = vadd.f32 %v2321, %v2351
      %v2361 = vadd.f32 %v2322, %v2351
      %v2362 = vadd.f32 %v2323, %v2351
      %v2363 = vadd.f32 %v2324, %v2351
      %v2364 = vadd.f32 %v2325, %v2351
      %v2365 = vadd.f32 %v2326, %v2351
      %v2366 = vadd.f32 %v2327, %v2351
      %v2367 = vadd.f32 %v2328, %v2351
      %v2368 = vadd.f32 %v2329, %v2351
      %v2369 = vadd.f32 %v2330, %v2351
      %v2370 = vadd.f32 %v2331, %v2351
      %v2371 = vadd.f32 %v2332, %v2351
      %v2372 = vadd.f32 %v2333, %v2351
      %v2373 = vadd.f32 %v2334, %v2351
      %v2374 = vadd.f32 %v2335, %v2351
      %v2375 = vadd.f32 %v2336, %v2351
      %v2376 = vadd.f32 %v2337, %v2351
      %v2377 = vadd.f32 %v2338, %v2351
      %v2378 = vadd.f32 %v2339, %v2351
      %v2379 = vadd.f32 %v2340, %v2351
      %v2380 = vadd.f32 %v2341, %v2351
      %v2381 = vadd.f32 %v2342, %v2351
      %v2382 = vadd.f32 %v2343, %v2351
      %v2383 = vadd.f32 %v2344, %v2351
      %v2384 = vadd.f32 %v2345, %v2351
      %vm2385 = vcmask 64512
      %2386 = vst.msk [vmem:[%s248] sm:$0xff] %vm2385, %v2353
      %2387 = vst.msk [vmem:[%s248 + $0x8] sm:$0xff] %vm2385, %v2354
      %2388 = vst.msk [vmem:[%s248 + $0x10] sm:$0xff] %vm2385, %v2355
      %2389 = vst.msk [vmem:[%s248 + $0x18] sm:$0xff] %vm2385, %v2356
      %2390 = vst.msk [vmem:[%s248 + $0x20] sm:$0xff] %vm2385, %v2357
      %2391 = vst.msk [vmem:[%s248 + $0x28] sm:$0xff] %vm2385, %v2358
      %2392 = vst.msk [vmem:[%s248 + $0x30] sm:$0xff] %vm2385, %v2359
      %2393 = vst.msk [vmem:[%s248 + $0x38] sm:$0xff] %vm2385, %v2360
      %2394 = vst.msk [vmem:[%s248 + $0x40] sm:$0xff] %vm2385, %v2361
      %2395 = vst.msk [vmem:[%s248 + $0x48] sm:$0xff] %vm2385, %v2362
      %2396 = vst.msk [vmem:[%s248 + $0x50] sm:$0xff] %vm2385, %v2363
      %2397 = vst.msk [vmem:[%s248 + $0x58] sm:$0xff] %vm2385, %v2364
      %2398 = vst.msk [vmem:[%s248 + $0x60] sm:$0xff] %vm2385, %v2365
      %2399 = vst.msk [vmem:[%s248 + $0x68] sm:$0xff] %vm2385, %v2366
      %2400 = vst.msk [vmem:[%s248 + $0x70] sm:$0xff] %vm2385, %v2367
      %2401 = vst.msk [vmem:[%s248 + $0x78] sm:$0xff] %vm2385, %v2368
      %2402 = vst.msk [vmem:[%s248 + $0x80] sm:$0xff] %vm2385, %v2369
      %2403 = vst.msk [vmem:[%s248 + $0x88] sm:$0xff] %vm2385, %v2370
      %2404 = vst.msk [vmem:[%s248 + $0x90] sm:$0xff] %vm2385, %v2371
      %2405 = vst.msk [vmem:[%s248 + $0x98] sm:$0xff] %vm2385, %v2372
      %2406 = vst.msk [vmem:[%s248 + $0xa0] sm:$0xff] %vm2385, %v2373
      %2407 = vst.msk [vmem:[%s248 + $0xa8] sm:$0xff] %vm2385, %v2374
      %2408 = vst.msk [vmem:[%s248 + $0xb0] sm:$0xff] %vm2385, %v2375
      %2409 = vst.msk [vmem:[%s248 + $0xb8] sm:$0xff] %vm2385, %v2376
      %2410 = vst.msk [vmem:[%s248 + $0xc0] sm:$0xff] %vm2385, %v2377
      %2411 = vst.msk [vmem:[%s248 + $0xc8] sm:$0xff] %vm2385, %v2378
      %2412 = vst.msk [vmem:[%s248 + $0xd0] sm:$0xff] %vm2385, %v2379
      %2413 = vst.msk [vmem:[%s248 + $0xd8] sm:$0xff] %vm2385, %v2380
      %2414 = vst.msk [vmem:[%s248 + $0xe0] sm:$0xff] %vm2385, %v2381
      %2415 = vst.msk [vmem:[%s248 + $0xe8] sm:$0xff] %vm2385, %v2382
      %2416 = vst.msk [vmem:[%s248 + $0xf0] sm:$0xff] %vm2385, %v2383
      %2417 = vst.msk [vmem:[%s248 + $0xf8] sm:$0xff] %vm2385, %v2384
      %s2418 = smul.u32 16, %s21
      %p2419 = scmp.lt.s32.totalorder %s20, 1
      %s2420 = scalar_select %p2419, %s20, 1
      %p2421 = scmp.lt.s32.totalorder %s2418, 15
      %s2422 = scalar_select %p2421, %s2418, 15
      %s2423 = smul.addr %s2422, 2
      %s2424 = smul.addr %s2420, 32
      %s2425 = sadd.s32 %s2423, %s2424
      %s2426 = smul.addr %s2425, 8
      %s2427 = scalar_lea.vmem %s5, %s2426
      // Predicated region
      $region41: #{conv_bn_forward.3} parent=39 // pred_check
        %p2428 = pneg %p158
      $region42: #{conv_bn_forward.3} parent=39 // pred_check_branch
        %2430 = sbr.rel (%p2428) target = $region44
      $region43: #{conv_bn_forward.3} parent=39 // pred_region
        %s2431 = smul.u32 16, %s21
      $region44: #{conv_bn_forward.3} parent=39 // pred_fallthru
        _
    $region40: #{conv_bn_forward.3} parent=5 // pred_fallthru
      _
    %p2432 = scmp.le.s32.totalorder 2, %s11
    // Predicated region
    $region45: #{conv_bn_forward.3} parent=5 // pred_check
      %p2433 = pneg %p2432
    $region46: #{conv_bn_forward.3} parent=5 // pred_check_branch
      %2435 = sbr.rel (%p2433) target = $region48
    $region47: #{conv_bn_forward.3} parent=5 // pred_region
      %s2436 = ssub.s32 %s11, 2
      // Predicated region
      $region49: #{conv_bn_forward.3} parent=47 // pred_check
        %p2437 = pneg %p164
      $region50: #{conv_bn_forward.3} parent=47 // pred_check_branch
        %2439 = sbr.rel (%p2437) target = $region52
      $region51: #{conv_bn_forward.3} parent=47 // pred_region
        %s2440 = smul.u32 16, %s23
        %p2441 = scmp.lt.s32.totalorder %s22, 1
        %s2442 = scalar_select %p2441, %s22, 1
        %p2443 = scmp.lt.s32.totalorder %s2440, 15
        %s2444 = scalar_select %p2443, %s2440, 15
        %s2445 = smul.addr %s2444, 2
        %s2446 = smul.addr %s2442, 32
        %s2447 = sadd.s32 %s2445, %s2446
        %s2448 = smul.addr %s2447, 8
        %s2449 = scalar_lea.vmem %s5, %s2448
      $region52: #{conv_bn_forward.3} parent=47 // pred_fallthru
        _
    $region48: #{conv_bn_forward.3} parent=5 // pred_fallthru
      _
  $region6: #{conv_bn_forward.3} parent=0 // loop_footer
    %s15 = sadd.s32 1, %s11
  $region7: #{conv_bn_forward.3} parent=0 // loop_footer_branch
    %10 = sbr.rel target = $region3
  $region8: #{conv_bn_forward.3} parent=0 // loop_exit
    _

// kernel: conv_bn_forward.2
$region0: #{conv_bn_forward.2}
  #allocation0 [shape = 'u32[]', space=smem, size = 0x4, offset = 0x4, fixed_abs, tag = 'smem constant byte address 0x4 - core index']
  #allocation1 [shape = 'u32[144,128]{1,0:T(1,128)}', space=vmem, size = 0x12000, scoped, tag = 'internal scratch']
  %s0 = inlined_call_operand.vmem [shape: f32[2,18,18,4], index: 0, kind: input, shape index: {}]
  %s1 = inlined_call_operand.vmem [shape: f32[9,1,1,4], index: 1, kind: input, shape index: {}]
  %s2 = inlined_call_operand.vmem [shape: f32[4,128], index: 2, kind: input, shape index: {}]
  %s3 = inlined_call_operand.vmem [shape: f32[2,1,2,128], index: 3, kind: output, shape index: {}]
  %s4 = sld [smem:[#allocation0]]
  $region45: #{conv_bn_forward.2} parent=0
    _
  %s6 = ssub.s32 1, %s4
  %s7 = scalar_select 0, %s6, %s4
  loop: start=0, step=1, limit=4
  $region2: #{conv_bn_forward.2} parent=0 // loop_pre_header
    _
  $region3: #{conv_bn_forward.2} parent=0 // loop_header
    %s9 = sphi 0, %s13
    %p10 = scmp.ge.s32.totalorder %s9, 4
    %s16 = sphi 0, %s28
    %s17 = sphi 0, %s24
    %s18 = sphi 0, %s16
    %s19 = sphi 0, %s17
    %s20 = sphi 0, %s18
    %s21 = sphi 0, %s19
    %s31 = sphi 0, %s33
    %s34 = sphi 0, %s31
    %s35 = sphi 0, %s34
    %s51 = sphi 0, %s35
    %s55 = sphi 0, %s55
    %s57 = sphi 0, %s55
    %s58 = sphi 0, %s57
    %s72 = sphi 0, %s58
    %s76 = sphi 0, %s76
    %s78 = sphi 0, %s76
    %s79 = sphi 0, %s78
    %s93 = sphi 0, %s79
    %s101 = sphi 0, %s103
    %s104 = sphi 0, %s101
    %s105 = sphi 0, %s104
    %s121 = sphi 0, %s105
  $region4: #{conv_bn_forward.2} parent=0 // loop_header_branch
    %12 = sbr.rel (%p10) target = $region8
  $region5: #{conv_bn_forward.2} parent=0 // loop_body
    %s14 = ssub.s32 %s9, 1
    %s15 = ssub.s32 %s9, 2
    %s22 = sadd.s32 1, %s17
    %p23 = scmp.ge.s32.totalorder %s22, 1
    %s24 = scalar_select %p23, 0, %s22
    %s25 = sadd.s32 1, %s16
    %s26 = scalar_select %p23, %s25, %s16
    %p27 = scmp.ge.s32.totalorder %s26, 2
    %s28 = scalar_select %p27, 0, %s26
    %s29 = ssub.s32 %s16, %s28
    %p30 = scmp.eq.s32.totalorder %s29, 0
    %s32 = sadd.s32 %s31, 1
    %s33 = scalar_select %p30, %s31, %s32
    %p36 = pneg %p30
    %p37 = scmp.eq.s32.totalorder %s9, 1
    %p38 = por %p36, %p37
    %p39 = scmp.ne.s32.totalorder %s31, %s34
    %p40 = scmp.eq.s32.totalorder %s9, 0
    %p41 = por %p39, %p40
    %p42 = scmp.ne.s32.totalorder %s31, %s34
    %p43 = scmp.eq.s32.totalorder %s14, 1
    %p44 = por %p42, %p43
    %p45 = scmp.ne.s32.totalorder %s34, %s35
    %p46 = scmp.eq.s32.totalorder %s14, 0
    %p47 = por %p45, %p46
    %p48 = scmp.ne.s32.totalorder %s34, %s35
    %p49 = scmp.eq.s32.totalorder %s15, 1
    %p50 = por %p48, %p49
    %p52 = scmp.ne.s32.totalorder %s35, %s51
    %p53 = scmp.eq.s32.totalorder %s15, 0
    %p54 = por %p52, %p53
    %s56 = sadd.s32 %s55, 1
    %p59 = scmp.eq.s32.totalorder %s9, 1
    %p60 = scmp.ne.s32.totalorder %s55, %s57
    %p61 = scmp.eq.s32.totalorder %s9, 0
    %p62 = por %p60, %p61
    %p63 = scmp.ne.s32.totalorder %s55, %s57
    %p64 = scmp.eq.s32.totalorder %s14, 1
    %p65 = por %p63, %p64
    %p66 = scmp.ne.s32.totalorder %s57, %s58
    %p67 = scmp.eq.s32.totalorder %s14, 0
    %p68 = por %p66, %p67
    %p69 = scmp.ne.s32.totalorder %s57, %s58
    %p70 = scmp.eq.s32.totalorder %s15, 1
    %p71 = por %p69, %p70
    %p73 = scmp.ne.s32.totalorder %s58, %s72
    %p74 = scmp.eq.s32.totalorder %s15, 0
    %p75 = por %p73, %p74
    %s77 = sadd.s32 %s76, 1
    %p80 = scmp.eq.s32.totalorder %s9, 1
    %p81 = scmp.ne.s32.totalorder %s76, %s78
    %p82 = scmp.eq.s32.totalorder %s9, 0
    %p83 = por %p81, %p82
    %p84 = scmp.ne.s32.totalorder %s76, %s78
    %p85 = scmp.eq.s32.totalorder %s14, 1
    %p86 = por %p84, %p85
    %p87 = scmp.ne.s32.totalorder %s78, %s79
    %p88 = scmp.eq.s32.totalorder %s14, 0
    %p89 = por %p87, %p88
    %p90 = scmp.ne.s32.totalorder %s78, %s79
    %p91 = scmp.eq.s32.totalorder %s15, 1
    %p92 = por %p90, %p91
    %p94 = scmp.ne.s32.totalorder %s79, %s93
    %p95 = scmp.eq.s32.totalorder %s15, 0
    %p96 = por %p94, %p95
    %s97 = ssub.s32 %s16, %s28
    %s98 = ssub.s32 %s17, %s24
    %s99 = sor.u32 %s97, %s98
    %p100 = scmp.eq.s32.totalorder %s99, 0
    %s102 = sadd.s32 %s101, 1
    %s103 = scalar_select %p100, %s101, %s102
    %p106 = pneg %p100
    %p107 = scmp.eq.s32.totalorder %s9, 1
    %p108 = por %p106, %p107
    %p109 = scmp.ne.s32.totalorder %s101, %s104
    %p110 = scmp.eq.s32.totalorder %s9, 0
    %p111 = por %p109, %p110
    %p112 = scmp.ne.s32.totalorder %s101, %s104
    %p113 = scmp.eq.s32.totalorder %s14, 1
    %p114 = por %p112, %p113
    %p115 = scmp.ne.s32.totalorder %s104, %s105
    %p116 = scmp.eq.s32.totalorder %s14, 0
    %p117 = por %p115, %p116
    %p118 = scmp.ne.s32.totalorder %s104, %s105
    %p119 = scmp.eq.s32.totalorder %s15, 1
    %p120 = por %p118, %p119
    %p122 = scmp.ne.s32.totalorder %s105, %s121
    %p123 = scmp.eq.s32.totalorder %s15, 0
    %p124 = por %p122, %p123
    %p125 = scmp.le.s32.totalorder 1, %s9
    %p126 = scmp.lt.s32.totalorder %s9, 3
    %p127 = pnand %p125, %p126
    %p128 = pneg %p127
    // Predicated region
    $region9: #{conv_bn_forward.2} parent=5 // pred_check
      _
    $region10: #{conv_bn_forward.2} parent=5 // pred_check_branch
      %130 = sbr.rel (%p127) target = $region12
    $region11: #{conv_bn_forward.2} parent=5 // pred_region
      %s131 = ssub.s32 %s9, 1
      // Predicated region
      $region13: #{conv_bn_forward.2} parent=11 // pred_check
        %p132 = pneg %p68
      $region14: #{conv_bn_forward.2} parent=11 // pred_check_branch
        %134 = sbr.rel (%p132) target = $region16
      $region15: #{conv_bn_forward.2} parent=11 // pred_region
        _
      $region16: #{conv_bn_forward.2} parent=11 // pred_fallthru
        _
      // Predicated region
      $region17: #{conv_bn_forward.2} parent=11 // pred_check
        %p135 = pneg %p89
      $region18: #{conv_bn_forward.2} parent=11 // pred_check_branch
        %137 = sbr.rel (%p135) target = $region20
      $region19: #{conv_bn_forward.2} parent=11 // pred_region
        _
      $region20: #{conv_bn_forward.2} parent=11 // pred_fallthru
        _
    $region12: #{conv_bn_forward.2} parent=5 // pred_fallthru
      _
    %p138 = scmp.lt.s32.totalorder %s9, 2
    // Predicated region
    $region21: #{conv_bn_forward.2} parent=5 // pred_check
      %p139 = pneg %p138
    $region22: #{conv_bn_forward.2} parent=5 // pred_check_branch
      %141 = sbr.rel (%p139) target = $region24
    $region23: #{conv_bn_forward.2} parent=5 // pred_region
      // Predicated region
      $region25: #{conv_bn_forward.2} parent=23 // pred_check
        %p142 = pneg %p41
      $region26: #{conv_bn_forward.2} parent=23 // pred_check_branch
        %144 = sbr.rel (%p142) target = $region28
      $region27: #{conv_bn_forward.2} parent=23 // pred_region
        %p145 = scmp.lt.s32.totalorder %s16, 1
        %s146 = scalar_select %p145, %s16, 1
        %s147 = smul.addr %s146, 54
        %s148 = smul.addr %s147, 8
        %s149 = scalar_lea.vmem %s0, %s148
      $region28: #{conv_bn_forward.2} parent=23 // pred_fallthru
        _
    $region24: #{conv_bn_forward.2} parent=5 // pred_fallthru
      _
    %p150 = scmp.le.s32.totalorder 1, %s9
    %p151 = scmp.lt.s32.totalorder %s9, 3
    %p152 = pnand %p150, %p151
    %p153 = pneg %p152
    // Predicated region
    $region29: #{conv_bn_forward.2} parent=5 // pred_check
      _
    $region30: #{conv_bn_forward.2} parent=5 // pred_check_branch
      %155 = sbr.rel (%p152) target = $region32
    $region31: #{conv_bn_forward.2} parent=5 // pred_region
      %s156 = ssub.s32 %s9, 1
      %p157 = scmp.lt.s32.totalorder %s18, 1
      %s158 = scalar_select %p157, %s18, 1
      %s159 = smul.addr %s158, 54
      %s160 = smul.addr %s159, 8
      %s161 = scalar_lea.vmem %s0, %s160
      %p162 = pneg %p47
      %p163 = pneg %p44
      %p164 = pneg %p68
      %p165 = pneg %p65
      %p166 = pneg %p89
      %p167 = pneg %p86
      %p168 = pneg %p117
      %p169 = pneg %p114
      %p170 = scmp.lt.s32.totalorder %s18, 1
      %s171 = scalar_select %p170, %s18, 1
      %p172 = scmp.lt.s32.totalorder %s19, 0
      %s173 = scalar_select %p172, %s19, 0
      %s174 = sadd.s32 %s173, %s171
      %s175 = smul.addr %s174, 2
      %s176 = scalar_lea.vmem %s3, %s175
      %p177 = scmp.lt.s32.totalorder %s18, 1
      %s178 = scalar_select %p177, %s18, 1
      %s179 = smul.addr %s178, 54
      %s180 = smul.addr %s179, 8
      %s181 = scalar_lea.vmem %s0, %s180
      %p182 = scmp.lt.s32.totalorder %s18, 1
      %s183 = scalar_select %p182, %s18, 1
      %p184 = scmp.lt.s32.totalorder %s19, 0
      %s185 = scalar_select %p184, %s19, 0
      %s186 = sadd.s32 %s185, %s183
      %s187 = smul.addr %s186, 2
      %s188 = scalar_lea.vmem %s3, %s187
      %s189 = smul.u32 %s19, 16
      %s190 = smul.u32 %s189, 24
      %s191 = scalar_lea.vmem %s181, %s190
      %v192 = vld [vmem:[%s191] sm:$0xff]
      %v193 = vld [vmem:[%s191 + $0x8] sm:$0xff]
      %v194 = vld [vmem:[%s191 + $0x10] sm:$0x3]
      %v195 = vld [vmem:[%s191 + $0x18] sm:$0xff]
      %v196 = vld [vmem:[%s191 + $0x20] sm:$0xff]
      %v197 = vld [vmem:[%s191 + $0x28] sm:$0x3]
      %v198 = vld [vmem:[%s191 + $0x30] sm:$0xff]
      %v199 = vld [vmem:[%s191 + $0x38] sm:$0xff]
      %v200 = vld [vmem:[%s191 + $0x40] sm:$0x3]
      %v201 = vld [vmem:[%s191 + $0x48] sm:$0xff]
      %v202 = vld [vmem:[%s191 + $0x50] sm:$0xff]
      %v203 = vld [vmem:[%s191 + $0x58] sm:$0x3]
      %v204 = vld [vmem:[%s191 + $0x60] sm:$0xff]
      %v205 = vld [vmem:[%s191 + $0x68] sm:$0xff]
      %v206 = vld [vmem:[%s191 + $0x70] sm:$0x3]
      %v207 = vld [vmem:[%s191 + $0x78] sm:$0xff]
      %v208 = vld [vmem:[%s191 + $0x80] sm:$0xff]
      %v209 = vld [vmem:[%s191 + $0x88] sm:$0x3]
      %v210 = vld [vmem:[%s191 + $0x90] sm:$0xff]
      %v211 = vld [vmem:[%s191 + $0x98] sm:$0xff]
      %v212 = vld [vmem:[%s191 + $0xa0] sm:$0x3]
      %v213 = vld [vmem:[%s191 + $0xa8] sm:$0xff]
      %v214 = vld [vmem:[%s191 + $0xb0] sm:$0xff]
      %v215 = vld [vmem:[%s191 + $0xb8] sm:$0x3]
      %v216 = vld [vmem:[%s191 + $0xc0] sm:$0xff]
      %v217 = vld [vmem:[%s191 + $0xc8] sm:$0xff]
      %v218 = vld [vmem:[%s191 + $0xd0] sm:$0x3]
      %v219 = vld [vmem:[%s191 + $0xd8] sm:$0xff]
      %v220 = vld [vmem:[%s191 + $0xe0] sm:$0xff]
      %v221 = vld [vmem:[%s191 + $0xe8] sm:$0x3]
      %v222 = vld [vmem:[%s191 + $0xf0] sm:$0xff]
      %v223 = vld [vmem:[%s191 + $0xf8] sm:$0xff]
      %v224 = vld [vmem:[%s191 + $0x100] sm:$0x3]
      %v225 = vld [vmem:[%s191 + $0x108] sm:$0xff]
      %v226 = vld [vmem:[%s191 + $0x110] sm:$0xff]
      %v227 = vld [vmem:[%s191 + $0x118] sm:$0x3]
      %v228 = vld [vmem:[%s191 + $0x120] sm:$0xff]
      %v229 = vld [vmem:[%s191 + $0x128] sm:$0xff]
      %v230 = vld [vmem:[%s191 + $0x130] sm:$0x3]
      %v231 = vld [vmem:[%s191 + $0x138] sm:$0xff]
      %v232 = vld [vmem:[%s191 + $0x140] sm:$0xff]
      %v233 = vld [vmem:[%s191 + $0x148] sm:$0x3]
      %v234 = vld [vmem:[%s191 + $0x150] sm:$0xff]
      %v235 = vld [vmem:[%s191 + $0x158] sm:$0xff]
      %v236 = vld [vmem:[%s191 + $0x160] sm:$0x3]
      %v237 = vld [vmem:[%s191 + $0x168] sm:$0xff]
      %v238 = vld [vmem:[%s191 + $0x170] sm:$0xff]
      %v239 = vld [vmem:[%s191 + $0x178] sm:$0x3]
      %v240 = vld [vmem:[%s191 + $0x180] sm:$0xff]
      %v241 = vld [vmem:[%s191 + $0x188] sm:$0xff]
      %v242 = vld [vmem:[%s191 + $0x190] sm:$0x3]
      %v243 = vld [vmem:[%s191 + $0x198] sm:$0xff]
      %v244 = vld [vmem:[%s191 + $0x1a0] sm:$0xff]
      %v245 = vld [vmem:[%s191 + $0x1a8] sm:$0x3]
      %v246 = vld [vmem:[%s1] sm:$0x1]
      %v248 = vlaneseq
      %v249 = vshrl.u32 %v248, 7
      %v250 = vsub.s32 0, %v249
      %v251 = vrot.slane %v246, %v250
      %v253 = vmul.f32 %v192, %v251
      %v254 = vmul.f32 %v193, %v251
      %v255 = vmul.f32 %v195, %v251
      %v256 = vmul.f32 %v196, %v251
      %v257 = vmul.f32 %v198, %v251
      %v258 = vmul.f32 %v199, %v251
      %v259 = vmul.f32 %v201, %v251
      %v260 = vmul.f32 %v202, %v251
      %v261 = vmul.f32 %v204, %v251
      %v262 = vmul.f32 %v205, %v251
      %v263 = vmul.f32 %v207, %v251
      %v264 = vmul.f32 %v208, %v251
      %v265 = vmul.f32 %v210, %v251
      %v266 = vmul.f32 %v211, %v251
      %v267 = vmul.f32 %v213, %v251
      %v268 = vmul.f32 %v214, %v251
      %v269 = vmul.f32 %v216, %v251
      %v270 = vmul.f32 %v217, %v251
      %v271 = vmul.f32 %v219, %v251
      %v272 = vmul.f32 %v220, %v251
      %v273 = vmul.f32 %v222, %v251
      %v274 = vmul.f32 %v223, %v251
      %v275 = vmul.f32 %v225, %v251
      %v276 = vmul.f32 %v226, %v251
      %v277 = vmul.f32 %v228, %v251
      %v278 = vmul.f32 %v229, %v251
      %v279 = vmul.f32 %v231, %v251
      %v280 = vmul.f32 %v232, %v251
      %v281 = vmul.f32 %v234, %v251
      %v282 = vmul.f32 %v235, %v251
      %v283 = vmul.f32 %v237, %v251
      %v284 = vmul.f32 %v238, %v251
      %s285 = scalar_lea.vmem %s1, 1
      %v286 = vld [vmem:[%s285] sm:$0x1]
      %v288 = vlaneseq
      %v289 = vshrl.u32 %v288, 7
      %v290 = vsub.s32 0, %v289
      %v291 = vrot.slane %v286, %v290
      %v293 = vmul.f32 %v192, %v291
      %v294 = vmul.f32 %v193, %v291
      %v295 = vmul.f32 %v194, %v291
      %v296 = vmul.f32 %v195, %v291
      %v297 = vmul.f32 %v196, %v291
      %v298 = vmul.f32 %v197, %v291
      %v299 = vmul.f32 %v198, %v291
      %v300 = vmul.f32 %v199, %v291
      %v301 = vmul.f32 %v200, %v291
      %v302 = vmul.f32 %v201, %v291
      %v303 = vmul.f32 %v202, %v291
      %v304 = vmul.f32 %v203, %v291
      %v305 = vmul.f32 %v204, %v291
      %v306 = vmul.f32 %v205, %v291
      %v307 = vmul.f32 %v206, %v291
      %v308 = vmul.f32 %v207, %v291
      %v309 = vmul.f32 %v208, %v291
      %v310 = vmul.f32 %v209, %v291
      %v311 = vmul.f32 %v210, %v291
      %v312 = vmul.f32 %v211, %v291
      %v313 = vmul.f32 %v212, %v291
      %v314 = vmul.f32 %v213, %v291
      %v315 = vmul.f32 %v214, %v291
      %v316 = vmul.f32 %v215, %v291
      %v317 = vmul.f32 %v216, %v291
      %v318 = vmul.f32 %v217, %v291
      %v319 = vmul.f32 %v218, %v291
      %v320 = vmul.f32 %v219, %v291
      %v321 = vmul.f32 %v220, %v291
      %v322 = vmul.f32 %v221, %v291
      %v323 = vmul.f32 %v222, %v291
      %v324 = vmul.f32 %v223, %v291
      %v325 = vmul.f32 %v224, %v291
      %v326 = vmul.f32 %v225, %v291
      %v327 = vmul.f32 %v226, %v291
      %v328 = vmul.f32 %v227, %v291
      %v329 = vmul.f32 %v228, %v291
      %v330 = vmul.f32 %v229, %v291
      %v331 = vmul.f32 %v230, %v291
      %v332 = vmul.f32 %v231, %v291
      %v333 = vmul.f32 %v232, %v291
      %v334 = vmul.f32 %v233, %v291
      %v335 = vmul.f32 %v234, %v291
      %v336 = vmul.f32 %v235, %v291
      %v337 = vmul.f32 %v236, %v291
      %v338 = vmul.f32 %v237, %v291
      %v339 = vmul.f32 %v238, %v291
      %v340 = vmul.f32 %v239, %v291
      %vm389 = vcmask 1046528
      %v390 = vrot.slane %v293, 1
      %v391 = vrot.slane %v294, 1
      %v392 = vsel %vm389, %v390, %v391
      %v393 = vrot.slane %v295, 1
      %v394 = vsel %vm389, %v391, %v393
      %v395 = vrot.slane %v296, 1
      %v396 = vrot.slane %v297, 1
      %v397 = vsel %vm389, %v395, %v396
      %v398 = vrot.slane %v298, 1
      %v399 = vsel %vm389, %v396, %v398
      %v400 = vrot.slane %v299, 1
      %v401 = vrot.slane %v300, 1
      %v402 = vsel %vm389, %v400, %v401
      %v403 = vrot.slane %v301, 1
      %v404 = vsel %vm389, %v401, %v403
      %v405 = vrot.slane %v302, 1
      %v406 = vrot.slane %v303, 1
      %v407 = vsel %vm389, %v405, %v406
      %v408 = vrot.slane %v304, 1
      %v409 = vsel %vm389, %v406, %v408
      %v410 = vrot.slane %v305, 1
      %v411 = vrot.slane %v306, 1
      %v412 = vsel %vm389, %v410, %v411
      %v413 = vrot.slane %v307, 1
      %v414 = vsel %vm389, %v411, %v413
      %v415 = vrot.slane %v308, 1
      %v416 = vrot.slane %v309, 1
      %v417 = vsel %vm389, %v415, %v416
      %v418 = vrot.slane %v310, 1
      %v419 = vsel %vm389, %v416, %v418
      %v420 = vrot.slane %v311, 1
      %v421 = vrot.slane %v312, 1
      %v422 = vsel %vm389, %v420, %v421
      %v423 = vrot.slane %v313, 1
      %v424 = vsel %vm389, %v421, %v423
      %v425 = vrot.slane %v314, 1
      %v426 = vrot.slane %v315, 1
      %v427 = vsel %vm389, %v425, %v426
      %v428 = vrot.slane %v316, 1
      %v429 = vsel %vm389, %v426, %v428
      %v430 = vrot.slane %v317, 1
      %v431 = vrot.slane %v318, 1
      %v432 = vsel %vm389, %v430, %v431
      %v433 = vrot.slane %v319, 1
      %v434 = vsel %vm389, %v431, %v433
      %v435 = vrot.slane %v320, 1
      %v436 = vrot.slane %v321, 1
      %v437 = vsel %vm389, %v435, %v436
      %v438 = vrot.slane %v322, 1
      %v439 = vsel %vm389, %v436, %v438
      %v440 = vrot.slane %v323, 1
      %v441 = vrot.slane %v324, 1
      %v442 = vsel %vm389, %v440, %v441
      %v443 = vrot.slane %v325, 1
      %v444 = vsel %vm389, %v441, %v443
      %v445 = vrot.slane %v326, 1
      %v446 = vrot.slane %v327, 1
      %v447 = vsel %vm389, %v445, %v446
      %v448 = vrot.slane %v328, 1
      %v449 = vsel %vm389, %v446, %v448
      %v450 = vrot.slane %v329, 1
      %v451 = vrot.slane %v330, 1
      %v452 = vsel %vm389, %v450, %v451
      %v453 = vrot.slane %v331, 1
      %v454 = vsel %vm389, %v451, %v453
      %v455 = vrot.slane %v332, 1
      %v456 = vrot.slane %v333, 1
      %v457 = vsel %vm389, %v455, %v456
      %v458 = vrot.slane %v334, 1
      %v459 = vsel %vm389, %v456, %v458
      %v460 = vrot.slane %v335, 1
      %v461 = vrot.slane %v336, 1
      %v462 = vsel %vm389, %v460, %v461
      %v463 = vrot.slane %v337, 1
      %v464 = vsel %vm389, %v461, %v463
      %v465 = vrot.slane %v338, 1
      %v466 = vrot.slane %v339, 1
      %v467 = vsel %vm389, %v465, %v466
      %v468 = vrot.slane %v340, 1
      %v469 = vsel %vm389, %v466, %v468
      %v502 = vadd.f32 %v253, %v392
      %v503 = vadd.f32 %v254, %v394
      %v504 = vadd.f32 %v255, %v397
      %v505 = vadd.f32 %v256, %v399
      %v506 = vadd.f32 %v257, %v402
      %v507 = vadd.f32 %v258, %v404
      %v508 = vadd.f32 %v259, %v407
      %v509 = vadd.f32 %v260, %v409
      %v510 = vadd.f32 %v261, %v412
      %v511 = vadd.f32 %v262, %v414
      %v512 = vadd.f32 %v263, %v417
      %v513 = vadd.f32 %v264, %v419
      %v514 = vadd.f32 %v265, %v422
      %v515 = vadd.f32 %v266, %v424
      %v516 = vadd.f32 %v267, %v427
      %v517 = vadd.f32 %v268, %v429
      %v518 = vadd.f32 %v269, %v432
      %v519 = vadd.f32 %v270, %v434
      %v520 = vadd.f32 %v271, %v437
      %v521 = vadd.f32 %v272, %v439
      %v522 = vadd.f32 %v273, %v442
      %v523 = vadd.f32 %v274, %v444
      %v524 = vadd.f32 %v275, %v447
      %v525 = vadd.f32 %v276, %v449
      %v526 = vadd.f32 %v277, %v452
      %v527 = vadd.f32 %v278, %v454
      %v528 = vadd.f32 %v279, %v457
      %v529 = vadd.f32 %v280, %v459
      %v530 = vadd.f32 %v281, %v462
      %v531 = vadd.f32 %v282, %v464
      %v532 = vadd.f32 %v283, %v467
      %v533 = vadd.f32 %v284, %v469
      %s534 = scalar_lea.vmem %s1, 2
      %v535 = vld [vmem:[%s534] sm:$0x1]
      %v537 = vlaneseq
      %v538 = vshrl.u32 %v537, 7
      %v539 = vsub.s32 0, %v538
      %v540 = vrot.slane %v535, %v539
      %v542 = vmul.f32 %v192, %v540
      %v543 = vmul.f32 %v193, %v540
      %v544 = vmul.f32 %v194, %v540
      %v545 = vmul.f32 %v195, %v540
      %v546 = vmul.f32 %v196, %v540
      %v547 = vmul.f32 %v197, %v540
      %v548 = vmul.f32 %v198, %v540
      %v549 = vmul.f32 %v199, %v540
      %v550 = vmul.f32 %v200, %v540
      %v551 = vmul.f32 %v201, %v540
      %v552 = vmul.f32 %v202, %v540
      %v553 = vmul.f32 %v203, %v540
      %v554 = vmul.f32 %v204, %v540
      %v555 = vmul.f32 %v205, %v540
      %v556 = vmul.f32 %v206, %v540
      %v557 = vmul.f32 %v207, %v540
      %v558 = vmul.f32 %v208, %v540
      %v559 = vmul.f32 %v209, %v540
      %v560 = vmul.f32 %v210, %v540
      %v561 = vmul.f32 %v211, %v540
      %v562 = vmul.f32 %v212, %v540
      %v563 = vmul.f32 %v213, %v540
      %v564 = vmul.f32 %v214, %v540
      %v565 = vmul.f32 %v215, %v540
      %v566 = vmul.f32 %v216, %v540
      %v567 = vmul.f32 %v217, %v540
      %v568 = vmul.f32 %v218, %v540
      %v569 = vmul.f32 %v219, %v540
      %v570 = vmul.f32 %v220, %v540
      %v571 = vmul.f32 %v221, %v540
      %v572 = vmul.f32 %v222, %v540
      %v573 = vmul.f32 %v223, %v540
      %v574 = vmul.f32 %v224, %v540
      %v575 = vmul.f32 %v225, %v540
      %v576 = vmul.f32 %v226, %v540
      %v577 = vmul.f32 %v227, %v540
      %v578 = vmul.f32 %v228, %v540
      %v579 = vmul.f32 %v229, %v540
      %v580 = vmul.f32 %v230, %v540
      %v581 = vmul.f32 %v231, %v540
      %v582 = vmul.f32 %v232, %v540
      %v583 = vmul.f32 %v233, %v540
      %v584 = vmul.f32 %v234, %v540
      %v585 = vmul.f32 %v235, %v540
      %v586 = vmul.f32 %v236, %v540
      %v587 = vmul.f32 %v237, %v540
      %v588 = vmul.f32 %v238, %v540
      %v589 = vmul.f32 %v239, %v540
      %vm638 = vcmask 1045504
      %v639 = vrot.slane %v542, 2
      %v640 = vrot.slane %v543, 2
      %v641 = vsel %vm638, %v639, %v640
      %v642 = vrot.slane %v544, 2
      %v643 = vsel %vm638, %v640, %v642
      %v644 = vrot.slane %v545, 2
      %v645 = vrot.slane %v546, 2
      %v646 = vsel %vm638, %v644, %v645
      %v647 = vrot.slane %v547, 2
      %v648 = vsel %vm638, %v645, %v647
      %v649 = vrot.slane %v548, 2
      %v650 = vrot.slane %v549, 2
      %v651 = vsel %vm638, %v649, %v650
      %v652 = vrot.slane %v550, 2
      %v653 = vsel %vm638, %v650, %v652
      %v654 = vrot.slane %v551, 2
      %v655 = vrot.slane %v552, 2
      %v656 = vsel %vm638, %v654, %v655
      %v657 = vrot.slane %v553, 2
      %v658 = vsel %vm638, %v655, %v657
      %v659 = vrot.slane %v554, 2
      %v660 = vrot.slane %v555, 2
      %v661 = vsel %vm638, %v659, %v660
      %v662 = vrot.slane %v556, 2
      %v663 = vsel %vm638, %v660, %v662
      %v664 = vrot.slane %v557, 2
      %v665 = vrot.slane %v558, 2
      %v666 = vsel %vm638, %v664, %v665
      %v667 = vrot.slane %v559, 2
      %v668 = vsel %vm638, %v665, %v667
      %v669 = vrot.slane %v560, 2
      %v670 = vrot.slane %v561, 2
      %v671 = vsel %vm638, %v669, %v670
      %v672 = vrot.slane %v562, 2
      %v673 = vsel %vm638, %v670, %v672
      %v674 = vrot.slane %v563, 2
      %v675 = vrot.slane %v564, 2
      %v676 = vsel %vm638, %v674, %v675
      %v677 = vrot.slane %v565, 2
      %v678 = vsel %vm638, %v675, %v677
      %v679 = vrot.slane %v566, 2
      %v680 = vrot.slane %v567, 2
      %v681 = vsel %vm638, %v679, %v680
      %v682 = vrot.slane %v568, 2
      %v683 = vsel %vm638, %v680, %v682
      %v684 = vrot.slane %v569, 2
      %v685 = vrot.slane %v570, 2
      %v686 = vsel %vm638, %v684, %v685
      %v687 = vrot.slane %v571, 2
      %v688 = vsel %vm638, %v685, %v687
      %v689 = vrot.slane %v572, 2
      %v690 = vrot.slane %v573, 2
      %v691 = vsel %vm638, %v689, %v690
      %v692 = vrot.slane %v574, 2
      %v693 = vsel %vm638, %v690, %v692
      %v694 = vrot.slane %v575, 2
      %v695 = vrot.slane %v576, 2
      %v696 = vsel %vm638, %v694, %v695
      %v697 = vrot.slane %v577, 2
      %v698 = vsel %vm638, %v695, %v697
      %v699 = vrot.slane %v578, 2
      %v700 = vrot.slane %v579, 2
      %v701 = vsel %vm638, %v699, %v700
      %v702 = vrot.slane %v580, 2
      %v703 = vsel %vm638, %v700, %v702
      %v704 = vrot.slane %v581, 2
      %v705 = vrot.slane %v582, 2
      %v706 = vsel %vm638, %v704, %v705
      %v707 = vrot.slane %v583, 2
      %v708 = vsel %vm638, %v705, %v707
      %v709 = vrot.slane %v584, 2
      %v710 = vrot.slane %v585, 2
      %v711 = vsel %vm638, %v709, %v710
      %v712 = vrot.slane %v586, 2
      %v713 = vsel %vm638, %v710, %v712
      %v714 = vrot.slane %v587, 2
      %v715 = vrot.slane %v588, 2
      %v716 = vsel %vm638, %v714, %v715
      %v717 = vrot.slane %v589, 2
      %v718 = vsel %vm638, %v715, %v717
      %v751 = vadd.f32 %v502, %v641
      %v752 = vadd.f32 %v503, %v643
      %v753 = vadd.f32 %v504, %v646
      %v754 = vadd.f32 %v505, %v648
      %v755 = vadd.f32 %v506, %v651
      %v756 = vadd.f32 %v507, %v653
      %v757 = vadd.f32 %v508, %v656
      %v758 = vadd.f32 %v509, %v658
      %v759 = vadd.f32 %v510, %v661
      %v760 = vadd.f32 %v511, %v663
      %v761 = vadd.f32 %v512, %v666
      %v762 = vadd.f32 %v513, %v668
      %v763 = vadd.f32 %v514, %v671
      %v764 = vadd.f32 %v515, %v673
      %v765 = vadd.f32 %v516, %v676
      %v766 = vadd.f32 %v517, %v678
      %v767 = vadd.f32 %v518, %v681
      %v768 = vadd.f32 %v519, %v683
      %v769 = vadd.f32 %v520, %v686
      %v770 = vadd.f32 %v521, %v688
      %v771 = vadd.f32 %v522, %v691
      %v772 = vadd.f32 %v523, %v693
      %v773 = vadd.f32 %v524, %v696
      %v774 = vadd.f32 %v525, %v698
      %v775 = vadd.f32 %v526, %v701
      %v776 = vadd.f32 %v527, %v703
      %v777 = vadd.f32 %v528, %v706
      %v778 = vadd.f32 %v529, %v708
      %v779 = vadd.f32 %v530, %v711
      %v780 = vadd.f32 %v531, %v713
      %v781 = vadd.f32 %v532, %v716
      %v782 = vadd.f32 %v533, %v718
      %s783 = scalar_lea.vmem %s1, 3
      %v784 = vld [vmem:[%s783] sm:$0x1]
      %v786 = vlaneseq
      %v787 = vshrl.u32 %v786, 7
      %v788 = vsub.s32 0, %v787
      %v789 = vrot.slane %v784, %v788
      %v791 = vmul.f32 %v195, %v789
      %v792 = vmul.f32 %v196, %v789
      %v793 = vmul.f32 %v198, %v789
      %v794 = vmul.f32 %v199, %v789
      %v795 = vmul.f32 %v201, %v789
      %v796 = vmul.f32 %v202, %v789
      %v797 = vmul.f32 %v204, %v789
      %v798 = vmul.f32 %v205, %v789
      %v799 = vmul.f32 %v207, %v789
      %v800 = vmul.f32 %v208, %v789
      %v801 = vmul.f32 %v210, %v789
      %v802 = vmul.f32 %v211, %v789
      %v803 = vmul.f32 %v213, %v789
      %v804 = vmul.f32 %v214, %v789
      %v805 = vmul.f32 %v216, %v789
      %v806 = vmul.f32 %v217, %v789
      %v807 = vmul.f32 %v219, %v789
      %v808 = vmul.f32 %v220, %v789
      %v809 = vmul.f32 %v222, %v789
      %v810 = vmul.f32 %v223, %v789
      %v811 = vmul.f32 %v225, %v789
      %v812 = vmul.f32 %v226, %v789
      %v813 = vmul.f32 %v228, %v789
      %v814 = vmul.f32 %v229, %v789
      %v815 = vmul.f32 %v231, %v789
      %v816 = vmul.f32 %v232, %v789
      %v817 = vmul.f32 %v234, %v789
      %v818 = vmul.f32 %v235, %v789
      %v819 = vmul.f32 %v237, %v789
      %v820 = vmul.f32 %v238, %v789
      %v821 = vmul.f32 %v240, %v789
      %v822 = vmul.f32 %v241, %v789
      %v823 = vadd.f32 %v751, %v791
      %v824 = vadd.f32 %v752, %v792
      %v825 = vadd.f32 %v753, %v793
      %v826 = vadd.f32 %v754, %v794
      %v827 = vadd.f32 %v755, %v795
      %v828 = vadd.f32 %v756, %v796
      %v829 = vadd.f32 %v757, %v797
      %v830 = vadd.f32 %v758, %v798
      %v831 = vadd.f32 %v759, %v799
      %v832 = vadd.f32 %v760, %v800
      %v833 = vadd.f32 %v761, %v801
      %v834 = vadd.f32 %v762, %v802
      %v835 = vadd.f32 %v763, %v803
      %v836 = vadd.f32 %v764, %v804
      %v837 = vadd.f32 %v765, %v805
      %v838 = vadd.f32 %v766, %v806
      %v839 = vadd.f32 %v767, %v807
      %v840 = vadd.f32 %v768, %v808
      %v841 = vadd.f32 %v769, %v809
      %v842 = vadd.f32 %v770, %v810
      %v843 = vadd.f32 %v771, %v811
      %v844 = vadd.f32 %v772, %v812
      %v845 = vadd.f32 %v773, %v813
      %v846 = vadd.f32 %v774, %v814
      %v847 = vadd.f32 %v775, %v815
      %v848 = vadd.f32 %v776, %v816
      %v849 = vadd.f32 %v777, %v817
      %v850 = vadd.f32 %v778, %v818
      %v851 = vadd.f32 %v779, %v819
      %v852 = vadd.f32 %v780, %v820
      %v853 = vadd.f32 %v781, %v821
      %v854 = vadd.f32 %v782, %v822
      %s855 = scalar_lea.vmem %s1, 4
      %v856 = vld [vmem:[%s855] sm:$0x1]
      %v858 = vlaneseq
      %v859 = vshrl.u32 %v858, 7
      %v860 = vsub.s32 0, %v859
      %v861 = vrot.slane %v856, %v860
      %v863 = vmul.f32 %v195, %v861
      %v864 = vmul.f32 %v196, %v861
      %v865 = vmul.f32 %v197, %v861
      %v866 = vmul.f32 %v198, %v861
      %v867 = vmul.f32 %v199, %v861
      %v868 = vmul.f32 %v200, %v861
      %v869 = vmul.f32 %v201, %v861
      %v870 = vmul.f32 %v202, %v861
      %v871 = vmul.f32 %v203, %v861
      %v872 = vmul.f32 %v204, %v861
      %v873 = vmul.f32 %v205, %v861
      %v874 = vmul.f32 %v206, %v861
      %v875 = vmul.f32 %v207, %v861
      %v876 = vmul.f32 %v208, %v861
      %v877 = vmul.f32 %v209, %v861
      %v878 = vmul.f32 %v210, %v861
      %v879 = vmul.f32 %v211, %v861
      %v880 = vmul.f32 %v212, %v861
      %v881 = vmul.f32 %v213, %v861
      %v882 = vmul.f32 %v214, %v861
      %v883 = vmul.f32 %v215, %v861
      %v884 = vmul.f32 %v216, %v861
      %v885 = vmul.f32 %v217, %v861
      %v886 = vmul.f32 %v218, %v861
      %v887 = vmul.f32 %v219, %v861
      %v888 = vmul.f32 %v220, %v861
      %v889 = vmul.f32 %v221, %v861
      %v890 = vmul.f32 %v222, %v861
      %v891 = vmul.f32 %v223, %v861
      %v892 = vmul.f32 %v224, %v861
      %v893 = vmul.f32 %v225, %v861
      %v894 = vmul.f32 %v226, %v861
      %v895 = vmul.f32 %v227, %v861
      %v896 = vmul.f32 %v228, %v861
      %v897 = vmul.f32 %v229, %v861
      %v898 = vmul.f32 %v230, %v861
      %v899 = vmul.f32 %v231, %v861
      %v900 = vmul.f32 %v232, %v861
      %v901 = vmul.f32 %v233, %v861
      %v902 = vmul.f32 %v234, %v861
      %v903 = vmul.f32 %v235, %v861
      %v904 = vmul.f32 %v236, %v861
      %v905 = vmul.f32 %v237, %v861
      %v906 = vmul.f32 %v238, %v861
      %v907 = vmul.f32 %v239, %v861
      %v908 = vmul.f32 %v240, %v861
      %v909 = vmul.f32 %v241, %v861
      %v910 = vmul.f32 %v242, %v861
      %v959 = vrot.slane %v863, 1
      %v960 = vrot.slane %v864, 1
      %v961 = vsel %vm389, %v959, %v960
      %v962 = vrot.slane %v865, 1
      %v963 = vsel %vm389, %v960, %v962
      %v964 = vrot.slane %v866, 1
      %v965 = vrot.slane %v867, 1
      %v966 = vsel %vm389, %v964, %v965
      %v967 = vrot.slane %v868, 1
      %v968 = vsel %vm389, %v965, %v967
      %v969 = vrot.slane %v869, 1
      %v970 = vrot.slane %v870, 1
      %v971 = vsel %vm389, %v969, %v970
      %v972 = vrot.slane %v871, 1
      %v973 = vsel %vm389, %v970, %v972
      %v974 = vrot.slane %v872, 1
      %v975 = vrot.slane %v873, 1
      %v976 = vsel %vm389, %v974, %v975
      %v977 = vrot.slane %v874, 1
      %v978 = vsel %vm389, %v975, %v977
      %v979 = vrot.slane %v875, 1
      %v980 = vrot.slane %v876, 1
      %v981 = vsel %vm389, %v979, %v980
      %v982 = vrot.slane %v877, 1
      %v983 = vsel %vm389, %v980, %v982
      %v984 = vrot.slane %v878, 1
      %v985 = vrot.slane %v879, 1
      %v986 = vsel %vm389, %v984, %v985
      %v987 = vrot.slane %v880, 1
      %v988 = vsel %vm389, %v985, %v987
      %v989 = vrot.slane %v881, 1
      %v990 = vrot.slane %v882, 1
      %v991 = vsel %vm389, %v989, %v990
      %v992 = vrot.slane %v883, 1
      %v993 = vsel %vm389, %v990, %v992
      %v994 = vrot.slane %v884, 1
      %v995 = vrot.slane %v885, 1
      %v996 = vsel %vm389, %v994, %v995
      %v997 = vrot.slane %v886, 1
      %v998 = vsel %vm389, %v995, %v997
      %v999 = vrot.slane %v887, 1
      %v1000 = vrot.slane %v888, 1
      %v1001 = vsel %vm389, %v999, %v1000
      %v1002 = vrot.slane %v889, 1
      %v1003 = vsel %vm389, %v1000, %v1002
      %v1004 = vrot.slane %v890, 1
      %v1005 = vrot.slane %v891, 1
      %v1006 = vsel %vm389, %v1004, %v1005
      %v1007 = vrot.slane %v892, 1
      %v1008 = vsel %vm389, %v1005, %v1007
      %v1009 = vrot.slane %v893, 1
      %v1010 = vrot.slane %v894, 1
      %v1011 = vsel %vm389, %v1009, %v1010
      %v1012 = vrot.slane %v895, 1
      %v1013 = vsel %vm389, %v1010, %v1012
      %v1014 = vrot.slane %v896, 1
      %v1015 = vrot.slane %v897, 1
      %v1016 = vsel %vm389, %v1014, %v1015
      %v1017 = vrot.slane %v898, 1
      %v1018 = vsel %vm389, %v1015, %v1017
      %v1019 = vrot.slane %v899, 1
      %v1020 = vrot.slane %v900, 1
      %v1021 = vsel %vm389, %v1019, %v1020
      %v1022 = vrot.slane %v901, 1
      %v1023 = vsel %vm389, %v1020, %v1022
      %v1024 = vrot.slane %v902, 1
      %v1025 = vrot.slane %v903, 1
      %v1026 = vsel %vm389, %v1024, %v1025
      %v1027 = vrot.slane %v904, 1
      %v1028 = vsel %vm389, %v1025, %v1027
      %v1029 = vrot.slane %v905, 1
      %v1030 = vrot.slane %v906, 1
      %v1031 = vsel %vm389, %v1029, %v1030
      %v1032 = vrot.slane %v907, 1
      %v1033 = vsel %vm389, %v1030, %v1032
      %v1034 = vrot.slane %v908, 1
      %v1035 = vrot.slane %v909, 1
      %v1036 = vsel %vm389, %v1034, %v1035
      %v1037 = vrot.slane %v910, 1
      %v1038 = vsel %vm389, %v1035, %v1037
      %v1071 = vadd.f32 %v823, %v961
      %v1072 = vadd.f32 %v824, %v963
      %v1073 = vadd.f32 %v825, %v966
      %v1074 = vadd.f32 %v826, %v968
      %v1075 = vadd.f32 %v827, %v971
      %v1076 = vadd.f32 %v828, %v973
      %v1077 = vadd.f32 %v829, %v976
      %v1078 = vadd.f32 %v830, %v978
      %v1079 = vadd.f32 %v831, %v981
      %v1080 = vadd.f32 %v832, %v983
      %v1081 = vadd.f32 %v833, %v986
      %v1082 = vadd.f32 %v834, %v988
      %v1083 = vadd.f32 %v835, %v991
      %v1084 = vadd.f32 %v836, %v993
      %v1085 = vadd.f32 %v837, %v996
      %v1086 = vadd.f32 %v838, %v998
      %v1087 = vadd.f32 %v839, %v1001
      %v1088 = vadd.f32 %v840, %v1003
      %v1089 = vadd.f32 %v841, %v1006
      %v1090 = vadd.f32 %v842, %v1008
      %v1091 = vadd.f32 %v843, %v1011
      %v1092 = vadd.f32 %v844, %v1013
      %v1093 = vadd.f32 %v845, %v1016
      %v1094 = vadd.f32 %v846, %v1018
      %v1095 = vadd.f32 %v847, %v1021
      %v1096 = vadd.f32 %v848, %v1023
      %v1097 = vadd.f32 %v849, %v1026
      %v1098 = vadd.f32 %v850, %v1028
      %v1099 = vadd.f32 %v851, %v1031
      %v1100 = vadd.f32 %v852, %v1033
      %v1101 = vadd.f32 %v853, %v1036
      %v1102 = vadd.f32 %v854, %v1038
      %s1103 = scalar_lea.vmem %s1, 5
      %v1104 = vld [vmem:[%s1103] sm:$0x1]
      %v1106 = vlaneseq
      %v1107 = vshrl.u32 %v1106, 7
      %v1108 = vsub.s32 0, %v1107
      %v1109 = vrot.slane %v1104, %v1108
      %v1111 = vmul.f32 %v195, %v1109
      %v1112 = vmul.f32 %v196, %v1109
      %v1113 = vmul.f32 %v197, %v1109
      %v1114 = vmul.f32 %v198, %v1109
      %v1115 = vmul.f32 %v199, %v1109
      %v1116 = vmul.f32 %v200, %v1109
      %v1117 = vmul.f32 %v201, %v1109
      %v1118 = vmul.f32 %v202, %v1109
      %v1119 = vmul.f32 %v203, %v1109
      %v1120 = vmul.f32 %v204, %v1109
      %v1121 = vmul.f32 %v205, %v1109
      %v1122 = vmul.f32 %v206, %v1109
      %v1123 = vmul.f32 %v207, %v1109
      %v1124 = vmul.f32 %v208, %v1109
      %v1125 = vmul.f32 %v209, %v1109
      %v1126 = vmul.f32 %v210, %v1109
      %v1127 = vmul.f32 %v211, %v1109
      %v1128 = vmul.f32 %v212, %v1109
      %v1129 = vmul.f32 %v213, %v1109
      %v1130 = vmul.f32 %v214, %v1109
      %v1131 = vmul.f32 %v215, %v1109
      %v1132 = vmul.f32 %v216, %v1109
      %v1133 = vmul.f32 %v217, %v1109
      %v1134 = vmul.f32 %v218, %v1109
      %v1135 = vmul.f32 %v219, %v1109
      %v1136 = vmul.f32 %v220, %v1109
      %v1137 = vmul.f32 %v221, %v1109
      %v1138 = vmul.f32 %v222, %v1109
      %v1139 = vmul.f32 %v223, %v1109
      %v1140 = vmul.f32 %v224, %v1109
      %v1141 = vmul.f32 %v225, %v1109
      %v1142 = vmul.f32 %v226, %v1109
      %v1143 = vmul.f32 %v227, %v1109
      %v1144 = vmul.f32 %v228, %v1109
      %v1145 = vmul.f32 %v229, %v1109
      %v1146 = vmul.f32 %v230, %v1109
      %v1147 = vmul.f32 %v231, %v1109
      %v1148 = vmul.f32 %v232, %v1109
      %v1149 = vmul.f32 %v233, %v1109
      %v1150 = vmul.f32 %v234, %v1109
      %v1151 = vmul.f32 %v235, %v1109
      %v1152 = vmul.f32 %v236, %v1109
      %v1153 = vmul.f32 %v237, %v1109
      %v1154 = vmul.f32 %v238, %v1109
      %v1155 = vmul.f32 %v239, %v1109
      %v1156 = vmul.f32 %v240, %v1109
      %v1157 = vmul.f32 %v241, %v1109
      %v1158 = vmul.f32 %v242, %v1109
      %v1207 = vrot.slane %v1111, 2
      %v1208 = vrot.slane %v1112, 2
      %v1209 = vsel %vm638, %v1207, %v1208
      %v1210 = vrot.slane %v1113, 2
      %v1211 = vsel %vm638, %v1208, %v1210
      %v1212 = vrot.slane %v1114, 2
      %v1213 = vrot.slane %v1115, 2
      %v1214 = vsel %vm638, %v1212, %v1213
      %v1215 = vrot.slane %v1116, 2
      %v1216 = vsel %vm638, %v1213, %v1215
      %v1217 = vrot.slane %v1117, 2
      %v1218 = vrot.slane %v1118, 2
      %v1219 = vsel %vm638, %v1217, %v1218
      %v1220 = vrot.slane %v1119, 2
      %v1221 = vsel %vm638, %v1218, %v1220
      %v1222 = vrot.slane %v1120, 2
      %v1223 = vrot.slane %v1121, 2
      %v1224 = vsel %vm638, %v1222, %v1223
      %v1225 = vrot.slane %v1122, 2
      %v1226 = vsel %vm638, %v1223, %v1225
      %v1227 = vrot.slane %v1123, 2
      %v1228 = vrot.slane %v1124, 2
      %v1229 = vsel %vm638, %v1227, %v1228
      %v1230 = vrot.slane %v1125, 2
      %v1231 = vsel %vm638, %v1228, %v1230
      %v1232 = vrot.slane %v1126, 2
      %v1233 = vrot.slane %v1127, 2
      %v1234 = vsel %vm638, %v1232, %v1233
      %v1235 = vrot.slane %v1128, 2
      %v1236 = vsel %vm638, %v1233, %v1235
      %v1237 = vrot.slane %v1129, 2
      %v1238 = vrot.slane %v1130, 2
      %v1239 = vsel %vm638, %v1237, %v1238
      %v1240 = vrot.slane %v1131, 2
      %v1241 = vsel %vm638, %v1238, %v1240
      %v1242 = vrot.slane %v1132, 2
      %v1243 = vrot.slane %v1133, 2
      %v1244 = vsel %vm638, %v1242, %v1243
      %v1245 = vrot.slane %v1134, 2
      %v1246 = vsel %vm638, %v1243, %v1245
      %v1247 = vrot.slane %v1135, 2
      %v1248 = vrot.slane %v1136, 2
      %v1249 = vsel %vm638, %v1247, %v1248
      %v1250 = vrot.slane %v1137, 2
      %v1251 = vsel %vm638, %v1248, %v1250
      %v1252 = vrot.slane %v1138, 2
      %v1253 = vrot.slane %v1139, 2
      %v1254 = vsel %vm638, %v1252, %v1253
      %v1255 = vrot.slane %v1140, 2
      %v1256 = vsel %vm638, %v1253, %v1255
      %v1257 = vrot.slane %v1141, 2
      %v1258 = vrot.slane %v1142, 2
      %v1259 = vsel %vm638, %v1257, %v1258
      %v1260 = vrot.slane %v1143, 2
      %v1261 = vsel %vm638, %v1258, %v1260
      %v1262 = vrot.slane %v1144, 2
      %v1263 = vrot.slane %v1145, 2
      %v1264 = vsel %vm638, %v1262, %v1263
      %v1265 = vrot.slane %v1146, 2
      %v1266 = vsel %vm638, %v1263, %v1265
      %v1267 = vrot.slane %v1147, 2
      %v1268 = vrot.slane %v1148, 2
      %v1269 = vsel %vm638, %v1267, %v1268
      %v1270 = vrot.slane %v1149, 2
      %v1271 = vsel %vm638, %v1268, %v1270
      %v1272 = vrot.slane %v1150, 2
      %v1273 = vrot.slane %v1151, 2
      %v1274 = vsel %vm638, %v1272, %v1273
      %v1275 = vrot.slane %v1152, 2
      %v1276 = vsel %vm638, %v1273, %v1275
      %v1277 = vrot.slane %v1153, 2
      %v1278 = vrot.slane %v1154, 2
      %v1279 = vsel %vm638, %v1277, %v1278
      %v1280 = vrot.slane %v1155, 2
      %v1281 = vsel %vm638, %v1278, %v1280
      %v1282 = vrot.slane %v1156, 2
      %v1283 = vrot.slane %v1157, 2
      %v1284 = vsel %vm638, %v1282, %v1283
      %v1285 = vrot.slane %v1158, 2
      %v1286 = vsel %vm638, %v1283, %v1285
      %v1319 = vadd.f32 %v1071, %v1209
      %v1320 = vadd.f32 %v1072, %v1211
      %v1321 = vadd.f32 %v1073, %v1214
      %v1322 = vadd.f32 %v1074, %v1216
      %v1323 = vadd.f32 %v1075, %v1219
      %v1324 = vadd.f32 %v1076, %v1221
      %v1325 = vadd.f32 %v1077, %v1224
      %v1326 = vadd.f32 %v1078, %v1226
      %v1327 = vadd.f32 %v1079, %v1229
      %v1328 = vadd.f32 %v1080, %v1231
      %v1329 = vadd.f32 %v1081, %v1234
      %v1330 = vadd.f32 %v1082, %v1236
      %v1331 = vadd.f32 %v1083, %v1239
      %v1332 = vadd.f32 %v1084, %v1241
      %v1333 = vadd.f32 %v1085, %v1244
      %v1334 = vadd.f32 %v1086, %v1246
      %v1335 = vadd.f32 %v1087, %v1249
      %v1336 = vadd.f32 %v1088, %v1251
      %v1337 = vadd.f32 %v1089, %v1254
      %v1338 = vadd.f32 %v1090, %v1256
      %v1339 = vadd.f32 %v1091, %v1259
      %v1340 = vadd.f32 %v1092, %v1261
      %v1341 = vadd.f32 %v1093, %v1264
      %v1342 = vadd.f32 %v1094, %v1266
      %v1343 = vadd.f32 %v1095, %v1269
      %v1344 = vadd.f32 %v1096, %v1271
      %v1345 = vadd.f32 %v1097, %v1274
      %v1346 = vadd.f32 %v1098, %v1276
      %v1347 = vadd.f32 %v1099, %v1279
      %v1348 = vadd.f32 %v1100, %v1281
      %v1349 = vadd.f32 %v1101, %v1284
      %v1350 = vadd.f32 %v1102, %v1286
      %s1351 = scalar_lea.vmem %s1, 6
      %v1352 = vld [vmem:[%s1351] sm:$0x1]
      %v1354 = vlaneseq
      %v1355 = vshrl.u32 %v1354, 7
      %v1356 = vsub.s32 0, %v1355
      %v1357 = vrot.slane %v1352, %v1356
      %v1359 = vmul.f32 %v198, %v1357
      %v1360 = vmul.f32 %v199, %v1357
      %v1361 = vmul.f32 %v201, %v1357
      %v1362 = vmul.f32 %v202, %v1357
      %v1363 = vmul.f32 %v204, %v1357
      %v1364 = vmul.f32 %v205, %v1357
      %v1365 = vmul.f32 %v207, %v1357
      %v1366 = vmul.f32 %v208, %v1357
      %v1367 = vmul.f32 %v210, %v1357
      %v1368 = vmul.f32 %v211, %v1357
      %v1369 = vmul.f32 %v213, %v1357
      %v1370 = vmul.f32 %v214, %v1357
      %v1371 = vmul.f32 %v216, %v1357
      %v1372 = vmul.f32 %v217, %v1357
      %v1373 = vmul.f32 %v219, %v1357
      %v1374 = vmul.f32 %v220, %v1357
      %v1375 = vmul.f32 %v222, %v1357
      %v1376 = vmul.f32 %v223, %v1357
      %v1377 = vmul.f32 %v225, %v1357
      %v1378 = vmul.f32 %v226, %v1357
      %v1379 = vmul.f32 %v228, %v1357
      %v1380 = vmul.f32 %v229, %v1357
      %v1381 = vmul.f32 %v231, %v1357
      %v1382 = vmul.f32 %v232, %v1357
      %v1383 = vmul.f32 %v234, %v1357
      %v1384 = vmul.f32 %v235, %v1357
      %v1385 = vmul.f32 %v237, %v1357
      %v1386 = vmul.f32 %v238, %v1357
      %v1387 = vmul.f32 %v240, %v1357
      %v1388 = vmul.f32 %v241, %v1357
      %v1389 = vmul.f32 %v243, %v1357
      %v1390 = vmul.f32 %v244, %v1357
      %v1391 = vadd.f32 %v1319, %v1359
      %v1392 = vadd.f32 %v1320, %v1360
      %v1393 = vadd.f32 %v1321, %v1361
      %v1394 = vadd.f32 %v1322, %v1362
      %v1395 = vadd.f32 %v1323, %v1363
      %v1396 = vadd.f32 %v1324, %v1364
      %v1397 = vadd.f32 %v1325, %v1365
      %v1398 = vadd.f32 %v1326, %v1366
      %v1399 = vadd.f32 %v1327, %v1367
      %v1400 = vadd.f32 %v1328, %v1368
      %v1401 = vadd.f32 %v1329, %v1369
      %v1402 = vadd.f32 %v1330, %v1370
      %v1403 = vadd.f32 %v1331, %v1371
      %v1404 = vadd.f32 %v1332, %v1372
      %v1405 = vadd.f32 %v1333, %v1373
      %v1406 = vadd.f32 %v1334, %v1374
      %v1407 = vadd.f32 %v1335, %v1375
      %v1408 = vadd.f32 %v1336, %v1376
      %v1409 = vadd.f32 %v1337, %v1377
      %v1410 = vadd.f32 %v1338, %v1378
      %v1411 = vadd.f32 %v1339, %v1379
      %v1412 = vadd.f32 %v1340, %v1380
      %v1413 = vadd.f32 %v1341, %v1381
      %v1414 = vadd.f32 %v1342, %v1382
      %v1415 = vadd.f32 %v1343, %v1383
      %v1416 = vadd.f32 %v1344, %v1384
      %v1417 = vadd.f32 %v1345, %v1385
      %v1418 = vadd.f32 %v1346, %v1386
      %v1419 = vadd.f32 %v1347, %v1387
      %v1420 = vadd.f32 %v1348, %v1388
      %v1421 = vadd.f32 %v1349, %v1389
      %v1422 = vadd.f32 %v1350, %v1390
      %s1423 = scalar_lea.vmem %s1, 7
      %v1424 = vld [vmem:[%s1423] sm:$0x1]
      %v1426 = vlaneseq
      %v1427 = vshrl.u32 %v1426, 7
      %v1428 = vsub.s32 0, %v1427
      %v1429 = vrot.slane %v1424, %v1428
      %v1431 = vmul.f32 %v198, %v1429
      %v1432 = vmul.f32 %v199, %v1429
      %v1433 = vmul.f32 %v200, %v1429
      %v1434 = vmul.f32 %v201, %v1429
      %v1435 = vmul.f32 %v202, %v1429
      %v1436 = vmul.f32 %v203, %v1429
      %v1437 = vmul.f32 %v204, %v1429
      %v1438 = vmul.f32 %v205, %v1429
      %v1439 = vmul.f32 %v206, %v1429
      %v1440 = vmul.f32 %v207, %v1429
      %v1441 = vmul.f32 %v208, %v1429
      %v1442 = vmul.f32 %v209, %v1429
      %v1443 = vmul.f32 %v210, %v1429
      %v1444 = vmul.f32 %v211, %v1429
      %v1445 = vmul.f32 %v212, %v1429
      %v1446 = vmul.f32 %v213, %v1429
      %v1447 = vmul.f32 %v214, %v1429
      %v1448 = vmul.f32 %v215, %v1429
      %v1449 = vmul.f32 %v216, %v1429
      %v1450 = vmul.f32 %v217, %v1429
      %v1451 = vmul.f32 %v218, %v1429
      %v1452 = vmul.f32 %v219, %v1429
      %v1453 = vmul.f32 %v220, %v1429
      %v1454 = vmul.f32 %v221, %v1429
      %v1455 = vmul.f32 %v222, %v1429
      %v1456 = vmul.f32 %v223, %v1429
      %v1457 = vmul.f32 %v224, %v1429
      %v1458 = vmul.f32 %v225, %v1429
      %v1459 = vmul.f32 %v226, %v1429
      %v1460 = vmul.f32 %v227, %v1429
      %v1461 = vmul.f32 %v228, %v1429
      %v1462 = vmul.f32 %v229, %v1429
      %v1463 = vmul.f32 %v230, %v1429
      %v1464 = vmul.f32 %v231, %v1429
      %v1465 = vmul.f32 %v232, %v1429
      %v1466 = vmul.f32 %v233, %v1429
      %v1467 = vmul.f32 %v234, %v1429
      %v1468 = vmul.f32 %v235, %v1429
      %v1469 = vmul.f32 %v236, %v1429
      %v1470 = vmul.f32 %v237, %v1429
      %v1471 = vmul.f32 %v238, %v1429
      %v1472 = vmul.f32 %v239, %v1429
      %v1473 = vmul.f32 %v240, %v1429
      %v1474 = vmul.f32 %v241, %v1429
      %v1475 = vmul.f32 %v242, %v1429
      %v1476 = vmul.f32 %v243, %v1429
      %v1477 = vmul.f32 %v244, %v1429
      %v1478 = vmul.f32 %v245, %v1429
      %v1527 = vrot.slane %v1431, 1
      %v1528 = vrot.slane %v1432, 1
      %v1529 = vsel %vm389, %v1527, %v1528
      %v1530 = vrot.slane %v1433, 1
      %v1531 = vsel %vm389, %v1528, %v1530
      %v1532 = vrot.slane %v1434, 1
      %v1533 = vrot.slane %v1435, 1
      %v1534 = vsel %vm389, %v1532, %v1533
      %v1535 = vrot.slane %v1436, 1
      %v1536 = vsel %vm389, %v1533, %v1535
      %v1537 = vrot.slane %v1437, 1
      %v1538 = vrot.slane %v1438, 1
      %v1539 = vsel %vm389, %v1537, %v1538
      %v1540 = vrot.slane %v1439, 1
      %v1541 = vsel %vm389, %v1538, %v1540
      %v1542 = vrot.slane %v1440, 1
      %v1543 = vrot.slane %v1441, 1
      %v1544 = vsel %vm389, %v1542, %v1543
      %v1545 = vrot.slane %v1442, 1
      %v1546 = vsel %vm389, %v1543, %v1545
      %v1547 = vrot.slane %v1443, 1
      %v1548 = vrot.slane %v1444, 1
      %v1549 = vsel %vm389, %v1547, %v1548
      %v1550 = vrot.slane %v1445, 1
      %v1551 = vsel %vm389, %v1548, %v1550
      %v1552 = vrot.slane %v1446, 1
      %v1553 = vrot.slane %v1447, 1
      %v1554 = vsel %vm389, %v1552, %v1553
      %v1555 = vrot.slane %v1448, 1
      %v1556 = vsel %vm389, %v1553, %v1555
      %v1557 = vrot.slane %v1449, 1
      %v1558 = vrot.slane %v1450, 1
      %v1559 = vsel %vm389, %v1557, %v1558
      %v1560 = vrot.slane %v1451, 1
      %v1561 = vsel %vm389, %v1558, %v1560
      %v1562 = vrot.slane %v1452, 1
      %v1563 = vrot.slane %v1453, 1
      %v1564 = vsel %vm389, %v1562, %v1563
      %v1565 = vrot.slane %v1454, 1
      %v1566 = vsel %vm389, %v1563, %v1565
      %v1567 = vrot.slane %v1455, 1
      %v1568 = vrot.slane %v1456, 1
      %v1569 = vsel %vm389, %v1567, %v1568
      %v1570 = vrot.slane %v1457, 1
      %v1571 = vsel %vm389, %v1568, %v1570
      %v1572 = vrot.slane %v1458, 1
      %v1573 = vrot.slane %v1459, 1
      %v1574 = vsel %vm389, %v1572, %v1573
      %v1575 = vrot.slane %v1460, 1
      %v1576 = vsel %vm389, %v1573, %v1575
      %v1577 = vrot.slane %v1461, 1
      %v1578 = vrot.slane %v1462, 1
      %v1579 = vsel %vm389, %v1577, %v1578
      %v1580 = vrot.slane %v1463, 1
      %v1581 = vsel %vm389, %v1578, %v1580
      %v1582 = vrot.slane %v1464, 1
      %v1583 = vrot.slane %v1465, 1
      %v1584 = vsel %vm389, %v1582, %v1583
      %v1585 = vrot.slane %v1466, 1
      %v1586 = vsel %vm389, %v1583, %v1585
      %v1587 = vrot.slane %v1467, 1
      %v1588 = vrot.slane %v1468, 1
      %v1589 = vsel %vm389, %v1587, %v1588
      %v1590 = vrot.slane %v1469, 1
      %v1591 = vsel %vm389, %v1588, %v1590
      %v1592 = vrot.slane %v1470, 1
      %v1593 = vrot.slane %v1471, 1
      %v1594 = vsel %vm389, %v1592, %v1593
      %v1595 = vrot.slane %v1472, 1
      %v1596 = vsel %vm389, %v1593, %v1595
      %v1597 = vrot.slane %v1473, 1
      %v1598 = vrot.slane %v1474, 1
      %v1599 = vsel %vm389, %v1597, %v1598
      %v1600 = vrot.slane %v1475, 1
      %v1601 = vsel %vm389, %v1598, %v1600
      %v1602 = vrot.slane %v1476, 1
      %v1603 = vrot.slane %v1477, 1
      %v1604 = vsel %vm389, %v1602, %v1603
      %v1605 = vrot.slane %v1478, 1
      %v1606 = vsel %vm389, %v1603, %v1605
      %v1639 = vadd.f32 %v1391, %v1529
      %v1640 = vadd.f32 %v1392, %v1531
      %v1641 = vadd.f32 %v1393, %v1534
      %v1642 = vadd.f32 %v1394, %v1536
      %v1643 = vadd.f32 %v1395, %v1539
      %v1644 = vadd.f32 %v1396, %v1541
      %v1645 = vadd.f32 %v1397, %v1544
      %v1646 = vadd.f32 %v1398, %v1546
      %v1647 = vadd.f32 %v1399, %v1549
      %v1648 = vadd.f32 %v1400, %v1551
      %v1649 = vadd.f32 %v1401, %v1554
      %v1650 = vadd.f32 %v1402, %v1556
      %v1651 = vadd.f32 %v1403, %v1559
      %v1652 = vadd.f32 %v1404, %v1561
      %v1653 = vadd.f32 %v1405, %v1564
      %v1654 = vadd.f32 %v1406, %v1566
      %v1655 = vadd.f32 %v1407, %v1569
      %v1656 = vadd.f32 %v1408, %v1571
      %v1657 = vadd.f32 %v1409, %v1574
      %v1658 = vadd.f32 %v1410, %v1576
      %v1659 = vadd.f32 %v1411, %v1579
      %v1660 = vadd.f32 %v1412, %v1581
      %v1661 = vadd.f32 %v1413, %v1584
      %v1662 = vadd.f32 %v1414, %v1586
      %v1663 = vadd.f32 %v1415, %v1589
      %v1664 = vadd.f32 %v1416, %v1591
      %v1665 = vadd.f32 %v1417, %v1594
      %v1666 = vadd.f32 %v1418, %v1596
      %v1667 = vadd.f32 %v1419, %v1599
      %v1668 = vadd.f32 %v1420, %v1601
      %v1669 = vadd.f32 %v1421, %v1604
      %v1670 = vadd.f32 %v1422, %v1606
      %s1671 = scalar_lea.vmem %s1, 8
      %v1672 = vld [vmem:[%s1671] sm:$0x1]
      %v1674 = vlaneseq
      %v1675 = vshrl.u32 %v1674, 7
      %v1676 = vsub.s32 0, %v1675
      %v1677 = vrot.slane %v1672, %v1676
      %v1679 = vmul.f32 %v198, %v1677
      %v1680 = vmul.f32 %v199, %v1677
      %v1681 = vmul.f32 %v200, %v1677
      %v1682 = vmul.f32 %v201, %v1677
      %v1683 = vmul.f32 %v202, %v1677
      %v1684 = vmul.f32 %v203, %v1677
      %v1685 = vmul.f32 %v204, %v1677
      %v1686 = vmul.f32 %v205, %v1677
      %v1687 = vmul.f32 %v206, %v1677
      %v1688 = vmul.f32 %v207, %v1677
      %v1689 = vmul.f32 %v208, %v1677
      %v1690 = vmul.f32 %v209, %v1677
      %v1691 = vmul.f32 %v210, %v1677
      %v1692 = vmul.f32 %v211, %v1677
      %v1693 = vmul.f32 %v212, %v1677
      %v1694 = vmul.f32 %v213, %v1677
      %v1695 = vmul.f32 %v214, %v1677
      %v1696 = vmul.f32 %v215, %v1677
      %v1697 = vmul.f32 %v216, %v1677
      %v1698 = vmul.f32 %v217, %v1677
      %v1699 = vmul.f32 %v218, %v1677
      %v1700 = vmul.f32 %v219, %v1677
      %v1701 = vmul.f32 %v220, %v1677
      %v1702 = vmul.f32 %v221, %v1677
      %v1703 = vmul.f32 %v222, %v1677
      %v1704 = vmul.f32 %v223, %v1677
      %v1705 = vmul.f32 %v224, %v1677
      %v1706 = vmul.f32 %v225, %v1677
      %v1707 = vmul.f32 %v226, %v1677
      %v1708 = vmul.f32 %v227, %v1677
      %v1709 = vmul.f32 %v228, %v1677
      %v1710 = vmul.f32 %v229, %v1677
      %v1711 = vmul.f32 %v230, %v1677
      %v1712 = vmul.f32 %v231, %v1677
      %v1713 = vmul.f32 %v232, %v1677
      %v1714 = vmul.f32 %v233, %v1677
      %v1715 = vmul.f32 %v234, %v1677
      %v1716 = vmul.f32 %v235, %v1677
      %v1717 = vmul.f32 %v236, %v1677
      %v1718 = vmul.f32 %v237, %v1677
      %v1719 = vmul.f32 %v238, %v1677
      %v1720 = vmul.f32 %v239, %v1677
      %v1721 = vmul.f32 %v240, %v1677
      %v1722 = vmul.f32 %v241, %v1677
      %v1723 = vmul.f32 %v242, %v1677
      %v1724 = vmul.f32 %v243, %v1677
      %v1725 = vmul.f32 %v244, %v1677
      %v1726 = vmul.f32 %v245, %v1677
      %v1775 = vrot.slane %v1679, 2
      %v1776 = vrot.slane %v1680, 2
      %v1777 = vsel %vm638, %v1775, %v1776
      %v1778 = vrot.slane %v1681, 2
      %v1779 = vsel %vm638, %v1776, %v1778
      %v1780 = vrot.slane %v1682, 2
      %v1781 = vrot.slane %v1683, 2
      %v1782 = vsel %vm638, %v1780, %v1781
      %v1783 = vrot.slane %v1684, 2
      %v1784 = vsel %vm638, %v1781, %v1783
      %v1785 = vrot.slane %v1685, 2
      %v1786 = vrot.slane %v1686, 2
      %v1787 = vsel %vm638, %v1785, %v1786
      %v1788 = vrot.slane %v1687, 2
      %v1789 = vsel %vm638, %v1786, %v1788
      %v1790 = vrot.slane %v1688, 2
      %v1791 = vrot.slane %v1689, 2
      %v1792 = vsel %vm638, %v1790, %v1791
      %v1793 = vrot.slane %v1690, 2
      %v1794 = vsel %vm638, %v1791, %v1793
      %v1795 = vrot.slane %v1691, 2
      %v1796 = vrot.slane %v1692, 2
      %v1797 = vsel %vm638, %v1795, %v1796
      %v1798 = vrot.slane %v1693, 2
      %v1799 = vsel %vm638, %v1796, %v1798
      %v1800 = vrot.slane %v1694, 2
      %v1801 = vrot.slane %v1695, 2
      %v1802 = vsel %vm638, %v1800, %v1801
      %v1803 = vrot.slane %v1696, 2
      %v1804 = vsel %vm638, %v1801, %v1803
      %v1805 = vrot.slane %v1697, 2
      %v1806 = vrot.slane %v1698, 2
      %v1807 = vsel %vm638, %v1805, %v1806
      %v1808 = vrot.slane %v1699, 2
      %v1809 = vsel %vm638, %v1806, %v1808
      %v1810 = vrot.slane %v1700, 2
      %v1811 = vrot.slane %v1701, 2
      %v1812 = vsel %vm638, %v1810, %v1811
      %v1813 = vrot.slane %v1702, 2
      %v1814 = vsel %vm638, %v1811, %v1813
      %v1815 = vrot.slane %v1703, 2
      %v1816 = vrot.slane %v1704, 2
      %v1817 = vsel %vm638, %v1815, %v1816
      %v1818 = vrot.slane %v1705, 2
      %v1819 = vsel %vm638, %v1816, %v1818
      %v1820 = vrot.slane %v1706, 2
      %v1821 = vrot.slane %v1707, 2
      %v1822 = vsel %vm638, %v1820, %v1821
      %v1823 = vrot.slane %v1708, 2
      %v1824 = vsel %vm638, %v1821, %v1823
      %v1825 = vrot.slane %v1709, 2
      %v1826 = vrot.slane %v1710, 2
      %v1827 = vsel %vm638, %v1825, %v1826
      %v1828 = vrot.slane %v1711, 2
      %v1829 = vsel %vm638, %v1826, %v1828
      %v1830 = vrot.slane %v1712, 2
      %v1831 = vrot.slane %v1713, 2
      %v1832 = vsel %vm638, %v1830, %v1831
      %v1833 = vrot.slane %v1714, 2
      %v1834 = vsel %vm638, %v1831, %v1833
      %v1835 = vrot.slane %v1715, 2
      %v1836 = vrot.slane %v1716, 2
      %v1837 = vsel %vm638, %v1835, %v1836
      %v1838 = vrot.slane %v1717, 2
      %v1839 = vsel %vm638, %v1836, %v1838
      %v1840 = vrot.slane %v1718, 2
      %v1841 = vrot.slane %v1719, 2
      %v1842 = vsel %vm638, %v1840, %v1841
      %v1843 = vrot.slane %v1720, 2
      %v1844 = vsel %vm638, %v1841, %v1843
      %v1845 = vrot.slane %v1721, 2
      %v1846 = vrot.slane %v1722, 2
      %v1847 = vsel %vm638, %v1845, %v1846
      %v1848 = vrot.slane %v1723, 2
      %v1849 = vsel %vm638, %v1846, %v1848
      %v1850 = vrot.slane %v1724, 2
      %v1851 = vrot.slane %v1725, 2
      %v1852 = vsel %vm638, %v1850, %v1851
      %v1853 = vrot.slane %v1726, 2
      %v1854 = vsel %vm638, %v1851, %v1853
      %v1887 = vadd.f32 %v1639, %v1777
      %v1888 = vadd.f32 %v1640, %v1779
      %v1889 = vadd.f32 %v1641, %v1782
      %v1890 = vadd.f32 %v1642, %v1784
      %v1891 = vadd.f32 %v1643, %v1787
      %v1892 = vadd.f32 %v1644, %v1789
      %v1893 = vadd.f32 %v1645, %v1792
      %v1894 = vadd.f32 %v1646, %v1794
      %v1895 = vadd.f32 %v1647, %v1797
      %v1896 = vadd.f32 %v1648, %v1799
      %v1897 = vadd.f32 %v1649, %v1802
      %v1898 = vadd.f32 %v1650, %v1804
      %v1899 = vadd.f32 %v1651, %v1807
      %v1900 = vadd.f32 %v1652, %v1809
      %v1901 = vadd.f32 %v1653, %v1812
      %v1902 = vadd.f32 %v1654, %v1814
      %v1903 = vadd.f32 %v1655, %v1817
      %v1904 = vadd.f32 %v1656, %v1819
      %v1905 = vadd.f32 %v1657, %v1822
      %v1906 = vadd.f32 %v1658, %v1824
      %v1907 = vadd.f32 %v1659, %v1827
      %v1908 = vadd.f32 %v1660, %v1829
      %v1909 = vadd.f32 %v1661, %v1832
      %v1910 = vadd.f32 %v1662, %v1834
      %v1911 = vadd.f32 %v1663, %v1837
      %v1912 = vadd.f32 %v1664, %v1839
      %v1913 = vadd.f32 %v1665, %v1842
      %v1914 = vadd.f32 %v1666, %v1844
      %v1915 = vadd.f32 %v1667, %v1847
      %v1916 = vadd.f32 %v1668, %v1849
      %v1917 = vadd.f32 %v1669, %v1852
      %v1918 = vadd.f32 %v1670, %v1854
      %v1919 = vld [vmem:[%s2] sm:$0xf]
      %vm1920 = vcmask 31744
      %v1922 = vsel %vm1920, %v1887, 0
      %v1925 = vsel %vm1920, %v1888, 0
      %v1928 = vsel %vm1920, %v1889, 0
      %v1931 = vsel %vm1920, %v1890, 0
      %v1934 = vsel %vm1920, %v1891, 0
      %v1937 = vsel %vm1920, %v1892, 0
      %v1940 = vsel %vm1920, %v1893, 0
      %v1943 = vsel %vm1920, %v1894, 0
      %v1946 = vsel %vm1920, %v1895, 0
      %v1949 = vsel %vm1920, %v1896, 0
      %v1952 = vsel %vm1920, %v1897, 0
      %v1955 = vsel %vm1920, %v1898, 0
      %v1958 = vsel %vm1920, %v1899, 0
      %v1961 = vsel %vm1920, %v1900, 0
      %v1964 = vsel %vm1920, %v1901, 0
      %v1967 = vsel %vm1920, %v1902, 0
      %v1970 = vsel %vm1920, %v1903, 0
      %v1973 = vsel %vm1920, %v1904, 0
      %v1976 = vsel %vm1920, %v1905, 0
      %v1979 = vsel %vm1920, %v1906, 0
      %v1982 = vsel %vm1920, %v1907, 0
      %v1985 = vsel %vm1920, %v1908, 0
      %v1988 = vsel %vm1920, %v1909, 0
      %v1991 = vsel %vm1920, %v1910, 0
      %v1994 = vsel %vm1920, %v1911, 0
      %v1997 = vsel %vm1920, %v1912, 0
      %v2000 = vsel %vm1920, %v1913, 0
      %v2003 = vsel %vm1920, %v1914, 0
      %v2006 = vsel %vm1920, %v1915, 0
      %v2009 = vsel %vm1920, %v1916, 0
      %v2012 = vsel %vm1920, %v1917, 0
      %v2015 = vsel %vm1920, %v1918, 0
      %vm2017 = vcmask 1043456
      %v2019 = vsel %vm2017, %v1919, 0
      %2021 = vmatprep.subr.mxu0 0.0
      %2022 = vmatpush1.msra.mxu0 0.0
      %2023 = vmatprep.subr.mxu0 0.0
      %2024 = vmatpush1.msra.mxu0 0.0
      %2025 = vmatprep.subr.mxu0 0.0
      %2026 = vmatpush1.msra.mxu0 0.0
      %2027 = vmatprep.subr.mxu0 0.0
      %2028 = vmatpush1.msra.mxu0 0.0
      %2029 = vmatprep.subr.mxu0 0.0
      %2030 = vmatpush1.msra.mxu0 0.0
      %2031 = vmatprep.subr.mxu0 0.0
      %2032 = vmatpush1.msra.mxu0 0.0
      %2033 = vmatprep.subr.mxu0 0.0
      %2034 = vmatpush1.msra.mxu0 0.0
      %2035 = vmatprep.subr.mxu0 0.0
      %2036 = vmatpush1.msra.mxu0 0.0
      %2037 = vmatprep.subr.mxu0 0.0
      %2038 = vmatpush1.msra.mxu0 0.0
      %2039 = vmatprep.subr.mxu0 0.0
      %2040 = vmatpush1.msra.mxu0 0.0
      %2041 = vmatprep.subr.mxu0 0.0
      %2042 = vmatpush1.msra.mxu0 0.0
      %2043 = vmatprep.subr.mxu0 0.0
      %2044 = vmatpush1.msra.mxu0 0.0
      %2045 = vmatprep.subr.mxu0 0.0
      %2046 = vmatpush1.msra.mxu0 0.0
      %2047 = vmatprep.subr.mxu0 0.0
      %2048 = vmatpush1.msra.mxu0 0.0
      %2049 = vmatprep.subr.mxu0 0.0
      %2050 = vmatpush1.msra.mxu0 0.0
      %2051 = vmatprep.subr.mxu0 0.0
      %2052 = vmatpush1.msra.mxu0 %v2019
      %2053 = vmatprep.subr.mxu0 0.0
      %2054 = vmatpush2.msra.mxu0 0.0
      %2055 = vmatprep.subr.mxu0 0.0
      %2056 = vmatpush2.msra.mxu0 0.0
      %2057 = vmatprep.subr.mxu0 0.0
      %2058 = vmatpush2.msra.mxu0 0.0
      %2059 = vmatprep.subr.mxu0 0.0
      %2060 = vmatpush2.msra.mxu0 0.0
      %2061 = vmatprep.subr.mxu0 0.0
      %2062 = vmatpush2.msra.mxu0 0.0
      %2063 = vmatprep.subr.mxu0 0.0
      %2064 = vmatpush2.msra.mxu0 0.0
      %2065 = vmatprep.subr.mxu0 0.0
      %2066 = vmatpush2.msra.mxu0 0.0
      %2067 = vmatprep.subr.mxu0 0.0
      %2068 = vmatpush2.msra.mxu0 0.0
      %2069 = vmatprep.subr.mxu0 0.0
      %2070 = vmatpush2.msra.mxu0 0.0
      %2071 = vmatprep.subr.mxu0 0.0
      %2072 = vmatpush2.msra.mxu0 0.0
      %2073 = vmatprep.subr.mxu0 0.0
      %2074 = vmatpush2.msra.mxu0 0.0
      %2075 = vmatprep.subr.mxu0 0.0
      %2076 = vmatpush2.msra.mxu0 0.0
      %2077 = vmatprep.subr.mxu0 0.0
      %2078 = vmatpush2.msra.mxu0 0.0
      %2079 = vmatprep.subr.mxu0 0.0
      %2080 = vmatpush2.msra.mxu0 0.0
      %2081 = vmatprep.subr.mxu0 0.0
      %2082 = vmatpush2.msra.mxu0 0.0
      %2083 = vmatprep.subr.mxu0 0.0
      %2084 = vmatpush2.msra.mxu0 0.0
      %2085 = vmatprep.mubr.f32.mxu0 0.0
      %2086 = vmatmul.mubr.f32.gmra.mxu0 %v1922
      %v2087 = vpop.f32.mrf.mxu0
      %v2088 = vadd.f32 0.0, %v2087
      %v2089 = vpop.f32.mrf.mxu0
      %2090 = vmatprep.mubr.f32.mxu0 0.0
      %2091 = vmatmul.mubr.f32.gmra.mxu0 %v1925
      %v2092 = vpop.f32.mrf.mxu0
      %v2093 = vadd.f32 0.0, %v2092
      %v2094 = vpop.f32.mrf.mxu0
      %2095 = vmatprep.mubr.f32.mxu0 0.0
      %2096 = vmatmul.mubr.f32.gmra.mxu0 %v1928
      %v2097 = vpop.f32.mrf.mxu0
      %v2098 = vadd.f32 0.0, %v2097
      %v2099 = vpop.f32.mrf.mxu0
      %2100 = vmatprep.mubr.f32.mxu0 0.0
      %2101 = vmatmul.mubr.f32.gmra.mxu0 %v1931
      %v2102 = vpop.f32.mrf.mxu0
      %v2103 = vadd.f32 0.0, %v2102
      %v2104 = vpop.f32.mrf.mxu0
      %2105 = vmatprep.mubr.f32.mxu0 0.0
      %2106 = vmatmul.mubr.f32.gmra.mxu0 %v1934
      %v2107 = vpop.f32.mrf.mxu0
      %v2108 = vadd.f32 0.0, %v2107
      %v2109 = vpop.f32.mrf.mxu0
      %2110 = vmatprep.mubr.f32.mxu0 0.0
      %2111 = vmatmul.mubr.f32.gmra.mxu0 %v1937
      %v2112 = vpop.f32.mrf.mxu0
      %v2113 = vadd.f32 0.0, %v2112
      %v2114 = vpop.f32.mrf.mxu0
      %2115 = vmatprep.mubr.f32.mxu0 0.0
      %2116 = vmatmul.mubr.f32.gmra.mxu0 %v1940
      %v2117 = vpop.f32.mrf.mxu0
      %v2118 = vadd.f32 0.0, %v2117
      %v2119 = vpop.f32.mrf.mxu0
      %2120 = vmatprep.mubr.f32.mxu0 0.0
      %2121 = vmatmul.mubr.f32.gmra.mxu0 %v1943
      %v2122 = vpop.f32.mrf.mxu0
      %v2123 = vadd.f32 0.0, %v2122
      %v2124 = vpop.f32.mrf.mxu0
      %2125 = vmatprep.mubr.f32.mxu0 0.0
      %2126 = vmatmul.mubr.f32.gmra.mxu0 %v1946
      %v2127 = vpop.f32.mrf.mxu0
      %v2128 = vadd.f32 0.0, %v2127
      %v2129 = vpop.f32.mrf.mxu0
      %2130 = vmatprep.mubr.f32.mxu0 0.0
      %2131 = vmatmul.mubr.f32.gmra.mxu0 %v1949
      %v2132 = vpop.f32.mrf.mxu0
      %v2133 = vadd.f32 0.0, %v2132
      %v2134 = vpop.f32.mrf.mxu0
      %2135 = vmatprep.mubr.f32.mxu0 0.0
      %2136 = vmatmul.mubr.f32.gmra.mxu0 %v1952
      %v2137 = vpop.f32.mrf.mxu0
      %v2138 = vadd.f32 0.0, %v2137
      %v2139 = vpop.f32.mrf.mxu0
      %2140 = vmatprep.mubr.f32.mxu0 0.0
      %2141 = vmatmul.mubr.f32.gmra.mxu0 %v1955
      %v2142 = vpop.f32.mrf.mxu0
      %v2143 = vadd.f32 0.0, %v2142
      %v2144 = vpop.f32.mrf.mxu0
      %2145 = vmatprep.mubr.f32.mxu0 0.0
      %2146 = vmatmul.mubr.f32.gmra.mxu0 %v1958
      %v2147 = vpop.f32.mrf.mxu0
      %v2148 = vadd.f32 0.0, %v2147
      %v2149 = vpop.f32.mrf.mxu0
      %2150 = vmatprep.mubr.f32.mxu0 0.0
      %2151 = vmatmul.mubr.f32.gmra.mxu0 %v1961
      %v2152 = vpop.f32.mrf.mxu0
      %v2153 = vadd.f32 0.0, %v2152
      %v2154 = vpop.f32.mrf.mxu0
      %2155 = vmatprep.mubr.f32.mxu0 0.0
      %2156 = vmatmul.mubr.f32.gmra.mxu0 %v1964
      %v2157 = vpop.f32.mrf.mxu0
      %v2158 = vadd.f32 0.0, %v2157
      %v2159 = vpop.f32.mrf.mxu0
      %2160 = vmatprep.mubr.f32.mxu0 0.0
      %2161 = vmatmul.mubr.f32.gmra.mxu0 %v1967
      %v2162 = vpop.f32.mrf.mxu0
      %v2163 = vadd.f32 0.0, %v2162
      %v2164 = vpop.f32.mrf.mxu0
      %2165 = vmatprep.mubr.f32.mxu0 0.0
      %2166 = vmatmul.mubr.f32.gmra.mxu0 %v1970
      %v2167 = vpop.f32.mrf.mxu0
      %v2168 = vadd.f32 0.0, %v2167
      %v2169 = vpop.f32.mrf.mxu0
      %2170 = vmatprep.mubr.f32.mxu0 0.0
      %2171 = vmatmul.mubr.f32.gmra.mxu0 %v1973
      %v2172 = vpop.f32.mrf.mxu0
      %v2173 = vadd.f32 0.0, %v2172
      %v2174 = vpop.f32.mrf.mxu0
      %2175 = vmatprep.mubr.f32.mxu0 0.0
      %2176 = vmatmul.mubr.f32.gmra.mxu0 %v1976
      %v2177 = vpop.f32.mrf.mxu0
      %v2178 = vadd.f32 0.0, %v2177
      %v2179 = vpop.f32.mrf.mxu0
      %2180 = vmatprep.mubr.f32.mxu0 0.0
      %2181 = vmatmul.mubr.f32.gmra.mxu0 %v1979
      %v2182 = vpop.f32.mrf.mxu0
      %v2183 = vadd.f32 0.0, %v2182
      %v2184 = vpop.f32.mrf.mxu0
      %2185 = vmatprep.mubr.f32.mxu0 0.0
      %2186 = vmatmul.mubr.f32.gmra.mxu0 %v1982
      %v2187 = vpop.f32.mrf.mxu0
      %v2188 = vadd.f32 0.0, %v2187
      %v2189 = vpop.f32.mrf.mxu0
      %2190 = vmatprep.mubr.f32.mxu0 0.0
      %2191 = vmatmul.mubr.f32.gmra.mxu0 %v1985
      %v2192 = vpop.f32.mrf.mxu0
      %v2193 = vadd.f32 0.0, %v2192
      %v2194 = vpop.f32.mrf.mxu0
      %2195 = vmatprep.mubr.f32.mxu0 0.0
      %2196 = vmatmul.mubr.f32.gmra.mxu0 %v1988
      %v2197 = vpop.f32.mrf.mxu0
      %v2198 = vadd.f32 0.0, %v2197
      %v2199 = vpop.f32.mrf.mxu0
      %2200 = vmatprep.mubr.f32.mxu0 0.0
      %2201 = vmatmul.mubr.f32.gmra.mxu0 %v1991
      %v2202 = vpop.f32.mrf.mxu0
      %v2203 = vadd.f32 0.0, %v2202
      %v2204 = vpop.f32.mrf.mxu0
      %2205 = vmatprep.mubr.f32.mxu0 0.0
      %2206 = vmatmul.mubr.f32.gmra.mxu0 %v1994
      %v2207 = vpop.f32.mrf.mxu0
      %v2208 = vadd.f32 0.0, %v2207
      %v2209 = vpop.f32.mrf.mxu0
      %2210 = vmatprep.mubr.f32.mxu0 0.0
      %2211 = vmatmul.mubr.f32.gmra.mxu0 %v1997
      %v2212 = vpop.f32.mrf.mxu0
      %v2213 = vadd.f32 0.0, %v2212
      %v2214 = vpop.f32.mrf.mxu0
      %2215 = vmatprep.mubr.f32.mxu0 0.0
      %2216 = vmatmul.mubr.f32.gmra.mxu0 %v2000
      %v2217 = vpop.f32.mrf.mxu0
      %v2218 = vadd.f32 0.0, %v2217
      %v2219 = vpop.f32.mrf.mxu0
      %2220 = vmatprep.mubr.f32.mxu0 0.0
      %2221 = vmatmul.mubr.f32.gmra.mxu0 %v2003
      %v2222 = vpop.f32.mrf.mxu0
      %v2223 = vadd.f32 0.0, %v2222
      %v2224 = vpop.f32.mrf.mxu0
      %2225 = vmatprep.mubr.f32.mxu0 0.0
      %2226 = vmatmul.mubr.f32.gmra.mxu0 %v2006
      %v2227 = vpop.f32.mrf.mxu0
      %v2228 = vadd.f32 0.0, %v2227
      %v2229 = vpop.f32.mrf.mxu0
      %2230 = vmatprep.mubr.f32.mxu0 0.0
      %2231 = vmatmul.mubr.f32.gmra.mxu0 %v2009
      %v2232 = vpop.f32.mrf.mxu0
      %v2233 = vadd.f32 0.0, %v2232
      %v2234 = vpop.f32.mrf.mxu0
      %2235 = vmatprep.mubr.f32.mxu0 0.0
      %2236 = vmatmul.mubr.f32.gmra.mxu0 %v2012
      %v2237 = vpop.f32.mrf.mxu0
      %v2238 = vadd.f32 0.0, %v2237
      %v2239 = vpop.f32.mrf.mxu0
      %2240 = vmatprep.mubr.f32.mxu0 0.0
      %2241 = vmatmul.mubr.f32.gmra.mxu0 %v2015
      %v2242 = vpop.f32.mrf.mxu0
      %v2243 = vadd.f32 0.0, %v2242
      %v2244 = vpop.f32.mrf.mxu0
      %2245 = vdwg.mxu0
      %v2246 = vadd.f32 %v2088, %v2093
      %v2247 = vadd.f32 %v2246, %v2098
      %v2248 = vadd.f32 %v2247, %v2103
      %v2249 = vadd.f32 %v2248, %v2108
      %v2250 = vadd.f32 %v2249, %v2113
      %v2251 = vadd.f32 %v2250, %v2118
      %v2252 = vadd.f32 %v2251, %v2123
      %v2253 = vadd.f32 %v2252, %v2128
      %v2254 = vadd.f32 %v2253, %v2133
      %v2255 = vadd.f32 %v2254, %v2138
      %v2256 = vadd.f32 %v2255, %v2143
      %v2257 = vadd.f32 %v2256, %v2148
      %v2258 = vadd.f32 %v2257, %v2153
      %v2259 = vadd.f32 %v2258, %v2158
      %v2260 = vadd.f32 %v2259, %v2163
      %v2261 = vadd.f32 %v2260, %v2168
      %v2262 = vadd.f32 %v2261, %v2173
      %v2263 = vadd.f32 %v2262, %v2178
      %v2264 = vadd.f32 %v2263, %v2183
      %v2265 = vadd.f32 %v2264, %v2188
      %v2266 = vadd.f32 %v2265, %v2193
      %v2267 = vadd.f32 %v2266, %v2198
      %v2268 = vadd.f32 %v2267, %v2203
      %v2269 = vadd.f32 %v2268, %v2208
      %v2270 = vadd.f32 %v2269, %v2213
      %v2271 = vadd.f32 %v2270, %v2218
      %v2272 = vadd.f32 %v2271, %v2223
      %v2273 = vadd.f32 %v2272, %v2228
      %v2274 = vadd.f32 %v2273, %v2233
      %v2275 = vadd.f32 %v2274, %v2238
      %v2276 = vadd.f32 %v2275, %v2243
      %v2277 = vrot.slane %v2276, 4
      %v2278 = vadd.f32 %v2276, %v2277
      %v2279 = vrot.slane %v2278, 2
      %v2280 = vadd.f32 %v2278, %v2279
      %v2281 = vrot.slane %v2280, 1
      %v2282 = vadd.f32 %v2280, %v2281
      %v2283 = vmul.f32 %v2282, 0.00390625
      %v2284 = vsub.f32 %v2088, %v2283
      %v2285 = vsub.f32 %v2093, %v2283
      %v2286 = vsub.f32 %v2098, %v2283
      %v2287 = vsub.f32 %v2103, %v2283
      %v2288 = vsub.f32 %v2108, %v2283
      %v2289 = vsub.f32 %v2113, %v2283
      %v2290 = vsub.f32 %v2118, %v2283
      %v2291 = vsub.f32 %v2123, %v2283
      %v2292 = vsub.f32 %v2128, %v2283
      %v2293 = vsub.f32 %v2133, %v2283
      %v2294 = vsub.f32 %v2138, %v2283
      %v2295 = vsub.f32 %v2143, %v2283
      %v2296 = vsub.f32 %v2148, %v2283
      %v2297 = vsub.f32 %v2153, %v2283
      %v2298 = vsub.f32 %v2158, %v2283
      %v2299 = vsub.f32 %v2163, %v2283
      %v2300 = vsub.f32 %v2168, %v2283
      %v2301 = vsub.f32 %v2173, %v2283
      %v2302 = vsub.f32 %v2178, %v2283
      %v2303 = vsub.f32 %v2183, %v2283
      %v2304 = vsub.f32 %v2188, %v2283
      %v2305 = vsub.f32 %v2193, %v2283
      %v2306 = vsub.f32 %v2198, %v2283
      %v2307 = vsub.f32 %v2203, %v2283
      %v2308 = vsub.f32 %v2208, %v2283
      %v2309 = vsub.f32 %v2213, %v2283
      %v2310 = vsub.f32 %v2218, %v2283
      %v2311 = vsub.f32 %v2223, %v2283
      %v2312 = vsub.f32 %v2228, %v2283
      %v2313 = vsub.f32 %v2233, %v2283
      %v2314 = vsub.f32 %v2238, %v2283
      %v2315 = vsub.f32 %v2243, %v2283
      %v2316 = vmul.f32 %v2284, %v2284
      %v2317 = vmul.f32 %v2285, %v2285
      %v2318 = vmul.f32 %v2286, %v2286
      %v2319 = vmul.f32 %v2287, %v2287
      %v2320 = vmul.f32 %v2288, %v2288
      %v2321 = vmul.f32 %v2289, %v2289
      %v2322 = vmul.f32 %v2290, %v2290
      %v2323 = vmul.f32 %v2291, %v2291
      %v2324 = vmul.f32 %v2292, %v2292
      %v2325 = vmul.f32 %v2293, %v2293
      %v2326 = vmul.f32 %v2294, %v2294
      %v2327 = vmul.f32 %v2295, %v2295
      %v2328 = vmul.f32 %v2296, %v2296
      %v2329 = vmul.f32 %v2297, %v2297
      %v2330 = vmul.f32 %v2298, %v2298
      %v2331 = vmul.f32 %v2299, %v2299
      %v2332 = vmul.f32 %v2300, %v2300
      %v2333 = vmul.f32 %v2301, %v2301
      %v2334 = vmul.f32 %v2302, %v2302
      %v2335 = vmul.f32 %v2303, %v2303
      %v2336 = vmul.f32 %v2304, %v2304
      %v2337 = vmul.f32 %v2305, %v2305
      %v2338 = vmul.f32 %v2306, %v2306
      %v2339 = vmul.f32 %v2307, %v2307
      %v2340 = vmul.f32 %v2308, %v2308
      %v2341 = vmul.f32 %v2309, %v2309
      %v2342 = vmul.f32 %v2310, %v2310
      %v2343 = vmul.f32 %v2311, %v2311
      %v2344 = vmul.f32 %v2312, %v2312
      %v2345 = vmul.f32 %v2313, %v2313
      %v2346 = vmul.f32 %v2314, %v2314
      %v2347 = vmul.f32 %v2315, %v2315
      %v2348 = vadd.f32 %v2316, %v2317
      %v2349 = vadd.f32 %v2348, %v2318
      %v2350 = vadd.f32 %v2349, %v2319
      %v2351 = vadd.f32 %v2350, %v2320
      %v2352 = vadd.f32 %v2351, %v2321
      %v2353 = vadd.f32 %v2352, %v2322
      %v2354 = vadd.f32 %v2353, %v2323
      %v2355 = vadd.f32 %v2354, %v2324
      %v2356 = vadd.f32 %v2355, %v2325
      %v2357 = vadd.f32 %v2356, %v2326
      %v2358 = vadd.f32 %v2357, %v2327
      %v2359 = vadd.f32 %v2358, %v2328
      %v2360 = vadd.f32 %v2359, %v2329
      %v2361 = vadd.f32 %v2360, %v2330
      %v2362 = vadd.f32 %v2361, %v2331
      %v2363 = vadd.f32 %v2362, %v2332
      %v2364 = vadd.f32 %v2363, %v2333
      %v2365 = vadd.f32 %v2364, %v2334
      %v2366 = vadd.f32 %v2365, %v2335
      %v2367 = vadd.f32 %v2366, %v2336
      %v2368 = vadd.f32 %v2367, %v2337
      %v2369 = vadd.f32 %v2368, %v2338
      %v2370 = vadd.f32 %v2369, %v2339
      %v2371 = vadd.f32 %v2370, %v2340
      %v2372 = vadd.f32 %v2371, %v2341
      %v2373 = vadd.f32 %v2372, %v2342
      %v2374 = vadd.f32 %v2373, %v2343
      %v2375 = vadd.f32 %v2374, %v2344
      %v2376 = vadd.f32 %v2375, %v2345
      %v2377 = vadd.f32 %v2376, %v2346
      %v2378 = vadd.f32 %v2377, %v2347
      %v2379 = vrot.slane %v2378, 4
      %v2380 = vadd.f32 %v2378, %v2379
      %v2381 = vrot.slane %v2380, 2
      %v2382 = vadd.f32 %v2380, %v2381
      %v2383 = vrot.slane %v2382, 1
      %v2384 = vadd.f32 %v2382, %v2383
      %2385 = vst [vmem:[%s188] sm:$0x1] %v2283
      %2386 = vst [vmem:[%s188 + $0x1] sm:$0x1] %v2384
      %p2387 = scmp.lt.s32.totalorder %s18, 1
      %s2388 = scalar_select %p2387, %s18, 1
      %p2389 = scmp.lt.s32.totalorder %s19, 0
      %s2390 = scalar_select %p2389, %s19, 0
      %s2391 = sadd.s32 %s2390, %s2388
      %s2392 = smul.addr %s2391, 2
      %s2393 = scalar_lea.vmem %s3, %s2392
      // Predicated region
      $region33: #{conv_bn_forward.2} parent=31 // pred_check
        %p2394 = pneg %p114
      $region34: #{conv_bn_forward.2} parent=31 // pred_check_branch
        %2396 = sbr.rel (%p2394) target = $region36
      $region35: #{conv_bn_forward.2} parent=31 // pred_region
        _
      $region36: #{conv_bn_forward.2} parent=31 // pred_fallthru
        _
    $region32: #{conv_bn_forward.2} parent=5 // pred_fallthru
      _
    %p2397 = scmp.le.s32.totalorder 2, %s9
    // Predicated region
    $region37: #{conv_bn_forward.2} parent=5 // pred_check
      %p2398 = pneg %p2397
    $region38: #{conv_bn_forward.2} parent=5 // pred_check_branch
      %2400 = sbr.rel (%p2398) target = $region40
    $region39: #{conv_bn_forward.2} parent=5 // pred_region
      %s2401 = ssub.s32 %s9, 2
      // Predicated region
      $region41: #{conv_bn_forward.2} parent=39 // pred_check
        %p2402 = pneg %p120
      $region42: #{conv_bn_forward.2} parent=39 // pred_check_branch
        %2404 = sbr.rel (%p2402) target = $region44
      $region43: #{conv_bn_forward.2} parent=39 // pred_region
        %p2405 = scmp.lt.s32.totalorder %s20, 1
        %s2406 = scalar_select %p2405, %s20, 1
        %p2407 = scmp.lt.s32.totalorder %s21, 0
        %s2408 = scalar_select %p2407, %s21, 0
        %s2409 = sadd.s32 %s2408, %s2406
        %s2410 = smul.addr %s2409, 2
        %s2411 = scalar_lea.vmem %s3, %s2410
      $region44: #{conv_bn_forward.2} parent=39 // pred_fallthru
        _
    $region40: #{conv_bn_forward.2} parent=5 // pred_fallthru
      _
  $region6: #{conv_bn_forward.2} parent=0 // loop_footer
    %s13 = sadd.s32 1, %s9
  $region7: #{conv_bn_forward.2} parent=0 // loop_footer_branch
    %8 = sbr.rel target = $region3
  $region8: #{conv_bn_forward.2} parent=0 // loop_exit
    _

</llo_original>
